<compile_context>
chip_gen: v6e
topology: v6e:2x2x1
jax: 0.10.0
libtpu: 0.0.40
codegen_flags: <defaults>
</compile_context>

<pallas_src>
import functools

import jax
import jax.numpy as jnp
from jax import lax
from jax.experimental import pallas as pl
from jax.experimental.pallas import tpu as pltpu


def _zero_halo(pad_ref, H, W, C):
    """Zero only the 1-element halo of a (H+2, W+2, C) padded scratch buffer."""
    z_row = jnp.zeros((1, W + 2, C), jnp.float32)
    pad_ref[0:1, :, :] = z_row
    pad_ref[H + 1:H + 2, :, :] = z_row
    z_col = jnp.zeros((H + 2, 1, C), jnp.float32)
    pad_ref[:, 0:1, :] = z_col
    pad_ref[:, W + 1:W + 2, :] = z_col


def _im2col_patch(pad_ref, ky, kx, out_rows, row_stride, W, C):
    """Tap (ky, kx) patch with the row stride applied (full column resolution).

    Returns a (out_rows * W, C) value.  Row subsampling uses only leading-dim
    slice / reshape / integer-index, i.e. pure address arithmetic (no strided
    vector loads, no relayout of the tiled (sublane, lane) dims).
    """
    slab = pad_ref[ky:ky + out_rows * row_stride, kx:kx + W, :]
    if row_stride > 1:
        slab = slab.reshape(out_rows, row_stride, W, C)[:, 0]
    return slab.reshape(out_rows * W, C)


def _bottleneck_body(x_ref, w1_ref, w2_ref, bn1_s_ref, bn1_b_ref, alpha_ref,
                     bn2_s_ref, bn2_b_ref, out_ref,
                     xpad_ref, ypad_ref, slab1_ref, slab2_ref,
                     *, stride, wsc_ref=None, bnsc_s_ref=None, bnsc_b_ref=None):
    _, H, W, Cin = x_ref.shape
    D = w2_ref.shape[1]
    Ho = H // stride
    taps = [(ky, kx) for ky in range(3) for kx in range(3)]

    x = x_ref[0]                                           # (H, W, Cin) f32

    # ---------------- residual branch ----------------
    # BN1 (inference: folded per-channel scale/shift), f32 on the VPU.
    xb = x * bn1_s_ref[...] + bn1_b_ref[...]

    _zero_halo(xpad_ref, H, W, Cin)
    xpad_ref[1:H + 1, 1:W + 1, :] = xb

    # conv1: 3x3, stride 1, pad 1 -> single im2col matmul (bf16 operands, f32 acc).
    for t, (ky, kx) in enumerate(taps):
        slab1_ref[:, t * Cin:(t + 1) * Cin] = _im2col_patch(xpad_ref, ky, kx, H, 1, W, Cin)
    acc1 = jnp.dot(slab1_ref[...].astype(jnp.bfloat16), w1_ref[...],
                   preferred_element_type=jnp.float32)     # (H*W, D) f32

    # PReLU (per-channel alpha), f32.
    act1 = jnp.where(acc1 > 0, acc1, acc1 * alpha_ref[...])

    _zero_halo(ypad_ref, H, W, D)
    ypad_ref[1:H + 1, 1:W + 1, :] = act1.reshape(H, W, D)

    # conv2: 3x3, pad 1, with the ROW stride applied in-kernel (only Ho output
    # rows are computed); the column stride is applied by the wrapper.
    for t, (ky, kx) in enumerate(taps):
        slab2_ref[:, t * D:(t + 1) * D] = _im2col_patch(ypad_ref, ky, kx, Ho, stride, W, D)
    acc2 = jnp.dot(slab2_ref[...].astype(jnp.bfloat16), w2_ref[...],
                   preferred_element_type=jnp.float32)     # (Ho*W, D) f32
    res = acc2 * bn2_s_ref[...] + bn2_b_ref[...]           # BN2

    # ---------------- shortcut branch ----------------
    if stride > 1:
        xs = x.reshape(Ho, stride, W, Cin)[:, 0].reshape(Ho * W, Cin)
    else:
        xs = x.reshape(H * W, Cin)

    if wsc_ref is None:
        # in_channel == depth: MaxPool2d(1, stride) == strided identity.
        sc = xs
    else:
        sc = jnp.dot(xs.astype(jnp.bfloat16), wsc_ref[...],
                     preferred_element_type=jnp.float32)
        sc = sc * bnsc_s_ref[...] + bnsc_b_ref[...]

    out_ref[0] = res + sc


def _kernel_identity(x_ref, w1_ref, w2_ref, bn1_s, bn1_b, alpha, bn2_s, bn2_b,
                     out_ref, xpad_ref, ypad_ref, slab1_ref, slab2_ref, *, stride):
    _bottleneck_body(x_ref, w1_ref, w2_ref, bn1_s, bn1_b, alpha, bn2_s, bn2_b,
                     out_ref, xpad_ref, ypad_ref, slab1_ref, slab2_ref, stride=stride)


def _kernel_project(x_ref, w1_ref, w2_ref, bn1_s, bn1_b, alpha, bn2_s, bn2_b,
                    wsc_ref, bnsc_s, bnsc_b,
                    out_ref, xpad_ref, ypad_ref, slab1_ref, slab2_ref, *, stride):
    _bottleneck_body(x_ref, w1_ref, w2_ref, bn1_s, bn1_b, alpha, bn2_s, bn2_b,
                     out_ref, xpad_ref, ypad_ref, slab1_ref, slab2_ref, stride=stride,
                     wsc_ref=wsc_ref, bnsc_s_ref=bnsc_s, bnsc_b_ref=bnsc_b)


def bottleneck_ir_forward(x_nchw, params, stride):
    """x_nchw: (N, Cin, H, W) f32 -> (N, D, H//stride, W//stride) f32 (PyTorch layout)."""
    N, Cin, H, W = x_nchw.shape
    w1m, w2m = params["w1m"], params["w2m"]               # (9*Cin, D) bf16, (9*D, D) bf16
    D = w2m.shape[1]
    identity = params["wsc"] is None
    assert H % stride == 0 and W % stride == 0, "spatial dims must be divisible by stride"
    Ho = H // stride

    # TODO(synk): accept NHWC activations end-to-end to drop this transpose pass.
    x_nhwc = jnp.transpose(x_nchw, (0, 2, 3, 1)).astype(jnp.float32)

    def chan_spec(c):
        return pl.BlockSpec((1, c), lambda n: (0, 0))

    in_specs = [
        pl.BlockSpec((1, H, W, Cin), lambda n: (n, 0, 0, 0)),    # x
        pl.BlockSpec((9 * Cin, D), lambda n: (0, 0)),            # conv1 im2col weights
        pl.BlockSpec((9 * D, D), lambda n: (0, 0)),              # conv2 im2col weights
        chan_spec(Cin), chan_spec(Cin),                          # bn1 scale / shift
        chan_spec(D),                                            # prelu alpha
        chan_spec(D), chan_spec(D),                              # bn2 scale / shift
    ]
    args = [x_nhwc, w1m, w2m,
            params["bn1_scale"], params["bn1_shift"], params["alpha"],
            params["bn2_scale"], params["bn2_shift"]]

    if identity:
        kernel = functools.partial(_kernel_identity, stride=stride)
    else:
        in_specs += [pl.BlockSpec((Cin, D), lambda n: (0, 0)),   # shortcut 1x1 weights
                     chan_spec(D), chan_spec(D)]                 # bn_sc scale / shift
        args += [params["wsc"], params["bnsc_scale"], params["bnsc_shift"]]
        kernel = functools.partial(_kernel_project, stride=stride)

    grid_spec = pltpu.PrefetchScalarGridSpec(
        num_scalar_prefetch=0,
        grid=(N,),
        in_specs=in_specs,
        out_specs=pl.BlockSpec((1, Ho * W, D), lambda n: (n, 0, 0)),
        scratch_shapes=[
            pltpu.VMEM((H + 2, W + 2, Cin), jnp.float32),        # padded BN1(x)
            pltpu.VMEM((H + 2, W + 2, D), jnp.float32),          # padded PReLU(conv1)
            pltpu.VMEM((H * W, 9 * Cin), jnp.float32),           # conv1 im2col slab
            pltpu.VMEM((Ho * W, 9 * D), jnp.float32),            # conv2 im2col slab
        ],
    )

    out = pl.pallas_call(
        kernel,
        out_shape=jax.ShapeDtypeStruct((N, Ho * W, D), jnp.float32),
        grid_spec=grid_spec,
        compiler_params=pltpu.CompilerParams(dimension_semantics=("parallel",)),
    )(*args)

    # Column stride (cheap strided slice on the already row-strided output), back to NCHW.
    out = out.reshape(N, Ho, W, D)[:, :, ::stride, :]
    return jnp.transpose(out, (0, 3, 1, 2))


def make_params(key, in_channel, depth):
    """Deterministic synthetic parameters matching the module's __init__ shapes."""
    ks = jax.random.split(key, 16)
    eps = 1e-5

    def folded_bn(kg, kb, km, kv, c):
        gamma = 1.0 + 0.1 * jax.random.normal(kg, (c,), jnp.float32)
        beta = 0.1 * jax.random.normal(kb, (c,), jnp.float32)
        mean = 0.1 * jax.random.normal(km, (c,), jnp.float32)
        var = jax.random.uniform(kv, (c,), jnp.float32, minval=0.5, maxval=1.5)
        scale = gamma * lax.rsqrt(var + eps)
        shift = beta - mean * scale
        return scale, shift

    bn1_s, bn1_b = folded_bn(ks[0], ks[1], ks[2], ks[3], in_channel)
    bn2_s, bn2_b = folded_bn(ks[4], ks[5], ks[6], ks[7], depth)

    w1 = 0.2 * jax.random.normal(ks[8], (3, 3, in_channel, depth), jnp.float32)  # HWIO
    w2 = 0.2 * jax.random.normal(ks[9], (3, 3, depth, depth), jnp.float32)       # HWIO
    alpha = 0.25 * jnp.ones((depth,), jnp.float32)   # PyTorch PReLU default init

    params = {
        "w1_hwio": w1, "w2_hwio": w2,
        "w1m": w1.reshape(9 * in_channel, depth).astype(jnp.bfloat16),
        "w2m": w2.reshape(9 * depth, depth).astype(jnp.bfloat16),
        "alpha": alpha.reshape(1, depth),
        "bn1_scale": bn1_s.reshape(1, in_channel),
        "bn1_shift": bn1_b.reshape(1, in_channel),
        "bn2_scale": bn2_s.reshape(1, depth),
        "bn2_shift": bn2_b.reshape(1, depth),
    }
    if in_channel == depth:
        params["wsc"] = None
        params["wsc_f32"] = None
    else:
        wsc = 0.2 * jax.random.normal(ks[10], (in_channel, depth), jnp.float32)
        bnsc_s, bnsc_b = folded_bn(ks[11], ks[12], ks[13], ks[14], depth)
        params["wsc"] = wsc.astype(jnp.bfloat16)
        params["wsc_f32"] = wsc
        params["bnsc_scale"] = bnsc_s.reshape(1, depth)
        params["bnsc_shift"] = bnsc_b.reshape(1, depth)
    return params


def reference_forward(x_nchw, params, stride, in_channel, depth):
    """Plain-JAX reference reproducing the PyTorch forward (inference-mode BN)."""
    prec = lax.Precision.HIGHEST
    dn = ("NCHW", "HWIO", "NCHW")

    def bn(x, scale, shift):
        c = scale.size
        return x * scale.reshape(1, c, 1, 1) + shift.reshape(1, c, 1, 1)

    h = bn(x_nchw, params["bn1_scale"], params["bn1_shift"])
    h = lax.conv_general_dilated(h, params["w1_hwio"], (1, 1), ((1, 1), (1, 1)),
                                 dimension_numbers=dn, precision=prec)
    a = params["alpha"].reshape(1, depth, 1, 1)
    h = jnp.where(h > 0, h, a * h)
    h = lax.conv_general_dilated(h, params["w2_hwio"], (stride, stride), ((1, 1), (1, 1)),
                                 dimension_numbers=dn, precision=prec)
    res = bn(h, params["bn2_scale"], params["bn2_shift"])

    if in_channel == depth:
        sc = x_nchw[:, :, ::stride, ::stride]          # MaxPool2d(1, stride)
    else:
        wsc = params["wsc_f32"].reshape(1, 1, in_channel, depth)
        sc = lax.conv_general_dilated(x_nchw, wsc, (stride, stride), ((0, 0), (0, 0)),
                                      dimension_numbers=dn, precision=prec)
        sc = bn(sc, params["bnsc_scale"], params["bnsc_shift"])
    return res + sc


if __name__ == "__main__":
    def run_case(case_key, N, in_channel, depth, H, W, stride):
        kx, kp = jax.random.split(case_key)
        x = jax.random.normal(kx, (N, in_channel, H, W), jnp.float32)
        params = make_params(kp, in_channel, depth)

        out = jax.block_until_ready(bottleneck_ir_forward(x, params, stride))
        ref = reference_forward(x, params, stride, in_channel, depth)

        Ho, Wo = H // stride, W // stride
        assert out.shape == ref.shape == (N, depth, Ho, Wo), (out.shape, ref.shape)
        # bf16 MXU operands vs. an f32 HIGHEST-precision reference -> ~1e-2-level diffs.
        max_err = float(jnp.max(jnp.abs(out - ref)))
        assert jnp.allclose(out, ref, rtol=2e-2, atol=5e-2), f"max abs err = {max_err}"

    key = jax.random.PRNGKey(0)
    k1, k2 = jax.random.split(key)
    # projection shortcut (in_channel != depth), stride 2
    run_case(k1, 2, 4, 8, 16, 16, 2)
    # identity shortcut (in_channel == depth -> MaxPool2d(1, stride)), stride 2
    run_case(k2, 2, 8, 8, 16, 16, 2)

    print("KERNEL_OK")
</pallas_src>

<mosaic_0001>
module attributes {stable_mosaic.version = 11 : i64} {
  func.func @_kernel_project(%arg0: i32, %arg1: memref<1x16x16x4xf32, #tpu.memory_space<vmem>>, %arg2: memref<36x8xbf16, #tpu.memory_space<vmem>>, %arg3: memref<72x8xbf16, #tpu.memory_space<vmem>>, %arg4: memref<1x4xf32, #tpu.memory_space<vmem>>, %arg5: memref<1x4xf32, #tpu.memory_space<vmem>>, %arg6: memref<1x8xf32, #tpu.memory_space<vmem>>, %arg7: memref<1x8xf32, #tpu.memory_space<vmem>>, %arg8: memref<1x8xf32, #tpu.memory_space<vmem>>, %arg9: memref<4x8xbf16, #tpu.memory_space<vmem>>, %arg10: memref<1x8xf32, #tpu.memory_space<vmem>>, %arg11: memref<1x8xf32, #tpu.memory_space<vmem>>, %arg12: memref<1x128x8xf32, #tpu.memory_space<vmem>>, %arg13: memref<18x18x4xf32, #tpu.memory_space<vmem>>, %arg14: memref<18x18x8xf32, #tpu.memory_space<vmem>>, %arg15: memref<256x36xf32, #tpu.memory_space<vmem>>, %arg16: memref<128x72xf32, #tpu.memory_space<vmem>>) attributes {dimension_semantics = [#tpu.dimension_semantics<parallel>], iteration_bounds = array<i64: 2>, scalar_prefetch = 0 : i64, scratch_operands = 4 : i64, tpu.core_type = #tpu.core_type<tc>, window_params = [{transform_indices = @transform_0, window_bounds = array<i64: 1, 16, 16, 4>}, {pipeline_mode = #tpu.pipeline_mode<synchronous>, transform_indices = @transform_1, window_bounds = array<i64: 36, 8>}, {pipeline_mode = #tpu.pipeline_mode<synchronous>, transform_indices = @transform_2, window_bounds = array<i64: 72, 8>}, {pipeline_mode = #tpu.pipeline_mode<synchronous>, transform_indices = @transform_3, window_bounds = array<i64: 1, 4>}, {pipeline_mode = #tpu.pipeline_mode<synchronous>, transform_indices = @transform_4, window_bounds = array<i64: 1, 4>}, {pipeline_mode = #tpu.pipeline_mode<synchronous>, transform_indices = @transform_5, window_bounds = array<i64: 1, 8>}, {pipeline_mode = #tpu.pipeline_mode<synchronous>, transform_indices = @transform_6, window_bounds = array<i64: 1, 8>}, {pipeline_mode = #tpu.pipeline_mode<synchronous>, transform_indices = @transform_7, window_bounds = array<i64: 1, 8>}, {pipeline_mode = #tpu.pipeline_mode<synchronous>, transform_indices = @transform_8, window_bounds = array<i64: 4, 8>}, {pipeline_mode = #tpu.pipeline_mode<synchronous>, transform_indices = @transform_9, window_bounds = array<i64: 1, 8>}, {pipeline_mode = #tpu.pipeline_mode<synchronous>, transform_indices = @transform_10, window_bounds = array<i64: 1, 8>}, {transform_indices = @transform_11, window_bounds = array<i64: 1, 128, 8>}]} {
    %c0 = arith.constant 0 : index
    %c0_0 = arith.constant 0 : index
    %c0_1 = arith.constant 0 : index
    %c0_2 = arith.constant 0 : index
    %0 = vector.load %arg1[%c0, %c0_0, %c0_1, %c0_2] : memref<1x16x16x4xf32, #tpu.memory_space<vmem>>, vector<1x16x16x4xf32>
    %1 = vector.shape_cast %0 : vector<1x16x16x4xf32> to vector<16x16x4xf32>
    %c0_3 = arith.constant 0 : index
    %c0_4 = arith.constant 0 : index
    %2 = vector.load %arg4[%c0_3, %c0_4] : memref<1x4xf32, #tpu.memory_space<vmem>>, vector<1x4xf32>
    %3 = vector.shape_cast %2 : vector<1x4xf32> to vector<1x1x4xf32>
    %4 = vector.broadcast %3 : vector<1x1x4xf32> to vector<16x16x4xf32>
    %5 = arith.mulf %1, %4 : vector<16x16x4xf32>
    %c0_5 = arith.constant 0 : index
    %c0_6 = arith.constant 0 : index
    %6 = vector.load %arg5[%c0_5, %c0_6] : memref<1x4xf32, #tpu.memory_space<vmem>>, vector<1x4xf32>
    %7 = vector.shape_cast %6 : vector<1x4xf32> to vector<1x1x4xf32>
    %8 = vector.broadcast %7 : vector<1x1x4xf32> to vector<16x16x4xf32>
    %9 = arith.addf %5, %8 : vector<16x16x4xf32>
    %cst = arith.constant 0.000000e+00 : f32
    %10 = vector.broadcast %cst : f32 to vector<1x18x4xf32>
    %c0_7 = arith.constant 0 : index
    %c0_8 = arith.constant 0 : index
    %c0_9 = arith.constant 0 : index
    %11 = vector.load %arg13[%c0_7, %c0_8, %c0_9] : memref<18x18x4xf32, #tpu.memory_space<vmem>>, vector<1x18x4xf32>
    tpu.vector_store %arg13[%c0_7, %c0_8, %c0_9], %10 {strides = array<i32>} : memref<18x18x4xf32, #tpu.memory_space<vmem>>, vector<1x18x4xf32>,
    %c17 = arith.constant 17 : index
    %c0_10 = arith.constant 0 : index
    %c0_11 = arith.constant 0 : index
    %12 = vector.load %arg13[%c17, %c0_10, %c0_11] : memref<18x18x4xf32, #tpu.memory_space<vmem>>, vector<1x18x4xf32>
    tpu.vector_store %arg13[%c17, %c0_10, %c0_11], %10 {strides = array<i32>} : memref<18x18x4xf32, #tpu.memory_space<vmem>>, vector<1x18x4xf32>,
    %cst_12 = arith.constant 0.000000e+00 : f32
    %13 = vector.broadcast %cst_12 : f32 to vector<18x1x4xf32>
    %c0_13 = arith.constant 0 : index
    %c0_14 = arith.constant 0 : index
    %c0_15 = arith.constant 0 : index
    %14 = vector.load %arg13[%c0_13, %c0_14, %c0_15] : memref<18x18x4xf32, #tpu.memory_space<vmem>>, vector<18x1x4xf32>
    tpu.vector_store %arg13[%c0_13, %c0_14, %c0_15], %13 {strides = array<i32>} : memref<18x18x4xf32, #tpu.memory_space<vmem>>, vector<18x1x4xf32>,
    %c0_16 = arith.constant 0 : index
    %c17_17 = arith.constant 17 : index
    %c0_18 = arith.constant 0 : index
    %15 = vector.load %arg13[%c0_16, %c17_17, %c0_18] : memref<18x18x4xf32, #tpu.memory_space<vmem>>, vector<18x1x4xf32>
    tpu.vector_store %arg13[%c0_16, %c17_17, %c0_18], %13 {strides = array<i32>} : memref<18x18x4xf32, #tpu.memory_space<vmem>>, vector<18x1x4xf32>,
    %c1 = arith.constant 1 : index
    %c1_19 = arith.constant 1 : index
    %c0_20 = arith.constant 0 : index
    %16 = vector.load %arg13[%c1, %c1_19, %c0_20] : memref<18x18x4xf32, #tpu.memory_space<vmem>>, vector<16x16x4xf32>
    tpu.vector_store %arg13[%c1, %c1_19, %c0_20], %9 {strides = array<i32>} : memref<18x18x4xf32, #tpu.memory_space<vmem>>, vector<16x16x4xf32>,
    %c0_21 = arith.constant 0 : index
    %c0_22 = arith.constant 0 : index
    %c0_23 = arith.constant 0 : index
    %17 = vector.load %arg13[%c0_21, %c0_22, %c0_23] : memref<18x18x4xf32, #tpu.memory_space<vmem>>, vector<16x16x4xf32>
    %18 = vector.shape_cast %17 : vector<16x16x4xf32> to vector<256x4xf32>
    %c0_24 = arith.constant 0 : index
    %c0_25 = arith.constant 0 : index
    %19 = vector.load %arg15[%c0_24, %c0_25] : memref<256x36xf32, #tpu.memory_space<vmem>>, vector<256x4xf32>
    tpu.vector_store %arg15[%c0_24, %c0_25], %18 {strides = array<i32>} : memref<256x36xf32, #tpu.memory_space<vmem>>, vector<256x4xf32>,
    %c0_26 = arith.constant 0 : index
    %c1_27 = arith.constant 1 : index
    %c0_28 = arith.constant 0 : index
    %20 = vector.load %arg13[%c0_26, %c1_27, %c0_28] : memref<18x18x4xf32, #tpu.memory_space<vmem>>, vector<16x16x4xf32>
    %21 = vector.shape_cast %20 : vector<16x16x4xf32> to vector<256x4xf32>
    %c0_29 = arith.constant 0 : index
    %c4 = arith.constant 4 : index
    %22 = vector.load %arg15[%c0_29, %c4] : memref<256x36xf32, #tpu.memory_space<vmem>>, vector<256x4xf32>
    tpu.vector_store %arg15[%c0_29, %c4], %21 {strides = array<i32>} : memref<256x36xf32, #tpu.memory_space<vmem>>, vector<256x4xf32>,
    %c0_30 = arith.constant 0 : index
    %c2 = arith.constant 2 : index
    %c0_31 = arith.constant 0 : index
    %23 = vector.load %arg13[%c0_30, %c2, %c0_31] : memref<18x18x4xf32, #tpu.memory_space<vmem>>, vector<16x16x4xf32>
    %24 = vector.shape_cast %23 : vector<16x16x4xf32> to vector<256x4xf32>
    %c0_32 = arith.constant 0 : index
    %c8 = arith.constant 8 : index
    %25 = vector.load %arg15[%c0_32, %c8] : memref<256x36xf32, #tpu.memory_space<vmem>>, vector<256x4xf32>
    tpu.vector_store %arg15[%c0_32, %c8], %24 {strides = array<i32>} : memref<256x36xf32, #tpu.memory_space<vmem>>, vector<256x4xf32>,
    %c1_33 = arith.constant 1 : index
    %c0_34 = arith.constant 0 : index
    %c0_35 = arith.constant 0 : index
    %26 = vector.load %arg13[%c1_33, %c0_34, %c0_35] : memref<18x18x4xf32, #tpu.memory_space<vmem>>, vector<16x16x4xf32>
    %27 = vector.shape_cast %26 : vector<16x16x4xf32> to vector<256x4xf32>
    %c0_36 = arith.constant 0 : index
    %c12 = arith.constant 12 : index
    %28 = vector.load %arg15[%c0_36, %c12] : memref<256x36xf32, #tpu.memory_space<vmem>>, vector<256x4xf32>
    tpu.vector_store %arg15[%c0_36, %c12], %27 {strides = array<i32>} : memref<256x36xf32, #tpu.memory_space<vmem>>, vector<256x4xf32>,
    %c1_37 = arith.constant 1 : index
    %c1_38 = arith.constant 1 : index
    %c0_39 = arith.constant 0 : index
    %29 = vector.load %arg13[%c1_37, %c1_38, %c0_39] : memref<18x18x4xf32, #tpu.memory_space<vmem>>, vector<16x16x4xf32>
    %30 = vector.shape_cast %29 : vector<16x16x4xf32> to vector<256x4xf32>
    %c0_40 = arith.constant 0 : index
    %c16 = arith.constant 16 : index
    %31 = vector.load %arg15[%c0_40, %c16] : memref<256x36xf32, #tpu.memory_space<vmem>>, vector<256x4xf32>
    tpu.vector_store %arg15[%c0_40, %c16], %30 {strides = array<i32>} : memref<256x36xf32, #tpu.memory_space<vmem>>, vector<256x4xf32>,
    %c1_41 = arith.constant 1 : index
    %c2_42 = arith.constant 2 : index
    %c0_43 = arith.constant 0 : index
    %32 = vector.load %arg13[%c1_41, %c2_42, %c0_43] : memref<18x18x4xf32, #tpu.memory_space<vmem>>, vector<16x16x4xf32>
    %33 = vector.shape_cast %32 : vector<16x16x4xf32> to vector<256x4xf32>
    %c0_44 = arith.constant 0 : index
    %c20 = arith.constant 20 : index
    %34 = vector.load %arg15[%c0_44, %c20] : memref<256x36xf32, #tpu.memory_space<vmem>>, vector<256x4xf32>
    tpu.vector_store %arg15[%c0_44, %c20], %33 {strides = array<i32>} : memref<256x36xf32, #tpu.memory_space<vmem>>, vector<256x4xf32>,
    %c2_45 = arith.constant 2 : index
    %c0_46 = arith.constant 0 : index
    %c0_47 = arith.constant 0 : index
    %35 = vector.load %arg13[%c2_45, %c0_46, %c0_47] : memref<18x18x4xf32, #tpu.memory_space<vmem>>, vector<16x16x4xf32>
    %36 = vector.shape_cast %35 : vector<16x16x4xf32> to vector<256x4xf32>
    %c0_48 = arith.constant 0 : index
    %c24 = arith.constant 24 : index
    %37 = vector.load %arg15[%c0_48, %c24] : memref<256x36xf32, #tpu.memory_space<vmem>>, vector<256x4xf32>
    tpu.vector_store %arg15[%c0_48, %c24], %36 {strides = array<i32>} : memref<256x36xf32, #tpu.memory_space<vmem>>, vector<256x4xf32>,
    %c2_49 = arith.constant 2 : index
    %c1_50 = arith.constant 1 : index
    %c0_51 = arith.constant 0 : index
    %38 = vector.load %arg13[%c2_49, %c1_50, %c0_51] : memref<18x18x4xf32, #tpu.memory_space<vmem>>, vector<16x16x4xf32>
    %39 = vector.shape_cast %38 : vector<16x16x4xf32> to vector<256x4xf32>
    %c0_52 = arith.constant 0 : index
    %c28 = arith.constant 28 : index
    %40 = vector.load %arg15[%c0_52, %c28] : memref<256x36xf32, #tpu.memory_space<vmem>>, vector<256x4xf32>
    tpu.vector_store %arg15[%c0_52, %c28], %39 {strides = array<i32>} : memref<256x36xf32, #tpu.memory_space<vmem>>, vector<256x4xf32>,
    %c2_53 = arith.constant 2 : index
    %c2_54 = arith.constant 2 : index
    %c0_55 = arith.constant 0 : index
    %41 = vector.load %arg13[%c2_53, %c2_54, %c0_55] : memref<18x18x4xf32, #tpu.memory_space<vmem>>, vector<16x16x4xf32>
    %42 = vector.shape_cast %41 : vector<16x16x4xf32> to vector<256x4xf32>
    %c0_56 = arith.constant 0 : index
    %c32 = arith.constant 32 : index
    %43 = vector.load %arg15[%c0_56, %c32] : memref<256x36xf32, #tpu.memory_space<vmem>>, vector<256x4xf32>
    tpu.vector_store %arg15[%c0_56, %c32], %42 {strides = array<i32>} : memref<256x36xf32, #tpu.memory_space<vmem>>, vector<256x4xf32>,
    %c0_57 = arith.constant 0 : index
    %c0_58 = arith.constant 0 : index
    %44 = vector.load %arg15[%c0_57, %c0_58] : memref<256x36xf32, #tpu.memory_space<vmem>>, vector<256x36xf32>
    %45 = arith.truncf %44 : vector<256x36xf32> to vector<256x36xbf16>
    %c0_59 = arith.constant 0 : index
    %c0_60 = arith.constant 0 : index
    %46 = vector.load %arg2[%c0_59, %c0_60] : memref<36x8xbf16, #tpu.memory_space<vmem>>, vector<36x8xbf16>
    %cst_61 = arith.constant dense<0.000000e+00> : vector<256x8xf32>
    %47 = tpu.matmul %45, %46, %cst_61 {dimension_numbers = #tpu.dot_dimension_numbers<[1], [0], [0], [1], [0, 0, 1, 1], [], []>} : vector<256x36xbf16>, vector<36x8xbf16>, vector<256x8xf32> -> vector<256x8xf32>
    %cst_62 = arith.constant 0.000000e+00 : f32
    %48 = vector.broadcast %cst_62 : f32 to vector<256x8xf32>
    %49 = arith.cmpf ogt, %47, %48 : vector<256x8xf32>
    %c0_63 = arith.constant 0 : index
    %c0_64 = arith.constant 0 : index
    %50 = vector.load %arg6[%c0_63, %c0_64] : memref<1x8xf32, #tpu.memory_space<vmem>>, vector<1x8xf32>
    %51 = vector.broadcast %50 : vector<1x8xf32> to vector<256x8xf32>
    %52 = arith.mulf %47, %51 : vector<256x8xf32>
    %53 = arith.select %49, %47, %52 : vector<256x8xi1>, vector<256x8xf32>
    %cst_65 = arith.constant 0.000000e+00 : f32
    %54 = vector.broadcast %cst_65 : f32 to vector<1x18x8xf32>
    %c0_66 = arith.constant 0 : index
    %c0_67 = arith.constant 0 : index
    %c0_68 = arith.constant 0 : index
    %55 = vector.load %arg14[%c0_66, %c0_67, %c0_68] : memref<18x18x8xf32, #tpu.memory_space<vmem>>, vector<1x18x8xf32>
    tpu.vector_store %arg14[%c0_66, %c0_67, %c0_68], %54 {strides = array<i32>} : memref<18x18x8xf32, #tpu.memory_space<vmem>>, vector<1x18x8xf32>,
    %c17_69 = arith.constant 17 : index
    %c0_70 = arith.constant 0 : index
    %c0_71 = arith.constant 0 : index
    %56 = vector.load %arg14[%c17_69, %c0_70, %c0_71] : memref<18x18x8xf32, #tpu.memory_space<vmem>>, vector<1x18x8xf32>
    tpu.vector_store %arg14[%c17_69, %c0_70, %c0_71], %54 {strides = array<i32>} : memref<18x18x8xf32, #tpu.memory_space<vmem>>, vector<1x18x8xf32>,
    %cst_72 = arith.constant 0.000000e+00 : f32
    %57 = vector.broadcast %cst_72 : f32 to vector<18x1x8xf32>
    %c0_73 = arith.constant 0 : index
    %c0_74 = arith.constant 0 : index
    %c0_75 = arith.constant 0 : index
    %58 = vector.load %arg14[%c0_73, %c0_74, %c0_75] : memref<18x18x8xf32, #tpu.memory_space<vmem>>, vector<18x1x8xf32>
    tpu.vector_store %arg14[%c0_73, %c0_74, %c0_75], %57 {strides = array<i32>} : memref<18x18x8xf32, #tpu.memory_space<vmem>>, vector<18x1x8xf32>,
    %c0_76 = arith.constant 0 : index
    %c17_77 = arith.constant 17 : index
    %c0_78 = arith.constant 0 : index
    %59 = vector.load %arg14[%c0_76, %c17_77, %c0_78] : memref<18x18x8xf32, #tpu.memory_space<vmem>>, vector<18x1x8xf32>
    tpu.vector_store %arg14[%c0_76, %c17_77, %c0_78], %57 {strides = array<i32>} : memref<18x18x8xf32, #tpu.memory_space<vmem>>, vector<18x1x8xf32>,
    %60 = vector.shape_cast %53 : vector<256x8xf32> to vector<16x16x8xf32>
    %c1_79 = arith.constant 1 : index
    %c1_80 = arith.constant 1 : index
    %c0_81 = arith.constant 0 : index
    %61 = vector.load %arg14[%c1_79, %c1_80, %c0_81] : memref<18x18x8xf32, #tpu.memory_space<vmem>>, vector<16x16x8xf32>
    tpu.vector_store %arg14[%c1_79, %c1_80, %c0_81], %60 {strides = array<i32>} : memref<18x18x8xf32, #tpu.memory_space<vmem>>, vector<16x16x8xf32>,
    %c0_82 = arith.constant 0 : index
    %c0_83 = arith.constant 0 : index
    %c0_84 = arith.constant 0 : index
    %62 = vector.load %arg14[%c0_82, %c0_83, %c0_84] : memref<18x18x8xf32, #tpu.memory_space<vmem>>, vector<16x16x8xf32>
    %63 = vector.shape_cast %62 : vector<16x16x8xf32> to vector<8x2x16x8xf32>
    %64 = vector.extract_strided_slice %63 {offsets = [0, 0, 0, 0], sizes = [8, 1, 16, 8], strides = [1, 1, 1, 1]} : vector<8x2x16x8xf32> to vector<8x1x16x8xf32>
    %65 = vector.shape_cast %64 : vector<8x1x16x8xf32> to vector<8x16x8xf32>
    %66 = vector.shape_cast %65 : vector<8x16x8xf32> to vector<128x8xf32>
    %c0_85 = arith.constant 0 : index
    %c0_86 = arith.constant 0 : index
    %67 = vector.load %arg16[%c0_85, %c0_86] : memref<128x72xf32, #tpu.memory_space<vmem>>, vector<128x8xf32>
    tpu.vector_store %arg16[%c0_85, %c0_86], %66 {strides = array<i32>} : memref<128x72xf32, #tpu.memory_space<vmem>>, vector<128x8xf32>,
    %c0_87 = arith.constant 0 : index
    %c1_88 = arith.constant 1 : index
    %c0_89 = arith.constant 0 : index
    %68 = vector.load %arg14[%c0_87, %c1_88, %c0_89] : memref<18x18x8xf32, #tpu.memory_space<vmem>>, vector<16x16x8xf32>
    %69 = vector.shape_cast %68 : vector<16x16x8xf32> to vector<8x2x16x8xf32>
    %70 = vector.extract_strided_slice %69 {offsets = [0, 0, 0, 0], sizes = [8, 1, 16, 8], strides = [1, 1, 1, 1]} : vector<8x2x16x8xf32> to vector<8x1x16x8xf32>
    %71 = vector.shape_cast %70 : vector<8x1x16x8xf32> to vector<8x16x8xf32>
    %72 = vector.shape_cast %71 : vector<8x16x8xf32> to vector<128x8xf32>
    %c0_90 = arith.constant 0 : index
    %c8_91 = arith.constant 8 : index
    %73 = vector.load %arg16[%c0_90, %c8_91] : memref<128x72xf32, #tpu.memory_space<vmem>>, vector<128x8xf32>
    tpu.vector_store %arg16[%c0_90, %c8_91], %72 {strides = array<i32>} : memref<128x72xf32, #tpu.memory_space<vmem>>, vector<128x8xf32>,
    %c0_92 = arith.constant 0 : index
    %c2_93 = arith.constant 2 : index
    %c0_94 = arith.constant 0 : index
    %74 = vector.load %arg14[%c0_92, %c2_93, %c0_94] : memref<18x18x8xf32, #tpu.memory_space<vmem>>, vector<16x16x8xf32>
    %75 = vector.shape_cast %74 : vector<16x16x8xf32> to vector<8x2x16x8xf32>
    %76 = vector.extract_strided_slice %75 {offsets = [0, 0, 0, 0], sizes = [8, 1, 16, 8], strides = [1, 1, 1, 1]} : vector<8x2x16x8xf32> to vector<8x1x16x8xf32>
    %77 = vector.shape_cast %76 : vector<8x1x16x8xf32> to vector<8x16x8xf32>
    %78 = vector.shape_cast %77 : vector<8x16x8xf32> to vector<128x8xf32>
    %c0_95 = arith.constant 0 : index
    %c16_96 = arith.constant 16 : index
    %79 = vector.load %arg16[%c0_95, %c16_96] : memref<128x72xf32, #tpu.memory_space<vmem>>, vector<128x8xf32>
    tpu.vector_store %arg16[%c0_95, %c16_96], %78 {strides = array<i32>} : memref<128x72xf32, #tpu.memory_space<vmem>>, vector<128x8xf32>,
    %c1_97 = arith.constant 1 : index
    %c0_98 = arith.constant 0 : index
    %c0_99 = arith.constant 0 : index
    %80 = vector.load %arg14[%c1_97, %c0_98, %c0_99] : memref<18x18x8xf32, #tpu.memory_space<vmem>>, vector<16x16x8xf32>
    %81 = vector.shape_cast %80 : vector<16x16x8xf32> to vector<8x2x16x8xf32>
    %82 = vector.extract_strided_slice %81 {offsets = [0, 0, 0, 0], sizes = [8, 1, 16, 8], strides = [1, 1, 1, 1]} : vector<8x2x16x8xf32> to vector<8x1x16x8xf32>
    %83 = vector.shape_cast %82 : vector<8x1x16x8xf32> to vector<8x16x8xf32>
    %84 = vector.shape_cast %83 : vector<8x16x8xf32> to vector<128x8xf32>
    %c0_100 = arith.constant 0 : index
    %c24_101 = arith.constant 24 : index
    %85 = vector.load %arg16[%c0_100, %c24_101] : memref<128x72xf32, #tpu.memory_space<vmem>>, vector<128x8xf32>
    tpu.vector_store %arg16[%c0_100, %c24_101], %84 {strides = array<i32>} : memref<128x72xf32, #tpu.memory_space<vmem>>, vector<128x8xf32>,
    %c1_102 = arith.constant 1 : index
    %c1_103 = arith.constant 1 : index
    %c0_104 = arith.constant 0 : index
    %86 = vector.load %arg14[%c1_102, %c1_103, %c0_104] : memref<18x18x8xf32, #tpu.memory_space<vmem>>, vector<16x16x8xf32>
    %87 = vector.shape_cast %86 : vector<16x16x8xf32> to vector<8x2x16x8xf32>
    %88 = vector.extract_strided_slice %87 {offsets = [0, 0, 0, 0], sizes = [8, 1, 16, 8], strides = [1, 1, 1, 1]} : vector<8x2x16x8xf32> to vector<8x1x16x8xf32>
    %89 = vector.shape_cast %88 : vector<8x1x16x8xf32> to vector<8x16x8xf32>
    %90 = vector.shape_cast %89 : vector<8x16x8xf32> to vector<128x8xf32>
    %c0_105 = arith.constant 0 : index
    %c32_106 = arith.constant 32 : index
    %91 = vector.load %arg16[%c0_105, %c32_106] : memref<128x72xf32, #tpu.memory_space<vmem>>, vector<128x8xf32>
    tpu.vector_store %arg16[%c0_105, %c32_106], %90 {strides = array<i32>} : memref<128x72xf32, #tpu.memory_space<vmem>>, vector<128x8xf32>,
    %c1_107 = arith.constant 1 : index
    %c2_108 = arith.constant 2 : index
    %c0_109 = arith.constant 0 : index
    %92 = vector.load %arg14[%c1_107, %c2_108, %c0_109] : memref<18x18x8xf32, #tpu.memory_space<vmem>>, vector<16x16x8xf32>
    %93 = vector.shape_cast %92 : vector<16x16x8xf32> to vector<8x2x16x8xf32>
    %94 = vector.extract_strided_slice %93 {offsets = [0, 0, 0, 0], sizes = [8, 1, 16, 8], strides = [1, 1, 1, 1]} : vector<8x2x16x8xf32> to vector<8x1x16x8xf32>
    %95 = vector.shape_cast %94 : vector<8x1x16x8xf32> to vector<8x16x8xf32>
    %96 = vector.shape_cast %95 : vector<8x16x8xf32> to vector<128x8xf32>
    %c0_110 = arith.constant 0 : index
    %c40 = arith.constant 40 : index
    %97 = vector.load %arg16[%c0_110, %c40] : memref<128x72xf32, #tpu.memory_space<vmem>>, vector<128x8xf32>
    tpu.vector_store %arg16[%c0_110, %c40], %96 {strides = array<i32>} : memref<128x72xf32, #tpu.memory_space<vmem>>, vector<128x8xf32>,
    %c2_111 = arith.constant 2 : index
    %c0_112 = arith.constant 0 : index
    %c0_113 = arith.constant 0 : index
    %98 = vector.load %arg14[%c2_111, %c0_112, %c0_113] : memref<18x18x8xf32, #tpu.memory_space<vmem>>, vector<16x16x8xf32>
    %99 = vector.shape_cast %98 : vector<16x16x8xf32> to vector<8x2x16x8xf32>
    %100 = vector.extract_strided_slice %99 {offsets = [0, 0, 0, 0], sizes = [8, 1, 16, 8], strides = [1, 1, 1, 1]} : vector<8x2x16x8xf32> to vector<8x1x16x8xf32>
    %101 = vector.shape_cast %100 : vector<8x1x16x8xf32> to vector<8x16x8xf32>
    %102 = vector.shape_cast %101 : vector<8x16x8xf32> to vector<128x8xf32>
    %c0_114 = arith.constant 0 : index
    %c48 = arith.constant 48 : index
    %103 = vector.load %arg16[%c0_114, %c48] : memref<128x72xf32, #tpu.memory_space<vmem>>, vector<128x8xf32>
    tpu.vector_store %arg16[%c0_114, %c48], %102 {strides = array<i32>} : memref<128x72xf32, #tpu.memory_space<vmem>>, vector<128x8xf32>,
    %c2_115 = arith.constant 2 : index
    %c1_116 = arith.constant 1 : index
    %c0_117 = arith.constant 0 : index
    %104 = vector.load %arg14[%c2_115, %c1_116, %c0_117] : memref<18x18x8xf32, #tpu.memory_space<vmem>>, vector<16x16x8xf32>
    %105 = vector.shape_cast %104 : vector<16x16x8xf32> to vector<8x2x16x8xf32>
    %106 = vector.extract_strided_slice %105 {offsets = [0, 0, 0, 0], sizes = [8, 1, 16, 8], strides = [1, 1, 1, 1]} : vector<8x2x16x8xf32> to vector<8x1x16x8xf32>
    %107 = vector.shape_cast %106 : vector<8x1x16x8xf32> to vector<8x16x8xf32>
    %108 = vector.shape_cast %107 : vector<8x16x8xf32> to vector<128x8xf32>
    %c0_118 = arith.constant 0 : index
    %c56 = arith.constant 56 : index
    %109 = vector.load %arg16[%c0_118, %c56] : memref<128x72xf32, #tpu.memory_space<vmem>>, vector<128x8xf32>
    tpu.vector_store %arg16[%c0_118, %c56], %108 {strides = array<i32>} : memref<128x72xf32, #tpu.memory_space<vmem>>, vector<128x8xf32>,
    %c2_119 = arith.constant 2 : index
    %c2_120 = arith.constant 2 : index
    %c0_121 = arith.constant 0 : index
    %110 = vector.load %arg14[%c2_119, %c2_120, %c0_121] : memref<18x18x8xf32, #tpu.memory_space<vmem>>, vector<16x16x8xf32>
    %111 = vector.shape_cast %110 : vector<16x16x8xf32> to vector<8x2x16x8xf32>
    %112 = vector.extract_strided_slice %111 {offsets = [0, 0, 0, 0], sizes = [8, 1, 16, 8], strides = [1, 1, 1, 1]} : vector<8x2x16x8xf32> to vector<8x1x16x8xf32>
    %113 = vector.shape_cast %112 : vector<8x1x16x8xf32> to vector<8x16x8xf32>
    %114 = vector.shape_cast %113 : vector<8x16x8xf32> to vector<128x8xf32>
    %c0_122 = arith.constant 0 : index
    %c64 = arith.constant 64 : index
    %115 = vector.load %arg16[%c0_122, %c64] : memref<128x72xf32, #tpu.memory_space<vmem>>, vector<128x8xf32>
    tpu.vector_store %arg16[%c0_122, %c64], %114 {strides = array<i32>} : memref<128x72xf32, #tpu.memory_space<vmem>>, vector<128x8xf32>,
    %c0_123 = arith.constant 0 : index
    %c0_124 = arith.constant 0 : index
    %116 = vector.load %arg16[%c0_123, %c0_124] : memref<128x72xf32, #tpu.memory_space<vmem>>, vector<128x72xf32>
    %117 = arith.truncf %116 : vector<128x72xf32> to vector<128x72xbf16>
    %c0_125 = arith.constant 0 : index
    %c0_126 = arith.constant 0 : index
    %118 = vector.load %arg3[%c0_125, %c0_126] : memref<72x8xbf16, #tpu.memory_space<vmem>>, vector<72x8xbf16>
    %cst_127 = arith.constant dense<0.000000e+00> : vector<128x8xf32>
    %119 = tpu.matmul %117, %118, %cst_127 {dimension_numbers = #tpu.dot_dimension_numbers<[1], [0], [0], [1], [0, 0, 1, 1], [], []>} : vector<128x72xbf16>, vector<72x8xbf16>, vector<128x8xf32> -> vector<128x8xf32>
    %c0_128 = arith.constant 0 : index
    %c0_129 = arith.constant 0 : index
    %120 = vector.load %arg7[%c0_128, %c0_129] : memref<1x8xf32, #tpu.memory_space<vmem>>, vector<1x8xf32>
    %121 = vector.broadcast %120 : vector<1x8xf32> to vector<128x8xf32>
    %122 = arith.mulf %119, %121 : vector<128x8xf32>
    %c0_130 = arith.constant 0 : index
    %c0_131 = arith.constant 0 : index
    %123 = vector.load %arg8[%c0_130, %c0_131] : memref<1x8xf32, #tpu.memory_space<vmem>>, vector<1x8xf32>
    %124 = vector.broadcast %123 : vector<1x8xf32> to vector<128x8xf32>
    %125 = arith.addf %122, %124 : vector<128x8xf32>
    %126 = vector.shape_cast %1 : vector<16x16x4xf32> to vector<8x2x16x4xf32>
    %127 = vector.extract_strided_slice %126 {offsets = [0, 0, 0, 0], sizes = [8, 1, 16, 4], strides = [1, 1, 1, 1]} : vector<8x2x16x4xf32> to vector<8x1x16x4xf32>
    %128 = vector.shape_cast %127 : vector<8x1x16x4xf32> to vector<8x16x4xf32>
    %129 = vector.shape_cast %128 : vector<8x16x4xf32> to vector<128x4xf32>
    %130 = arith.truncf %129 : vector<128x4xf32> to vector<128x4xbf16>
    %c0_132 = arith.constant 0 : index
    %c0_133 = arith.constant 0 : index
    %131 = vector.load %arg9[%c0_132, %c0_133] : memref<4x8xbf16, #tpu.memory_space<vmem>>, vector<4x8xbf16>
    %cst_134 = arith.constant dense<0.000000e+00> : vector<128x8xf32>
    %132 = tpu.matmul %130, %131, %cst_134 {dimension_numbers = #tpu.dot_dimension_numbers<[1], [0], [0], [1], [0, 0, 1, 1], [], []>} : vector<128x4xbf16>, vector<4x8xbf16>, vector<128x8xf32> -> vector<128x8xf32>
    %c0_135 = arith.constant 0 : index
    %c0_136 = arith.constant 0 : index
    %133 = vector.load %arg10[%c0_135, %c0_136] : memref<1x8xf32, #tpu.memory_space<vmem>>, vector<1x8xf32>
    %134 = vector.broadcast %133 : vector<1x8xf32> to vector<128x8xf32>
    %135 = arith.mulf %132, %134 : vector<128x8xf32>
    %c0_137 = arith.constant 0 : index
    %c0_138 = arith.constant 0 : index
    %136 = vector.load %arg11[%c0_137, %c0_138] : memref<1x8xf32, #tpu.memory_space<vmem>>, vector<1x8xf32>
    %137 = vector.broadcast %136 : vector<1x8xf32> to vector<128x8xf32>
    %138 = arith.addf %135, %137 : vector<128x8xf32>
    %139 = arith.addf %125, %138 : vector<128x8xf32>
    %c0_139 = arith.constant 0 : index
    %c0_140 = arith.constant 0 : index
    %c0_141 = arith.constant 0 : index
    %140 = vector.load %arg12[%c0_139, %c0_140, %c0_141] : memref<1x128x8xf32, #tpu.memory_space<vmem>>, vector<1x128x8xf32>
    %141 = vector.shape_cast %140 : vector<1x128x8xf32> to vector<128x8xf32>
    %142 = vector.shape_cast %139 : vector<128x8xf32> to vector<1x128x8xf32>
    tpu.vector_store %arg12[%c0_139, %c0_140, %c0_141], %142 {strides = array<i32>} : memref<1x128x8xf32, #tpu.memory_space<vmem>>, vector<1x128x8xf32>,
    return
  }
  func.func @transform_0(%arg0: i32) -> (i32, i32, i32, i32) {
    %c0_i32 = arith.constant 0 : i32
    %c0_i32_0 = arith.constant 0 : i32
    %c0_i32_1 = arith.constant 0 : i32
    %c0_i32_2 = arith.constant 0 : i32
    return %arg0, %c0_i32, %c0_i32_0, %c0_i32_1 : i32, i32, i32, i32
  }
  func.func @transform_1(%arg0: i32) -> (i32, i32) {
    %c0_i32 = arith.constant 0 : i32
    %c0_i32_0 = arith.constant 0 : i32
    %c0_i32_1 = arith.constant 0 : i32
    return %c0_i32, %c0_i32_0 : i32, i32
  }
  func.func @transform_2(%arg0: i32) -> (i32, i32) {
    %c0_i32 = arith.constant 0 : i32
    %c0_i32_0 = arith.constant 0 : i32
    %c0_i32_1 = arith.constant 0 : i32
    return %c0_i32, %c0_i32_0 : i32, i32
  }
  func.func @transform_3(%arg0: i32) -> (i32, i32) {
    %c0_i32 = arith.constant 0 : i32
    %c0_i32_0 = arith.constant 0 : i32
    %c0_i32_1 = arith.constant 0 : i32
    return %c0_i32, %c0_i32_0 : i32, i32
  }
  func.func @transform_4(%arg0: i32) -> (i32, i32) {
    %c0_i32 = arith.constant 0 : i32
    %c0_i32_0 = arith.constant 0 : i32
    %c0_i32_1 = arith.constant 0 : i32
    return %c0_i32, %c0_i32_0 : i32, i32
  }
  func.func @transform_5(%arg0: i32) -> (i32, i32) {
    %c0_i32 = arith.constant 0 : i32
    %c0_i32_0 = arith.constant 0 : i32
    %c0_i32_1 = arith.constant 0 : i32
    return %c0_i32, %c0_i32_0 : i32, i32
  }
  func.func @transform_6(%arg0: i32) -> (i32, i32) {
    %c0_i32 = arith.constant 0 : i32
    %c0_i32_0 = arith.constant 0 : i32
    %c0_i32_1 = arith.constant 0 : i32
    return %c0_i32, %c0_i32_0 : i32, i32
  }
  func.func @transform_7(%arg0: i32) -> (i32, i32) {
    %c0_i32 = arith.constant 0 : i32
    %c0_i32_0 = arith.constant 0 : i32
    %c0_i32_1 = arith.constant 0 : i32
    return %c0_i32, %c0_i32_0 : i32, i32
  }
  func.func @transform_8(%arg0: i32) -> (i32, i32) {
    %c0_i32 = arith.constant 0 : i32
    %c0_i32_0 = arith.constant 0 : i32
    %c0_i32_1 = arith.constant 0 : i32
    return %c0_i32, %c0_i32_0 : i32, i32
  }
  func.func @transform_9(%arg0: i32) -> (i32, i32) {
    %c0_i32 = arith.constant 0 : i32
    %c0_i32_0 = arith.constant 0 : i32
    %c0_i32_1 = arith.constant 0 : i32
    return %c0_i32, %c0_i32_0 : i32, i32
  }
  func.func @transform_10(%arg0: i32) -> (i32, i32) {
    %c0_i32 = arith.constant 0 : i32
    %c0_i32_0 = arith.constant 0 : i32
    %c0_i32_1 = arith.constant 0 : i32
    return %c0_i32, %c0_i32_0 : i32, i32
  }
  func.func @transform_11(%arg0: i32) -> (i32, i32, i32) {
    %c0_i32 = arith.constant 0 : i32
    %c0_i32_0 = arith.constant 0 : i32
    %c0_i32_1 = arith.constant 0 : i32
    return %arg0, %c0_i32, %c0_i32_0 : i32, i32, i32
  }
}

</mosaic_0001>

<llo_original>
// kernel: tpu_custom_call.1
$region0: #{tpu_custom_call.1}
  #allocation0 [shape = 'u32[]', space=smem, size = 0x4, offset = 0x4, fixed_abs, tag = 'smem constant byte address 0x4 - core index']
  #allocation1 [shape = 'u32[144,128]{1,0:T(1,128)}', space=vmem, size = 0x12000, scoped, tag = 'internal scratch']
  #allocation2 [shape = 'f32[18,18,4]{2,1,0:T(8,128)}', space=vmem, size = 0x36000, scoped, tag = 'scratch operand']
  #allocation3 [shape = 'f32[18,18,8]{2,1,0:T(8,128)}', space=vmem, size = 0x36000, scoped, tag = 'scratch operand']
  #allocation4 [shape = 'f32[256,36]{1,0:T(8,128)}', space=vmem, size = 0x20000, scoped, tag = 'scratch operand']
  #allocation5 [shape = 'f32[128,72]{1,0:T(8,128)}', space=vmem, size = 0x10000, scoped, tag = 'scratch operand']
  %s0 = inlined_call_operand.vmem [shape: f32[2,16,16,4], index: 0, kind: input, shape index: {}]
  %s1 = inlined_call_operand.vmem [shape: bf16[36,8], index: 1, kind: input, shape index: {}]
  %s2 = inlined_call_operand.vmem [shape: bf16[72,8], index: 2, kind: input, shape index: {}]
  %s3 = inlined_call_operand.vmem [shape: f32[1,4], index: 3, kind: input, shape index: {}]
  %s4 = inlined_call_operand.vmem [shape: f32[1,4], index: 4, kind: input, shape index: {}]
  %s5 = inlined_call_operand.vmem [shape: f32[1,8], index: 5, kind: input, shape index: {}]
  %s6 = inlined_call_operand.vmem [shape: f32[1,8], index: 6, kind: input, shape index: {}]
  %s7 = inlined_call_operand.vmem [shape: f32[1,8], index: 7, kind: input, shape index: {}]
  %s8 = inlined_call_operand.vmem [shape: bf16[4,8], index: 8, kind: input, shape index: {}]
  %s9 = inlined_call_operand.vmem [shape: f32[1,8], index: 9, kind: input, shape index: {}]
  %s10 = inlined_call_operand.vmem [shape: f32[1,8], index: 10, kind: input, shape index: {}]
  %s11 = inlined_call_operand.vmem [shape: f32[2,128,8], index: 11, kind: output, shape index: {}]
  %s12 = sld [smem:[#allocation0]]
  $region77: #{tpu_custom_call.1} parent=0
    _
  %s14 = ssub.s32 1, %s12
  %s15 = scalar_select 0, %s14, %s12
  loop: start=0, step=1, limit=4
  $region2: #{tpu_custom_call.1} parent=0 // loop_pre_header
    _
  $region3: #{tpu_custom_call.1} parent=0 // loop_header
    %s17 = sphi 0, %s21
    %p18 = scmp.ge.s32.totalorder %s17, 4
    %s27 = sphi 0, %s29
    %s30 = sphi 0, %s27
    %s31 = sphi 0, %s30
    %s47 = sphi 0, %s31
    %s51 = sphi 0, %s51
    %s53 = sphi 0, %s51
    %s54 = sphi 0, %s53
    %s68 = sphi 0, %s54
    %s72 = sphi 0, %s72
    %s74 = sphi 0, %s72
    %s75 = sphi 0, %s74
    %s89 = sphi 0, %s75
    %s93 = sphi 0, %s93
    %s95 = sphi 0, %s93
    %s96 = sphi 0, %s95
    %s110 = sphi 0, %s96
    %s114 = sphi 0, %s114
    %s116 = sphi 0, %s114
    %s117 = sphi 0, %s116
    %s131 = sphi 0, %s117
    %s135 = sphi 0, %s135
    %s137 = sphi 0, %s135
    %s138 = sphi 0, %s137
    %s152 = sphi 0, %s138
    %s156 = sphi 0, %s156
    %s158 = sphi 0, %s156
    %s159 = sphi 0, %s158
    %s173 = sphi 0, %s159
    %s177 = sphi 0, %s177
    %s179 = sphi 0, %s177
    %s180 = sphi 0, %s179
    %s194 = sphi 0, %s180
    %s198 = sphi 0, %s198
    %s200 = sphi 0, %s198
    %s201 = sphi 0, %s200
    %s215 = sphi 0, %s201
    %s219 = sphi 0, %s219
    %s221 = sphi 0, %s219
    %s222 = sphi 0, %s221
    %s236 = sphi 0, %s222
    %s240 = sphi 0, %s240
    %s242 = sphi 0, %s240
    %s243 = sphi 0, %s242
    %s257 = sphi 0, %s243
    %s263 = sphi 0, %s265
    %s266 = sphi 0, %s263
    %s267 = sphi 0, %s266
    %s283 = sphi 0, %s267
  $region4: #{tpu_custom_call.1} parent=0 // loop_header_branch
    %20 = sbr.rel (%p18) target = $region8
  $region5: #{tpu_custom_call.1} parent=0 // loop_body
    %s22 = ssub.s32 %s17, 1
    %s23 = ssub.s32 %s17, 2
    %s24 = sadd.s32 %s17, 1
    %s25 = ssub.s32 %s17, %s24
    %p26 = scmp.eq.s32.totalorder %s25, 0
    %s28 = sadd.s32 %s27, 1
    %s29 = scalar_select %p26, %s27, %s28
    %p32 = pneg %p26
    %p33 = scmp.eq.s32.totalorder %s17, 1
    %p34 = por %p32, %p33
    %p35 = scmp.ne.s32.totalorder %s27, %s30
    %p36 = scmp.eq.s32.totalorder %s17, 0
    %p37 = por %p35, %p36
    %p38 = scmp.ne.s32.totalorder %s27, %s30
    %p39 = scmp.eq.s32.totalorder %s22, 1
    %p40 = por %p38, %p39
    %p41 = scmp.ne.s32.totalorder %s30, %s31
    %p42 = scmp.eq.s32.totalorder %s22, 0
    %p43 = por %p41, %p42
    %p44 = scmp.ne.s32.totalorder %s30, %s31
    %p45 = scmp.eq.s32.totalorder %s23, 1
    %p46 = por %p44, %p45
    %p48 = scmp.ne.s32.totalorder %s31, %s47
    %p49 = scmp.eq.s32.totalorder %s23, 0
    %p50 = por %p48, %p49
    %s52 = sadd.s32 %s51, 1
    %p55 = scmp.eq.s32.totalorder %s17, 1
    %p56 = scmp.ne.s32.totalorder %s51, %s53
    %p57 = scmp.eq.s32.totalorder %s17, 0
    %p58 = por %p56, %p57
    %p59 = scmp.ne.s32.totalorder %s51, %s53
    %p60 = scmp.eq.s32.totalorder %s22, 1
    %p61 = por %p59, %p60
    %p62 = scmp.ne.s32.totalorder %s53, %s54
    %p63 = scmp.eq.s32.totalorder %s22, 0
    %p64 = por %p62, %p63
    %p65 = scmp.ne.s32.totalorder %s53, %s54
    %p66 = scmp.eq.s32.totalorder %s23, 1
    %p67 = por %p65, %p66
    %p69 = scmp.ne.s32.totalorder %s54, %s68
    %p70 = scmp.eq.s32.totalorder %s23, 0
    %p71 = por %p69, %p70
    %s73 = sadd.s32 %s72, 1
    %p76 = scmp.eq.s32.totalorder %s17, 1
    %p77 = scmp.ne.s32.totalorder %s72, %s74
    %p78 = scmp.eq.s32.totalorder %s17, 0
    %p79 = por %p77, %p78
    %p80 = scmp.ne.s32.totalorder %s72, %s74
    %p81 = scmp.eq.s32.totalorder %s22, 1
    %p82 = por %p80, %p81
    %p83 = scmp.ne.s32.totalorder %s74, %s75
    %p84 = scmp.eq.s32.totalorder %s22, 0
    %p85 = por %p83, %p84
    %p86 = scmp.ne.s32.totalorder %s74, %s75
    %p87 = scmp.eq.s32.totalorder %s23, 1
    %p88 = por %p86, %p87
    %p90 = scmp.ne.s32.totalorder %s75, %s89
    %p91 = scmp.eq.s32.totalorder %s23, 0
    %p92 = por %p90, %p91
    %s94 = sadd.s32 %s93, 1
    %p97 = scmp.eq.s32.totalorder %s17, 1
    %p98 = scmp.ne.s32.totalorder %s93, %s95
    %p99 = scmp.eq.s32.totalorder %s17, 0
    %p100 = por %p98, %p99
    %p101 = scmp.ne.s32.totalorder %s93, %s95
    %p102 = scmp.eq.s32.totalorder %s22, 1
    %p103 = por %p101, %p102
    %p104 = scmp.ne.s32.totalorder %s95, %s96
    %p105 = scmp.eq.s32.totalorder %s22, 0
    %p106 = por %p104, %p105
    %p107 = scmp.ne.s32.totalorder %s95, %s96
    %p108 = scmp.eq.s32.totalorder %s23, 1
    %p109 = por %p107, %p108
    %p111 = scmp.ne.s32.totalorder %s96, %s110
    %p112 = scmp.eq.s32.totalorder %s23, 0
    %p113 = por %p111, %p112
    %s115 = sadd.s32 %s114, 1
    %p118 = scmp.eq.s32.totalorder %s17, 1
    %p119 = scmp.ne.s32.totalorder %s114, %s116
    %p120 = scmp.eq.s32.totalorder %s17, 0
    %p121 = por %p119, %p120
    %p122 = scmp.ne.s32.totalorder %s114, %s116
    %p123 = scmp.eq.s32.totalorder %s22, 1
    %p124 = por %p122, %p123
    %p125 = scmp.ne.s32.totalorder %s116, %s117
    %p126 = scmp.eq.s32.totalorder %s22, 0
    %p127 = por %p125, %p126
    %p128 = scmp.ne.s32.totalorder %s116, %s117
    %p129 = scmp.eq.s32.totalorder %s23, 1
    %p130 = por %p128, %p129
    %p132 = scmp.ne.s32.totalorder %s117, %s131
    %p133 = scmp.eq.s32.totalorder %s23, 0
    %p134 = por %p132, %p133
    %s136 = sadd.s32 %s135, 1
    %p139 = scmp.eq.s32.totalorder %s17, 1
    %p140 = scmp.ne.s32.totalorder %s135, %s137
    %p141 = scmp.eq.s32.totalorder %s17, 0
    %p142 = por %p140, %p141
    %p143 = scmp.ne.s32.totalorder %s135, %s137
    %p144 = scmp.eq.s32.totalorder %s22, 1
    %p145 = por %p143, %p144
    %p146 = scmp.ne.s32.totalorder %s137, %s138
    %p147 = scmp.eq.s32.totalorder %s22, 0
    %p148 = por %p146, %p147
    %p149 = scmp.ne.s32.totalorder %s137, %s138
    %p150 = scmp.eq.s32.totalorder %s23, 1
    %p151 = por %p149, %p150
    %p153 = scmp.ne.s32.totalorder %s138, %s152
    %p154 = scmp.eq.s32.totalorder %s23, 0
    %p155 = por %p153, %p154
    %s157 = sadd.s32 %s156, 1
    %p160 = scmp.eq.s32.totalorder %s17, 1
    %p161 = scmp.ne.s32.totalorder %s156, %s158
    %p162 = scmp.eq.s32.totalorder %s17, 0
    %p163 = por %p161, %p162
    %p164 = scmp.ne.s32.totalorder %s156, %s158
    %p165 = scmp.eq.s32.totalorder %s22, 1
    %p166 = por %p164, %p165
    %p167 = scmp.ne.s32.totalorder %s158, %s159
    %p168 = scmp.eq.s32.totalorder %s22, 0
    %p169 = por %p167, %p168
    %p170 = scmp.ne.s32.totalorder %s158, %s159
    %p171 = scmp.eq.s32.totalorder %s23, 1
    %p172 = por %p170, %p171
    %p174 = scmp.ne.s32.totalorder %s159, %s173
    %p175 = scmp.eq.s32.totalorder %s23, 0
    %p176 = por %p174, %p175
    %s178 = sadd.s32 %s177, 1
    %p181 = scmp.eq.s32.totalorder %s17, 1
    %p182 = scmp.ne.s32.totalorder %s177, %s179
    %p183 = scmp.eq.s32.totalorder %s17, 0
    %p184 = por %p182, %p183
    %p185 = scmp.ne.s32.totalorder %s177, %s179
    %p186 = scmp.eq.s32.totalorder %s22, 1
    %p187 = por %p185, %p186
    %p188 = scmp.ne.s32.totalorder %s179, %s180
    %p189 = scmp.eq.s32.totalorder %s22, 0
    %p190 = por %p188, %p189
    %p191 = scmp.ne.s32.totalorder %s179, %s180
    %p192 = scmp.eq.s32.totalorder %s23, 1
    %p193 = por %p191, %p192
    %p195 = scmp.ne.s32.totalorder %s180, %s194
    %p196 = scmp.eq.s32.totalorder %s23, 0
    %p197 = por %p195, %p196
    %s199 = sadd.s32 %s198, 1
    %p202 = scmp.eq.s32.totalorder %s17, 1
    %p203 = scmp.ne.s32.totalorder %s198, %s200
    %p204 = scmp.eq.s32.totalorder %s17, 0
    %p205 = por %p203, %p204
    %p206 = scmp.ne.s32.totalorder %s198, %s200
    %p207 = scmp.eq.s32.totalorder %s22, 1
    %p208 = por %p206, %p207
    %p209 = scmp.ne.s32.totalorder %s200, %s201
    %p210 = scmp.eq.s32.totalorder %s22, 0
    %p211 = por %p209, %p210
    %p212 = scmp.ne.s32.totalorder %s200, %s201
    %p213 = scmp.eq.s32.totalorder %s23, 1
    %p214 = por %p212, %p213
    %p216 = scmp.ne.s32.totalorder %s201, %s215
    %p217 = scmp.eq.s32.totalorder %s23, 0
    %p218 = por %p216, %p217
    %s220 = sadd.s32 %s219, 1
    %p223 = scmp.eq.s32.totalorder %s17, 1
    %p224 = scmp.ne.s32.totalorder %s219, %s221
    %p225 = scmp.eq.s32.totalorder %s17, 0
    %p226 = por %p224, %p225
    %p227 = scmp.ne.s32.totalorder %s219, %s221
    %p228 = scmp.eq.s32.totalorder %s22, 1
    %p229 = por %p227, %p228
    %p230 = scmp.ne.s32.totalorder %s221, %s222
    %p231 = scmp.eq.s32.totalorder %s22, 0
    %p232 = por %p230, %p231
    %p233 = scmp.ne.s32.totalorder %s221, %s222
    %p234 = scmp.eq.s32.totalorder %s23, 1
    %p235 = por %p233, %p234
    %p237 = scmp.ne.s32.totalorder %s222, %s236
    %p238 = scmp.eq.s32.totalorder %s23, 0
    %p239 = por %p237, %p238
    %s241 = sadd.s32 %s240, 1
    %p244 = scmp.eq.s32.totalorder %s17, 1
    %p245 = scmp.ne.s32.totalorder %s240, %s242
    %p246 = scmp.eq.s32.totalorder %s17, 0
    %p247 = por %p245, %p246
    %p248 = scmp.ne.s32.totalorder %s240, %s242
    %p249 = scmp.eq.s32.totalorder %s22, 1
    %p250 = por %p248, %p249
    %p251 = scmp.ne.s32.totalorder %s242, %s243
    %p252 = scmp.eq.s32.totalorder %s22, 0
    %p253 = por %p251, %p252
    %p254 = scmp.ne.s32.totalorder %s242, %s243
    %p255 = scmp.eq.s32.totalorder %s23, 1
    %p256 = por %p254, %p255
    %p258 = scmp.ne.s32.totalorder %s243, %s257
    %p259 = scmp.eq.s32.totalorder %s23, 0
    %p260 = por %p258, %p259
    %s261 = ssub.s32 %s17, %s24
    %p262 = scmp.eq.s32.totalorder %s261, 0
    %s264 = sadd.s32 %s263, 1
    %s265 = scalar_select %p262, %s263, %s264
    %p268 = pneg %p262
    %p269 = scmp.eq.s32.totalorder %s17, 1
    %p270 = por %p268, %p269
    %p271 = scmp.ne.s32.totalorder %s263, %s266
    %p272 = scmp.eq.s32.totalorder %s17, 0
    %p273 = por %p271, %p272
    %p274 = scmp.ne.s32.totalorder %s263, %s266
    %p275 = scmp.eq.s32.totalorder %s22, 1
    %p276 = por %p274, %p275
    %p277 = scmp.ne.s32.totalorder %s266, %s267
    %p278 = scmp.eq.s32.totalorder %s22, 0
    %p279 = por %p277, %p278
    %p280 = scmp.ne.s32.totalorder %s266, %s267
    %p281 = scmp.eq.s32.totalorder %s23, 1
    %p282 = por %p280, %p281
    %p284 = scmp.ne.s32.totalorder %s267, %s283
    %p285 = scmp.eq.s32.totalorder %s23, 0
    %p286 = por %p284, %p285
    %p287 = scmp.le.s32.totalorder 1, %s17
    %p288 = scmp.lt.s32.totalorder %s17, 3
    %p289 = pnand %p287, %p288
    %p290 = pneg %p289
    // Predicated region
    $region9: #{tpu_custom_call.1} parent=5 // pred_check
      _
    $region10: #{tpu_custom_call.1} parent=5 // pred_check_branch
      %292 = sbr.rel (%p289) target = $region12
    $region11: #{tpu_custom_call.1} parent=5 // pred_region
      %s293 = ssub.s32 %s17, 1
      // Predicated region
      $region13: #{tpu_custom_call.1} parent=11 // pred_check
        %p294 = pneg %p64
      $region14: #{tpu_custom_call.1} parent=11 // pred_check_branch
        %296 = sbr.rel (%p294) target = $region16
      $region15: #{tpu_custom_call.1} parent=11 // pred_region
        _
      $region16: #{tpu_custom_call.1} parent=11 // pred_fallthru
        _
      // Predicated region
      $region17: #{tpu_custom_call.1} parent=11 // pred_check
        %p297 = pneg %p85
      $region18: #{tpu_custom_call.1} parent=11 // pred_check_branch
        %299 = sbr.rel (%p297) target = $region20
      $region19: #{tpu_custom_call.1} parent=11 // pred_region
        _
      $region20: #{tpu_custom_call.1} parent=11 // pred_fallthru
        _
      // Predicated region
      $region21: #{tpu_custom_call.1} parent=11 // pred_check
        %p300 = pneg %p106
      $region22: #{tpu_custom_call.1} parent=11 // pred_check_branch
        %302 = sbr.rel (%p300) target = $region24
      $region23: #{tpu_custom_call.1} parent=11 // pred_region
        _
      $region24: #{tpu_custom_call.1} parent=11 // pred_fallthru
        _
      // Predicated region
      $region25: #{tpu_custom_call.1} parent=11 // pred_check
        %p303 = pneg %p127
      $region26: #{tpu_custom_call.1} parent=11 // pred_check_branch
        %305 = sbr.rel (%p303) target = $region28
      $region27: #{tpu_custom_call.1} parent=11 // pred_region
        _
      $region28: #{tpu_custom_call.1} parent=11 // pred_fallthru
        _
      // Predicated region
      $region29: #{tpu_custom_call.1} parent=11 // pred_check
        %p306 = pneg %p148
      $region30: #{tpu_custom_call.1} parent=11 // pred_check_branch
        %308 = sbr.rel (%p306) target = $region32
      $region31: #{tpu_custom_call.1} parent=11 // pred_region
        _
      $region32: #{tpu_custom_call.1} parent=11 // pred_fallthru
        _
      // Predicated region
      $region33: #{tpu_custom_call.1} parent=11 // pred_check
        %p309 = pneg %p169
      $region34: #{tpu_custom_call.1} parent=11 // pred_check_branch
        %311 = sbr.rel (%p309) target = $region36
      $region35: #{tpu_custom_call.1} parent=11 // pred_region
        _
      $region36: #{tpu_custom_call.1} parent=11 // pred_fallthru
        _
      // Predicated region
      $region37: #{tpu_custom_call.1} parent=11 // pred_check
        %p312 = pneg %p190
      $region38: #{tpu_custom_call.1} parent=11 // pred_check_branch
        %314 = sbr.rel (%p312) target = $region40
      $region39: #{tpu_custom_call.1} parent=11 // pred_region
        _
      $region40: #{tpu_custom_call.1} parent=11 // pred_fallthru
        _
      // Predicated region
      $region41: #{tpu_custom_call.1} parent=11 // pred_check
        %p315 = pneg %p211
      $region42: #{tpu_custom_call.1} parent=11 // pred_check_branch
        %317 = sbr.rel (%p315) target = $region44
      $region43: #{tpu_custom_call.1} parent=11 // pred_region
        _
      $region44: #{tpu_custom_call.1} parent=11 // pred_fallthru
        _
      // Predicated region
      $region45: #{tpu_custom_call.1} parent=11 // pred_check
        %p318 = pneg %p232
      $region46: #{tpu_custom_call.1} parent=11 // pred_check_branch
        %320 = sbr.rel (%p318) target = $region48
      $region47: #{tpu_custom_call.1} parent=11 // pred_region
        _
      $region48: #{tpu_custom_call.1} parent=11 // pred_fallthru
        _
      // Predicated region
      $region49: #{tpu_custom_call.1} parent=11 // pred_check
        %p321 = pneg %p253
      $region50: #{tpu_custom_call.1} parent=11 // pred_check_branch
        %323 = sbr.rel (%p321) target = $region52
      $region51: #{tpu_custom_call.1} parent=11 // pred_region
        _
      $region52: #{tpu_custom_call.1} parent=11 // pred_fallthru
        _
    $region12: #{tpu_custom_call.1} parent=5 // pred_fallthru
      _
    %p324 = scmp.lt.s32.totalorder %s17, 2
    // Predicated region
    $region53: #{tpu_custom_call.1} parent=5 // pred_check
      %p325 = pneg %p324
    $region54: #{tpu_custom_call.1} parent=5 // pred_check_branch
      %327 = sbr.rel (%p325) target = $region56
    $region55: #{tpu_custom_call.1} parent=5 // pred_region
      // Predicated region
      $region57: #{tpu_custom_call.1} parent=55 // pred_check
        %p328 = pneg %p37
      $region58: #{tpu_custom_call.1} parent=55 // pred_check_branch
        %330 = sbr.rel (%p328) target = $region60
      $region59: #{tpu_custom_call.1} parent=55 // pred_region
        %p331 = scmp.lt.s32.totalorder %s17, 1
        %s332 = scalar_select %p331, %s17, 1
        %s333 = smul.addr %s332, 32
        %s334 = smul.addr %s333, 8
        %s335 = scalar_lea.vmem %s0, %s334
      $region60: #{tpu_custom_call.1} parent=55 // pred_fallthru
        _
    $region56: #{tpu_custom_call.1} parent=5 // pred_fallthru
      _
    %p336 = scmp.le.s32.totalorder 1, %s17
    %p337 = scmp.lt.s32.totalorder %s17, 3
    %p338 = pnand %p336, %p337
    %p339 = pneg %p338
    // Predicated region
    $region61: #{tpu_custom_call.1} parent=5 // pred_check
      _
    $region62: #{tpu_custom_call.1} parent=5 // pred_check_branch
      %341 = sbr.rel (%p338) target = $region64
    $region63: #{tpu_custom_call.1} parent=5 // pred_region
      %s342 = ssub.s32 %s17, 1
      %p343 = scmp.lt.s32.totalorder %s22, 1
      %s344 = scalar_select %p343, %s22, 1
      %s345 = smul.addr %s344, 32
      %s346 = smul.addr %s345, 8
      %s347 = scalar_lea.vmem %s0, %s346
      %p348 = pneg %p43
      %p349 = pneg %p40
      %p350 = pneg %p64
      %p351 = pneg %p61
      %p352 = pneg %p85
      %p353 = pneg %p82
      %p354 = pneg %p106
      %p355 = pneg %p103
      %p356 = pneg %p127
      %p357 = pneg %p124
      %p358 = pneg %p148
      %p359 = pneg %p145
      %p360 = pneg %p169
      %p361 = pneg %p166
      %p362 = pneg %p190
      %p363 = pneg %p187
      %p364 = pneg %p211
      %p365 = pneg %p208
      %p366 = pneg %p232
      %p367 = pneg %p229
      %p368 = pneg %p253
      %p369 = pneg %p250
      %p370 = pneg %p279
      %p371 = pneg %p276
      %p372 = scmp.lt.s32.totalorder %s22, 1
      %s373 = scalar_select %p372, %s22, 1
      %s374 = smul.addr %s373, 16
      %s375 = smul.addr %s374, 8
      %s376 = scalar_lea.vmem %s11, %s375
      %p377 = scmp.lt.s32.totalorder %s22, 1
      %s378 = scalar_select %p377, %s22, 1
      %s379 = smul.addr %s378, 32
      %s380 = smul.addr %s379, 8
      %s381 = scalar_lea.vmem %s0, %s380
      %p382 = scmp.lt.s32.totalorder %s22, 1
      %s383 = scalar_select %p382, %s22, 1
      %s384 = smul.addr %s383, 16
      %s385 = smul.addr %s384, 8
      %s386 = scalar_lea.vmem %s11, %s385
      %v388 = vld [vmem:[%s381] sm:$0xff]
      %v389 = vld [vmem:[%s381 + $0x8] sm:$0xff]
      %v390 = vld [vmem:[%s381 + $0x10] sm:$0xff]
      %v391 = vld [vmem:[%s381 + $0x18] sm:$0xff]
      %v392 = vld [vmem:[%s381 + $0x20] sm:$0xff]
      %v393 = vld [vmem:[%s381 + $0x28] sm:$0xff]
      %v394 = vld [vmem:[%s381 + $0x30] sm:$0xff]
      %v395 = vld [vmem:[%s381 + $0x38] sm:$0xff]
      %v396 = vld [vmem:[%s381 + $0x40] sm:$0xff]
      %v397 = vld [vmem:[%s381 + $0x48] sm:$0xff]
      %v398 = vld [vmem:[%s381 + $0x50] sm:$0xff]
      %v399 = vld [vmem:[%s381 + $0x58] sm:$0xff]
      %v400 = vld [vmem:[%s381 + $0x60] sm:$0xff]
      %v401 = vld [vmem:[%s381 + $0x68] sm:$0xff]
      %v402 = vld [vmem:[%s381 + $0x70] sm:$0xff]
      %v403 = vld [vmem:[%s381 + $0x78] sm:$0xff]
      %v404 = vld [vmem:[%s381 + $0x80] sm:$0xff]
      %v405 = vld [vmem:[%s381 + $0x88] sm:$0xff]
      %v406 = vld [vmem:[%s381 + $0x90] sm:$0xff]
      %v407 = vld [vmem:[%s381 + $0x98] sm:$0xff]
      %v408 = vld [vmem:[%s381 + $0xa0] sm:$0xff]
      %v409 = vld [vmem:[%s381 + $0xa8] sm:$0xff]
      %v410 = vld [vmem:[%s381 + $0xb0] sm:$0xff]
      %v411 = vld [vmem:[%s381 + $0xb8] sm:$0xff]
      %v412 = vld [vmem:[%s381 + $0xc0] sm:$0xff]
      %v413 = vld [vmem:[%s381 + $0xc8] sm:$0xff]
      %v414 = vld [vmem:[%s381 + $0xd0] sm:$0xff]
      %v415 = vld [vmem:[%s381 + $0xd8] sm:$0xff]
      %v416 = vld [vmem:[%s381 + $0xe0] sm:$0xff]
      %v417 = vld [vmem:[%s381 + $0xe8] sm:$0xff]
      %v418 = vld [vmem:[%s381 + $0xf0] sm:$0xff]
      %v419 = vld [vmem:[%s381 + $0xf8] sm:$0xff]
      %v420 = vld [vmem:[%s3] sm:$0x1]
      %v422 = vlaneseq
      %v423 = vshrl.u32 %v422, 7
      %v424 = vsub.s32 0, %v423
      %v425 = vrot.slane %v420, %v424
      %v427 = vmul.f32 %v388, %v425
      %v428 = vmul.f32 %v389, %v425
      %v429 = vmul.f32 %v390, %v425
      %v430 = vmul.f32 %v391, %v425
      %v431 = vmul.f32 %v392, %v425
      %v432 = vmul.f32 %v393, %v425
      %v433 = vmul.f32 %v394, %v425
      %v434 = vmul.f32 %v395, %v425
      %v435 = vmul.f32 %v396, %v425
      %v436 = vmul.f32 %v397, %v425
      %v437 = vmul.f32 %v398, %v425
      %v438 = vmul.f32 %v399, %v425
      %v439 = vmul.f32 %v400, %v425
      %v440 = vmul.f32 %v401, %v425
      %v441 = vmul.f32 %v402, %v425
      %v442 = vmul.f32 %v403, %v425
      %v443 = vmul.f32 %v404, %v425
      %v444 = vmul.f32 %v405, %v425
      %v445 = vmul.f32 %v406, %v425
      %v446 = vmul.f32 %v407, %v425
      %v447 = vmul.f32 %v408, %v425
      %v448 = vmul.f32 %v409, %v425
      %v449 = vmul.f32 %v410, %v425
      %v450 = vmul.f32 %v411, %v425
      %v451 = vmul.f32 %v412, %v425
      %v452 = vmul.f32 %v413, %v425
      %v453 = vmul.f32 %v414, %v425
      %v454 = vmul.f32 %v415, %v425
      %v455 = vmul.f32 %v416, %v425
      %v456 = vmul.f32 %v417, %v425
      %v457 = vmul.f32 %v418, %v425
      %v458 = vmul.f32 %v419, %v425
      %v459 = vld [vmem:[%s4] sm:$0x1]
      %v461 = vlaneseq
      %v462 = vshrl.u32 %v461, 7
      %v463 = vsub.s32 0, %v462
      %v464 = vrot.slane %v459, %v463
      %v466 = vadd.f32 %v427, %v464
      %v467 = vadd.f32 %v428, %v464
      %v468 = vadd.f32 %v429, %v464
      %v469 = vadd.f32 %v430, %v464
      %v470 = vadd.f32 %v431, %v464
      %v471 = vadd.f32 %v432, %v464
      %v472 = vadd.f32 %v433, %v464
      %v473 = vadd.f32 %v434, %v464
      %v474 = vadd.f32 %v435, %v464
      %v475 = vadd.f32 %v436, %v464
      %v476 = vadd.f32 %v437, %v464
      %v477 = vadd.f32 %v438, %v464
      %v478 = vadd.f32 %v439, %v464
      %v479 = vadd.f32 %v440, %v464
      %v480 = vadd.f32 %v441, %v464
      %v481 = vadd.f32 %v442, %v464
      %v482 = vadd.f32 %v443, %v464
      %v483 = vadd.f32 %v444, %v464
      %v484 = vadd.f32 %v445, %v464
      %v485 = vadd.f32 %v446, %v464
      %v486 = vadd.f32 %v447, %v464
      %v487 = vadd.f32 %v448, %v464
      %v488 = vadd.f32 %v449, %v464
      %v489 = vadd.f32 %v450, %v464
      %v490 = vadd.f32 %v451, %v464
      %v491 = vadd.f32 %v452, %v464
      %v492 = vadd.f32 %v453, %v464
      %v493 = vadd.f32 %v454, %v464
      %v494 = vadd.f32 %v455, %v464
      %v495 = vadd.f32 %v456, %v464
      %v496 = vadd.f32 %v457, %v464
      %v497 = vadd.f32 %v458, %v464
      %vm498 = vcmask 31744
      %499 = vst.msk [vmem:[#allocation2] sm:$0xff] %vm498, 0.0
      %500 = vst.msk [vmem:[#allocation2 + $0x8] sm:$0xff] %vm498, 0.0
      %vm501 = vcmask 25600
      %502 = vst.msk [vmem:[#allocation2 + $0x10] sm:$0x3] %vm501, 0.0
      %s503 = scalar_lea.vmem [#allocation2], 408
      %504 = vst.msk [vmem:[%s503] sm:$0xff] %vm498, 0.0
      %505 = vst.msk [vmem:[%s503 + $0x8] sm:$0xff] %vm498, 0.0
      %506 = vst.msk [vmem:[%s503 + $0x10] sm:$0x3] %vm501, 0.0
      %vm507 = vcmask 24576
      %508 = vst.msk [vmem:[#allocation2] sm:$0x1] %vm507, 0.0
      %509 = vst.msk [vmem:[#allocation2 + $0x18] sm:$0x1] %vm507, 0.0
      %510 = vst.msk [vmem:[#allocation2 + $0x30] sm:$0x1] %vm507, 0.0
      %511 = vst.msk [vmem:[#allocation2 + $0x48] sm:$0x1] %vm507, 0.0
      %512 = vst.msk [vmem:[#allocation2 + $0x60] sm:$0x1] %vm507, 0.0
      %513 = vst.msk [vmem:[#allocation2 + $0x78] sm:$0x1] %vm507, 0.0
      %514 = vst.msk [vmem:[#allocation2 + $0x90] sm:$0x1] %vm507, 0.0
      %515 = vst.msk [vmem:[#allocation2 + $0xa8] sm:$0x1] %vm507, 0.0
      %516 = vst.msk [vmem:[#allocation2 + $0xc0] sm:$0x1] %vm507, 0.0
      %517 = vst.msk [vmem:[#allocation2 + $0xd8] sm:$0x1] %vm507, 0.0
      %518 = vst.msk [vmem:[#allocation2 + $0xf0] sm:$0x1] %vm507, 0.0
      %519 = vst.msk [vmem:[#allocation2 + $0x108] sm:$0x1] %vm507, 0.0
      %520 = vst.msk [vmem:[#allocation2 + $0x120] sm:$0x1] %vm507, 0.0
      %521 = vst.msk [vmem:[#allocation2 + $0x138] sm:$0x1] %vm507, 0.0
      %522 = vst.msk [vmem:[#allocation2 + $0x150] sm:$0x1] %vm507, 0.0
      %523 = vst.msk [vmem:[#allocation2 + $0x168] sm:$0x1] %vm507, 0.0
      %524 = vst.msk [vmem:[#allocation2 + $0x180] sm:$0x1] %vm507, 0.0
      %525 = vst.msk [vmem:[#allocation2 + $0x198] sm:$0x1] %vm507, 0.0
      %526 = vst.msk [vmem:[#allocation2 + $0x11] sm:$0x1] %vm507, 0.0
      %527 = vst.msk [vmem:[#allocation2 + $0x29] sm:$0x1] %vm507, 0.0
      %528 = vst.msk [vmem:[#allocation2 + $0x41] sm:$0x1] %vm507, 0.0
      %529 = vst.msk [vmem:[#allocation2 + $0x59] sm:$0x1] %vm507, 0.0
      %530 = vst.msk [vmem:[#allocation2 + $0x71] sm:$0x1] %vm507, 0.0
      %531 = vst.msk [vmem:[#allocation2 + $0x89] sm:$0x1] %vm507, 0.0
      %532 = vst.msk [vmem:[#allocation2 + $0xa1] sm:$0x1] %vm507, 0.0
      %533 = vst.msk [vmem:[#allocation2 + $0xb9] sm:$0x1] %vm507, 0.0
      %534 = vst.msk [vmem:[#allocation2 + $0xd1] sm:$0x1] %vm507, 0.0
      %535 = vst.msk [vmem:[#allocation2 + $0xe9] sm:$0x1] %vm507, 0.0
      %536 = vst.msk [vmem:[#allocation2 + $0x101] sm:$0x1] %vm507, 0.0
      %537 = vst.msk [vmem:[#allocation2 + $0x119] sm:$0x1] %vm507, 0.0
      %538 = vst.msk [vmem:[#allocation2 + $0x131] sm:$0x1] %vm507, 0.0
      %539 = vst.msk [vmem:[#allocation2 + $0x149] sm:$0x1] %vm507, 0.0
      %540 = vst.msk [vmem:[#allocation2 + $0x161] sm:$0x1] %vm507, 0.0
      %541 = vst.msk [vmem:[#allocation2 + $0x179] sm:$0x1] %vm507, 0.0
      %542 = vst.msk [vmem:[#allocation2 + $0x191] sm:$0x1] %vm507, 0.0
      %543 = vst.msk [vmem:[#allocation2 + $0x1a9] sm:$0x1] %vm507, 0.0
      %s544 = scalar_lea.vmem [#allocation2], 24
      %545 = vst.msk [vmem:[%s544 + $0x1] sm:$0xff] %vm498, %v466
      %546 = vst.msk [vmem:[%s544 + $0x9] sm:$0xff] %vm498, %v467
      %547 = vst.msk [vmem:[%s544 + $0x19] sm:$0xff] %vm498, %v468
      %548 = vst.msk [vmem:[%s544 + $0x21] sm:$0xff] %vm498, %v469
      %549 = vst.msk [vmem:[%s544 + $0x31] sm:$0xff] %vm498, %v470
      %550 = vst.msk [vmem:[%s544 + $0x39] sm:$0xff] %vm498, %v471
      %551 = vst.msk [vmem:[%s544 + $0x49] sm:$0xff] %vm498, %v472
      %552 = vst.msk [vmem:[%s544 + $0x51] sm:$0xff] %vm498, %v473
      %553 = vst.msk [vmem:[%s544 + $0x61] sm:$0xff] %vm498, %v474
      %554 = vst.msk [vmem:[%s544 + $0x69] sm:$0xff] %vm498, %v475
      %555 = vst.msk [vmem:[%s544 + $0x79] sm:$0xff] %vm498, %v476
      %556 = vst.msk [vmem:[%s544 + $0x81] sm:$0xff] %vm498, %v477
      %557 = vst.msk [vmem:[%s544 + $0x91] sm:$0xff] %vm498, %v478
      %558 = vst.msk [vmem:[%s544 + $0x99] sm:$0xff] %vm498, %v479
      %559 = vst.msk [vmem:[%s544 + $0xa9] sm:$0xff] %vm498, %v480
      %560 = vst.msk [vmem:[%s544 + $0xb1] sm:$0xff] %vm498, %v481
      %561 = vst.msk [vmem:[%s544 + $0xc1] sm:$0xff] %vm498, %v482
      %562 = vst.msk [vmem:[%s544 + $0xc9] sm:$0xff] %vm498, %v483
      %563 = vst.msk [vmem:[%s544 + $0xd9] sm:$0xff] %vm498, %v484
      %564 = vst.msk [vmem:[%s544 + $0xe1] sm:$0xff] %vm498, %v485
      %565 = vst.msk [vmem:[%s544 + $0xf1] sm:$0xff] %vm498, %v486
      %566 = vst.msk [vmem:[%s544 + $0xf9] sm:$0xff] %vm498, %v487
      %567 = vst.msk [vmem:[%s544 + $0x109] sm:$0xff] %vm498, %v488
      %568 = vst.msk [vmem:[%s544 + $0x111] sm:$0xff] %vm498, %v489
      %569 = vst.msk [vmem:[%s544 + $0x121] sm:$0xff] %vm498, %v490
      %570 = vst.msk [vmem:[%s544 + $0x129] sm:$0xff] %vm498, %v491
      %571 = vst.msk [vmem:[%s544 + $0x139] sm:$0xff] %vm498, %v492
      %572 = vst.msk [vmem:[%s544 + $0x141] sm:$0xff] %vm498, %v493
      %573 = vst.msk [vmem:[%s544 + $0x151] sm:$0xff] %vm498, %v494
      %574 = vst.msk [vmem:[%s544 + $0x159] sm:$0xff] %vm498, %v495
      %575 = vst.msk [vmem:[%s544 + $0x169] sm:$0xff] %vm498, %v496
      %576 = vst.msk [vmem:[%s544 + $0x171] sm:$0xff] %vm498, %v497
      %v577 = vld [vmem:[#allocation2] sm:$0xff]
      %v578 = vld [vmem:[#allocation2 + $0x8] sm:$0xff]
      %v579 = vld [vmem:[#allocation2 + $0x18] sm:$0xff]
      %v580 = vld [vmem:[#allocation2 + $0x20] sm:$0xff]
      %v581 = vld [vmem:[#allocation2 + $0x30] sm:$0xff]
      %v582 = vld [vmem:[#allocation2 + $0x38] sm:$0xff]
      %v583 = vld [vmem:[#allocation2 + $0x48] sm:$0xff]
      %v584 = vld [vmem:[#allocation2 + $0x50] sm:$0xff]
      %v585 = vld [vmem:[#allocation2 + $0x60] sm:$0xff]
      %v586 = vld [vmem:[#allocation2 + $0x68] sm:$0xff]
      %v587 = vld [vmem:[#allocation2 + $0x78] sm:$0xff]
      %v588 = vld [vmem:[#allocation2 + $0x80] sm:$0xff]
      %v589 = vld [vmem:[#allocation2 + $0x90] sm:$0xff]
      %v590 = vld [vmem:[#allocation2 + $0x98] sm:$0xff]
      %v591 = vld [vmem:[#allocation2 + $0xa8] sm:$0xff]
      %v592 = vld [vmem:[#allocation2 + $0xb0] sm:$0xff]
      %v593 = vld [vmem:[#allocation2 + $0xc0] sm:$0xff]
      %v594 = vld [vmem:[#allocation2 + $0xc8] sm:$0xff]
      %v595 = vld [vmem:[#allocation2 + $0xd8] sm:$0xff]
      %v596 = vld [vmem:[#allocation2 + $0xe0] sm:$0xff]
      %v597 = vld [vmem:[#allocation2 + $0xf0] sm:$0xff]
      %v598 = vld [vmem:[#allocation2 + $0xf8] sm:$0xff]
      %v599 = vld [vmem:[#allocation2 + $0x108] sm:$0xff]
      %v600 = vld [vmem:[#allocation2 + $0x110] sm:$0xff]
      %v601 = vld [vmem:[#allocation2 + $0x120] sm:$0xff]
      %v602 = vld [vmem:[#allocation2 + $0x128] sm:$0xff]
      %v603 = vld [vmem:[#allocation2 + $0x138] sm:$0xff]
      %v604 = vld [vmem:[#allocation2 + $0x140] sm:$0xff]
      %v605 = vld [vmem:[#allocation2 + $0x150] sm:$0xff]
      %v606 = vld [vmem:[#allocation2 + $0x158] sm:$0xff]
      %v607 = vld [vmem:[#allocation2 + $0x168] sm:$0xff]
      %v608 = vld [vmem:[#allocation2 + $0x170] sm:$0xff]
      %609 = vst.msk [vmem:[#allocation4] sm:$0xff] %vm498, %v577
      %610 = vst.msk [vmem:[#allocation4 + $0x8] sm:$0xff] %vm498, %v578
      %611 = vst.msk [vmem:[#allocation4 + $0x10] sm:$0xff] %vm498, %v579
      %612 = vst.msk [vmem:[#allocation4 + $0x18] sm:$0xff] %vm498, %v580
      %613 = vst.msk [vmem:[#allocation4 + $0x20] sm:$0xff] %vm498, %v581
      %614 = vst.msk [vmem:[#allocation4 + $0x28] sm:$0xff] %vm498, %v582
      %615 = vst.msk [vmem:[#allocation4 + $0x30] sm:$0xff] %vm498, %v583
      %616 = vst.msk [vmem:[#allocation4 + $0x38] sm:$0xff] %vm498, %v584
      %617 = vst.msk [vmem:[#allocation4 + $0x40] sm:$0xff] %vm498, %v585
      %618 = vst.msk [vmem:[#allocation4 + $0x48] sm:$0xff] %vm498, %v586
      %619 = vst.msk [vmem:[#allocation4 + $0x50] sm:$0xff] %vm498, %v587
      %620 = vst.msk [vmem:[#allocation4 + $0x58] sm:$0xff] %vm498, %v588
      %621 = vst.msk [vmem:[#allocation4 + $0x60] sm:$0xff] %vm498, %v589
      %622 = vst.msk [vmem:[#allocation4 + $0x68] sm:$0xff] %vm498, %v590
      %623 = vst.msk [vmem:[#allocation4 + $0x70] sm:$0xff] %vm498, %v591
      %624 = vst.msk [vmem:[#allocation4 + $0x78] sm:$0xff] %vm498, %v592
      %625 = vst.msk [vmem:[#allocation4 + $0x80] sm:$0xff] %vm498, %v593
      %626 = vst.msk [vmem:[#allocation4 + $0x88] sm:$0xff] %vm498, %v594
      %627 = vst.msk [vmem:[#allocation4 + $0x90] sm:$0xff] %vm498, %v595
      %628 = vst.msk [vmem:[#allocation4 + $0x98] sm:$0xff] %vm498, %v596
      %629 = vst.msk [vmem:[#allocation4 + $0xa0] sm:$0xff] %vm498, %v597
      %630 = vst.msk [vmem:[#allocation4 + $0xa8] sm:$0xff] %vm498, %v598
      %631 = vst.msk [vmem:[#allocation4 + $0xb0] sm:$0xff] %vm498, %v599
      %632 = vst.msk [vmem:[#allocation4 + $0xb8] sm:$0xff] %vm498, %v600
      %633 = vst.msk [vmem:[#allocation4 + $0xc0] sm:$0xff] %vm498, %v601
      %634 = vst.msk [vmem:[#allocation4 + $0xc8] sm:$0xff] %vm498, %v602
      %635 = vst.msk [vmem:[#allocation4 + $0xd0] sm:$0xff] %vm498, %v603
      %636 = vst.msk [vmem:[#allocation4 + $0xd8] sm:$0xff] %vm498, %v604
      %637 = vst.msk [vmem:[#allocation4 + $0xe0] sm:$0xff] %vm498, %v605
      %638 = vst.msk [vmem:[#allocation4 + $0xe8] sm:$0xff] %vm498, %v606
      %639 = vst.msk [vmem:[#allocation4 + $0xf0] sm:$0xff] %vm498, %v607
      %640 = vst.msk [vmem:[#allocation4 + $0xf8] sm:$0xff] %vm498, %v608
      %v641 = vld [vmem:[#allocation2 + $0x1] sm:$0xff]
      %v642 = vld [vmem:[#allocation2 + $0x9] sm:$0xff]
      %v643 = vld [vmem:[#allocation2 + $0x19] sm:$0xff]
      %v644 = vld [vmem:[#allocation2 + $0x21] sm:$0xff]
      %v645 = vld [vmem:[#allocation2 + $0x31] sm:$0xff]
      %v646 = vld [vmem:[#allocation2 + $0x39] sm:$0xff]
      %v647 = vld [vmem:[#allocation2 + $0x49] sm:$0xff]
      %v648 = vld [vmem:[#allocation2 + $0x51] sm:$0xff]
      %v649 = vld [vmem:[#allocation2 + $0x61] sm:$0xff]
      %v650 = vld [vmem:[#allocation2 + $0x69] sm:$0xff]
      %v651 = vld [vmem:[#allocation2 + $0x79] sm:$0xff]
      %v652 = vld [vmem:[#allocation2 + $0x81] sm:$0xff]
      %v653 = vld [vmem:[#allocation2 + $0x91] sm:$0xff]
      %v654 = vld [vmem:[#allocation2 + $0x99] sm:$0xff]
      %v655 = vld [vmem:[#allocation2 + $0xa9] sm:$0xff]
      %v656 = vld [vmem:[#allocation2 + $0xb1] sm:$0xff]
      %v657 = vld [vmem:[#allocation2 + $0xc1] sm:$0xff]
      %v658 = vld [vmem:[#allocation2 + $0xc9] sm:$0xff]
      %v659 = vld [vmem:[#allocation2 + $0xd9] sm:$0xff]
      %v660 = vld [vmem:[#allocation2 + $0xe1] sm:$0xff]
      %v661 = vld [vmem:[#allocation2 + $0xf1] sm:$0xff]
      %v662 = vld [vmem:[#allocation2 + $0xf9] sm:$0xff]
      %v663 = vld [vmem:[#allocation2 + $0x109] sm:$0xff]
      %v664 = vld [vmem:[#allocation2 + $0x111] sm:$0xff]
      %v665 = vld [vmem:[#allocation2 + $0x121] sm:$0xff]
      %v666 = vld [vmem:[#allocation2 + $0x129] sm:$0xff]
      %v667 = vld [vmem:[#allocation2 + $0x139] sm:$0xff]
      %v668 = vld [vmem:[#allocation2 + $0x141] sm:$0xff]
      %v669 = vld [vmem:[#allocation2 + $0x151] sm:$0xff]
      %v670 = vld [vmem:[#allocation2 + $0x159] sm:$0xff]
      %v671 = vld [vmem:[#allocation2 + $0x169] sm:$0xff]
      %v672 = vld [vmem:[#allocation2 + $0x171] sm:$0xff]
      %705 = vrot.lane.b32.xlu0 %v641, 4
      %v706 = vpop.permute.xlu0 %705
      %707 = vrot.lane.b32.xlu0 %v642, 4
      %v708 = vpop.permute.xlu0 %707
      %709 = vrot.lane.b32.xlu0 %v643, 4
      %v710 = vpop.permute.xlu0 %709
      %711 = vrot.lane.b32.xlu0 %v644, 4
      %v712 = vpop.permute.xlu0 %711
      %713 = vrot.lane.b32.xlu0 %v645, 4
      %v714 = vpop.permute.xlu0 %713
      %715 = vrot.lane.b32.xlu0 %v646, 4
      %v716 = vpop.permute.xlu0 %715
      %717 = vrot.lane.b32.xlu0 %v647, 4
      %v718 = vpop.permute.xlu0 %717
      %719 = vrot.lane.b32.xlu0 %v648, 4
      %v720 = vpop.permute.xlu0 %719
      %721 = vrot.lane.b32.xlu0 %v649, 4
      %v722 = vpop.permute.xlu0 %721
      %723 = vrot.lane.b32.xlu0 %v650, 4
      %v724 = vpop.permute.xlu0 %723
      %725 = vrot.lane.b32.xlu0 %v651, 4
      %v726 = vpop.permute.xlu0 %725
      %727 = vrot.lane.b32.xlu0 %v652, 4
      %v728 = vpop.permute.xlu0 %727
      %729 = vrot.lane.b32.xlu0 %v653, 4
      %v730 = vpop.permute.xlu0 %729
      %731 = vrot.lane.b32.xlu0 %v654, 4
      %v732 = vpop.permute.xlu0 %731
      %733 = vrot.lane.b32.xlu0 %v655, 4
      %v734 = vpop.permute.xlu0 %733
      %735 = vrot.lane.b32.xlu0 %v656, 4
      %v736 = vpop.permute.xlu0 %735
      %737 = vrot.lane.b32.xlu0 %v657, 4
      %v738 = vpop.permute.xlu0 %737
      %739 = vrot.lane.b32.xlu0 %v658, 4
      %v740 = vpop.permute.xlu0 %739
      %741 = vrot.lane.b32.xlu0 %v659, 4
      %v742 = vpop.permute.xlu0 %741
      %743 = vrot.lane.b32.xlu0 %v660, 4
      %v744 = vpop.permute.xlu0 %743
      %745 = vrot.lane.b32.xlu0 %v661, 4
      %v746 = vpop.permute.xlu0 %745
      %747 = vrot.lane.b32.xlu0 %v662, 4
      %v748 = vpop.permute.xlu0 %747
      %749 = vrot.lane.b32.xlu0 %v663, 4
      %v750 = vpop.permute.xlu0 %749
      %751 = vrot.lane.b32.xlu0 %v664, 4
      %v752 = vpop.permute.xlu0 %751
      %753 = vrot.lane.b32.xlu0 %v665, 4
      %v754 = vpop.permute.xlu0 %753
      %755 = vrot.lane.b32.xlu0 %v666, 4
      %v756 = vpop.permute.xlu0 %755
      %757 = vrot.lane.b32.xlu0 %v667, 4
      %v758 = vpop.permute.xlu0 %757
      %759 = vrot.lane.b32.xlu0 %v668, 4
      %v760 = vpop.permute.xlu0 %759
      %761 = vrot.lane.b32.xlu0 %v669, 4
      %v762 = vpop.permute.xlu0 %761
      %763 = vrot.lane.b32.xlu0 %v670, 4
      %v764 = vpop.permute.xlu0 %763
      %765 = vrot.lane.b32.xlu0 %v671, 4
      %v766 = vpop.permute.xlu0 %765
      %767 = vrot.lane.b32.xlu0 %v672, 4
      %v768 = vpop.permute.xlu0 %767
      %vm801 = vcmask 64544
      %802 = vst.msk [vmem:[#allocation4] sm:$0xff] %vm801, %v706
      %803 = vst.msk [vmem:[#allocation4 + $0x8] sm:$0xff] %vm801, %v708
      %804 = vst.msk [vmem:[#allocation4 + $0x10] sm:$0xff] %vm801, %v710
      %805 = vst.msk [vmem:[#allocation4 + $0x18] sm:$0xff] %vm801, %v712
      %806 = vst.msk [vmem:[#allocation4 + $0x20] sm:$0xff] %vm801, %v714
      %807 = vst.msk [vmem:[#allocation4 + $0x28] sm:$0xff] %vm801, %v716
      %808 = vst.msk [vmem:[#allocation4 + $0x30] sm:$0xff] %vm801, %v718
      %809 = vst.msk [vmem:[#allocation4 + $0x38] sm:$0xff] %vm801, %v720
      %810 = vst.msk [vmem:[#allocation4 + $0x40] sm:$0xff] %vm801, %v722
      %811 = vst.msk [vmem:[#allocation4 + $0x48] sm:$0xff] %vm801, %v724
      %812 = vst.msk [vmem:[#allocation4 + $0x50] sm:$0xff] %vm801, %v726
      %813 = vst.msk [vmem:[#allocation4 + $0x58] sm:$0xff] %vm801, %v728
      %814 = vst.msk [vmem:[#allocation4 + $0x60] sm:$0xff] %vm801, %v730
      %815 = vst.msk [vmem:[#allocation4 + $0x68] sm:$0xff] %vm801, %v732
      %816 = vst.msk [vmem:[#allocation4 + $0x70] sm:$0xff] %vm801, %v734
      %817 = vst.msk [vmem:[#allocation4 + $0x78] sm:$0xff] %vm801, %v736
      %818 = vst.msk [vmem:[#allocation4 + $0x80] sm:$0xff] %vm801, %v738
      %819 = vst.msk [vmem:[#allocation4 + $0x88] sm:$0xff] %vm801, %v740
      %820 = vst.msk [vmem:[#allocation4 + $0x90] sm:$0xff] %vm801, %v742
      %821 = vst.msk [vmem:[#allocation4 + $0x98] sm:$0xff] %vm801, %v744
      %822 = vst.msk [vmem:[#allocation4 + $0xa0] sm:$0xff] %vm801, %v746
      %823 = vst.msk [vmem:[#allocation4 + $0xa8] sm:$0xff] %vm801, %v748
      %824 = vst.msk [vmem:[#allocation4 + $0xb0] sm:$0xff] %vm801, %v750
      %825 = vst.msk [vmem:[#allocation4 + $0xb8] sm:$0xff] %vm801, %v752
      %826 = vst.msk [vmem:[#allocation4 + $0xc0] sm:$0xff] %vm801, %v754
      %827 = vst.msk [vmem:[#allocation4 + $0xc8] sm:$0xff] %vm801, %v756
      %828 = vst.msk [vmem:[#allocation4 + $0xd0] sm:$0xff] %vm801, %v758
      %829 = vst.msk [vmem:[#allocation4 + $0xd8] sm:$0xff] %vm801, %v760
      %830 = vst.msk [vmem:[#allocation4 + $0xe0] sm:$0xff] %vm801, %v762
      %831 = vst.msk [vmem:[#allocation4 + $0xe8] sm:$0xff] %vm801, %v764
      %832 = vst.msk [vmem:[#allocation4 + $0xf0] sm:$0xff] %vm801, %v766
      %833 = vst.msk [vmem:[#allocation4 + $0xf8] sm:$0xff] %vm801, %v768
      %v834 = vld [vmem:[#allocation2 + $0x2] sm:$0xff]
      %v835 = vld [vmem:[#allocation2 + $0xa] sm:$0xff]
      %v836 = vld [vmem:[#allocation2 + $0x1a] sm:$0xff]
      %v837 = vld [vmem:[#allocation2 + $0x22] sm:$0xff]
      %v838 = vld [vmem:[#allocation2 + $0x32] sm:$0xff]
      %v839 = vld [vmem:[#allocation2 + $0x3a] sm:$0xff]
      %v840 = vld [vmem:[#allocation2 + $0x4a] sm:$0xff]
      %v841 = vld [vmem:[#allocation2 + $0x52] sm:$0xff]
      %v842 = vld [vmem:[#allocation2 + $0x62] sm:$0xff]
      %v843 = vld [vmem:[#allocation2 + $0x6a] sm:$0xff]
      %v844 = vld [vmem:[#allocation2 + $0x7a] sm:$0xff]
      %v845 = vld [vmem:[#allocation2 + $0x82] sm:$0xff]
      %v846 = vld [vmem:[#allocation2 + $0x92] sm:$0xff]
      %v847 = vld [vmem:[#allocation2 + $0x9a] sm:$0xff]
      %v848 = vld [vmem:[#allocation2 + $0xaa] sm:$0xff]
      %v849 = vld [vmem:[#allocation2 + $0xb2] sm:$0xff]
      %v850 = vld [vmem:[#allocation2 + $0xc2] sm:$0xff]
      %v851 = vld [vmem:[#allocation2 + $0xca] sm:$0xff]
      %v852 = vld [vmem:[#allocation2 + $0xda] sm:$0xff]
      %v853 = vld [vmem:[#allocation2 + $0xe2] sm:$0xff]
      %v854 = vld [vmem:[#allocation2 + $0xf2] sm:$0xff]
      %v855 = vld [vmem:[#allocation2 + $0xfa] sm:$0xff]
      %v856 = vld [vmem:[#allocation2 + $0x10a] sm:$0xff]
      %v857 = vld [vmem:[#allocation2 + $0x112] sm:$0xff]
      %v858 = vld [vmem:[#allocation2 + $0x122] sm:$0xff]
      %v859 = vld [vmem:[#allocation2 + $0x12a] sm:$0xff]
      %v860 = vld [vmem:[#allocation2 + $0x13a] sm:$0xff]
      %v861 = vld [vmem:[#allocation2 + $0x142] sm:$0xff]
      %v862 = vld [vmem:[#allocation2 + $0x152] sm:$0xff]
      %v863 = vld [vmem:[#allocation2 + $0x15a] sm:$0xff]
      %v864 = vld [vmem:[#allocation2 + $0x16a] sm:$0xff]
      %v865 = vld [vmem:[#allocation2 + $0x172] sm:$0xff]
      %898 = vrot.lane.b32.xlu0 %v834, 8
      %v899 = vpop.permute.xlu0 %898
      %900 = vrot.lane.b32.xlu0 %v835, 8
      %v901 = vpop.permute.xlu0 %900
      %902 = vrot.lane.b32.xlu0 %v836, 8
      %v903 = vpop.permute.xlu0 %902
      %904 = vrot.lane.b32.xlu0 %v837, 8
      %v905 = vpop.permute.xlu0 %904
      %906 = vrot.lane.b32.xlu0 %v838, 8
      %v907 = vpop.permute.xlu0 %906
      %908 = vrot.lane.b32.xlu0 %v839, 8
      %v909 = vpop.permute.xlu0 %908
      %910 = vrot.lane.b32.xlu0 %v840, 8
      %v911 = vpop.permute.xlu0 %910
      %912 = vrot.lane.b32.xlu0 %v841, 8
      %v913 = vpop.permute.xlu0 %912
      %914 = vrot.lane.b32.xlu0 %v842, 8
      %v915 = vpop.permute.xlu0 %914
      %916 = vrot.lane.b32.xlu0 %v843, 8
      %v917 = vpop.permute.xlu0 %916
      %918 = vrot.lane.b32.xlu0 %v844, 8
      %v919 = vpop.permute.xlu0 %918
      %920 = vrot.lane.b32.xlu0 %v845, 8
      %v921 = vpop.permute.xlu0 %920
      %922 = vrot.lane.b32.xlu0 %v846, 8
      %v923 = vpop.permute.xlu0 %922
      %924 = vrot.lane.b32.xlu0 %v847, 8
      %v925 = vpop.permute.xlu0 %924
      %926 = vrot.lane.b32.xlu0 %v848, 8
      %v927 = vpop.permute.xlu0 %926
      %928 = vrot.lane.b32.xlu0 %v849, 8
      %v929 = vpop.permute.xlu0 %928
      %930 = vrot.lane.b32.xlu0 %v850, 8
      %v931 = vpop.permute.xlu0 %930
      %932 = vrot.lane.b32.xlu0 %v851, 8
      %v933 = vpop.permute.xlu0 %932
      %934 = vrot.lane.b32.xlu0 %v852, 8
      %v935 = vpop.permute.xlu0 %934
      %936 = vrot.lane.b32.xlu0 %v853, 8
      %v937 = vpop.permute.xlu0 %936
      %938 = vrot.lane.b32.xlu0 %v854, 8
      %v939 = vpop.permute.xlu0 %938
      %940 = vrot.lane.b32.xlu0 %v855, 8
      %v941 = vpop.permute.xlu0 %940
      %942 = vrot.lane.b32.xlu0 %v856, 8
      %v943 = vpop.permute.xlu0 %942
      %944 = vrot.lane.b32.xlu0 %v857, 8
      %v945 = vpop.permute.xlu0 %944
      %946 = vrot.lane.b32.xlu0 %v858, 8
      %v947 = vpop.permute.xlu0 %946
      %948 = vrot.lane.b32.xlu0 %v859, 8
      %v949 = vpop.permute.xlu0 %948
      %950 = vrot.lane.b32.xlu0 %v860, 8
      %v951 = vpop.permute.xlu0 %950
      %952 = vrot.lane.b32.xlu0 %v861, 8
      %v953 = vpop.permute.xlu0 %952
      %954 = vrot.lane.b32.xlu0 %v862, 8
      %v955 = vpop.permute.xlu0 %954
      %956 = vrot.lane.b32.xlu0 %v863, 8
      %v957 = vpop.permute.xlu0 %956
      %958 = vrot.lane.b32.xlu0 %v864, 8
      %v959 = vpop.permute.xlu0 %958
      %960 = vrot.lane.b32.xlu0 %v865, 8
      %v961 = vpop.permute.xlu0 %960
      %vm994 = vcmask 97344
      %995 = vst.msk [vmem:[#allocation4] sm:$0xff] %vm994, %v899
      %996 = vst.msk [vmem:[#allocation4 + $0x8] sm:$0xff] %vm994, %v901
      %997 = vst.msk [vmem:[#allocation4 + $0x10] sm:$0xff] %vm994, %v903
      %998 = vst.msk [vmem:[#allocation4 + $0x18] sm:$0xff] %vm994, %v905
      %999 = vst.msk [vmem:[#allocation4 + $0x20] sm:$0xff] %vm994, %v907
      %1000 = vst.msk [vmem:[#allocation4 + $0x28] sm:$0xff] %vm994, %v909
      %1001 = vst.msk [vmem:[#allocation4 + $0x30] sm:$0xff] %vm994, %v911
      %1002 = vst.msk [vmem:[#allocation4 + $0x38] sm:$0xff] %vm994, %v913
      %1003 = vst.msk [vmem:[#allocation4 + $0x40] sm:$0xff] %vm994, %v915
      %1004 = vst.msk [vmem:[#allocation4 + $0x48] sm:$0xff] %vm994, %v917
      %1005 = vst.msk [vmem:[#allocation4 + $0x50] sm:$0xff] %vm994, %v919
      %1006 = vst.msk [vmem:[#allocation4 + $0x58] sm:$0xff] %vm994, %v921
      %1007 = vst.msk [vmem:[#allocation4 + $0x60] sm:$0xff] %vm994, %v923
      %1008 = vst.msk [vmem:[#allocation4 + $0x68] sm:$0xff] %vm994, %v925
      %1009 = vst.msk [vmem:[#allocation4 + $0x70] sm:$0xff] %vm994, %v927
      %1010 = vst.msk [vmem:[#allocation4 + $0x78] sm:$0xff] %vm994, %v929
      %1011 = vst.msk [vmem:[#allocation4 + $0x80] sm:$0xff] %vm994, %v931
      %1012 = vst.msk [vmem:[#allocation4 + $0x88] sm:$0xff] %vm994, %v933
      %1013 = vst.msk [vmem:[#allocation4 + $0x90] sm:$0xff] %vm994, %v935
      %1014 = vst.msk [vmem:[#allocation4 + $0x98] sm:$0xff] %vm994, %v937
      %1015 = vst.msk [vmem:[#allocation4 + $0xa0] sm:$0xff] %vm994, %v939
      %1016 = vst.msk [vmem:[#allocation4 + $0xa8] sm:$0xff] %vm994, %v941
      %1017 = vst.msk [vmem:[#allocation4 + $0xb0] sm:$0xff] %vm994, %v943
      %1018 = vst.msk [vmem:[#allocation4 + $0xb8] sm:$0xff] %vm994, %v945
      %1019 = vst.msk [vmem:[#allocation4 + $0xc0] sm:$0xff] %vm994, %v947
      %1020 = vst.msk [vmem:[#allocation4 + $0xc8] sm:$0xff] %vm994, %v949
      %1021 = vst.msk [vmem:[#allocation4 + $0xd0] sm:$0xff] %vm994, %v951
      %1022 = vst.msk [vmem:[#allocation4 + $0xd8] sm:$0xff] %vm994, %v953
      %1023 = vst.msk [vmem:[#allocation4 + $0xe0] sm:$0xff] %vm994, %v955
      %1024 = vst.msk [vmem:[#allocation4 + $0xe8] sm:$0xff] %vm994, %v957
      %1025 = vst.msk [vmem:[#allocation4 + $0xf0] sm:$0xff] %vm994, %v959
      %1026 = vst.msk [vmem:[#allocation4 + $0xf8] sm:$0xff] %vm994, %v961
      %v1027 = vld [vmem:[%s544] sm:$0xff]
      %v1028 = vld [vmem:[%s544 + $0x8] sm:$0xff]
      %v1029 = vld [vmem:[%s544 + $0x18] sm:$0xff]
      %v1030 = vld [vmem:[%s544 + $0x20] sm:$0xff]
      %v1031 = vld [vmem:[%s544 + $0x30] sm:$0xff]
      %v1032 = vld [vmem:[%s544 + $0x38] sm:$0xff]
      %v1033 = vld [vmem:[%s544 + $0x48] sm:$0xff]
      %v1034 = vld [vmem:[%s544 + $0x50] sm:$0xff]
      %v1035 = vld [vmem:[%s544 + $0x60] sm:$0xff]
      %v1036 = vld [vmem:[%s544 + $0x68] sm:$0xff]
      %v1037 = vld [vmem:[%s544 + $0x78] sm:$0xff]
      %v1038 = vld [vmem:[%s544 + $0x80] sm:$0xff]
      %v1039 = vld [vmem:[%s544 + $0x90] sm:$0xff]
      %v1040 = vld [vmem:[%s544 + $0x98] sm:$0xff]
      %v1041 = vld [vmem:[%s544 + $0xa8] sm:$0xff]
      %v1042 = vld [vmem:[%s544 + $0xb0] sm:$0xff]
      %v1043 = vld [vmem:[%s544 + $0xc0] sm:$0xff]
      %v1044 = vld [vmem:[%s544 + $0xc8] sm:$0xff]
      %v1045 = vld [vmem:[%s544 + $0xd8] sm:$0xff]
      %v1046 = vld [vmem:[%s544 + $0xe0] sm:$0xff]
      %v1047 = vld [vmem:[%s544 + $0xf0] sm:$0xff]
      %v1048 = vld [vmem:[%s544 + $0xf8] sm:$0xff]
      %v1049 = vld [vmem:[%s544 + $0x108] sm:$0xff]
      %v1050 = vld [vmem:[%s544 + $0x110] sm:$0xff]
      %v1051 = vld [vmem:[%s544 + $0x120] sm:$0xff]
      %v1052 = vld [vmem:[%s544 + $0x128] sm:$0xff]
      %v1053 = vld [vmem:[%s544 + $0x138] sm:$0xff]
      %v1054 = vld [vmem:[%s544 + $0x140] sm:$0xff]
      %v1055 = vld [vmem:[%s544 + $0x150] sm:$0xff]
      %v1056 = vld [vmem:[%s544 + $0x158] sm:$0xff]
      %v1057 = vld [vmem:[%s544 + $0x168] sm:$0xff]
      %v1058 = vld [vmem:[%s544 + $0x170] sm:$0xff]
      %1091 = vrot.lane.b32.xlu0 %v1027, 12
      %v1092 = vpop.permute.xlu0 %1091
      %1093 = vrot.lane.b32.xlu0 %v1028, 12
      %v1094 = vpop.permute.xlu0 %1093
      %1095 = vrot.lane.b32.xlu0 %v1029, 12
      %v1096 = vpop.permute.xlu0 %1095
      %1097 = vrot.lane.b32.xlu0 %v1030, 12
      %v1098 = vpop.permute.xlu0 %1097
      %1099 = vrot.lane.b32.xlu0 %v1031, 12
      %v1100 = vpop.permute.xlu0 %1099
      %1101 = vrot.lane.b32.xlu0 %v1032, 12
      %v1102 = vpop.permute.xlu0 %1101
      %1103 = vrot.lane.b32.xlu0 %v1033, 12
      %v1104 = vpop.permute.xlu0 %1103
      %1105 = vrot.lane.b32.xlu0 %v1034, 12
      %v1106 = vpop.permute.xlu0 %1105
      %1107 = vrot.lane.b32.xlu0 %v1035, 12
      %v1108 = vpop.permute.xlu0 %1107
      %1109 = vrot.lane.b32.xlu0 %v1036, 12
      %v1110 = vpop.permute.xlu0 %1109
      %1111 = vrot.lane.b32.xlu0 %v1037, 12
      %v1112 = vpop.permute.xlu0 %1111
      %1113 = vrot.lane.b32.xlu0 %v1038, 12
      %v1114 = vpop.permute.xlu0 %1113
      %1115 = vrot.lane.b32.xlu0 %v1039, 12
      %v1116 = vpop.permute.xlu0 %1115
      %1117 = vrot.lane.b32.xlu0 %v1040, 12
      %v1118 = vpop.permute.xlu0 %1117
      %1119 = vrot.lane.b32.xlu0 %v1041, 12
      %v1120 = vpop.permute.xlu0 %1119
      %1121 = vrot.lane.b32.xlu0 %v1042, 12
      %v1122 = vpop.permute.xlu0 %1121
      %1123 = vrot.lane.b32.xlu0 %v1043, 12
      %v1124 = vpop.permute.xlu0 %1123
      %1125 = vrot.lane.b32.xlu0 %v1044, 12
      %v1126 = vpop.permute.xlu0 %1125
      %1127 = vrot.lane.b32.xlu0 %v1045, 12
      %v1128 = vpop.permute.xlu0 %1127
      %1129 = vrot.lane.b32.xlu0 %v1046, 12
      %v1130 = vpop.permute.xlu0 %1129
      %1131 = vrot.lane.b32.xlu0 %v1047, 12
      %v1132 = vpop.permute.xlu0 %1131
      %1133 = vrot.lane.b32.xlu0 %v1048, 12
      %v1134 = vpop.permute.xlu0 %1133
      %1135 = vrot.lane.b32.xlu0 %v1049, 12
      %v1136 = vpop.permute.xlu0 %1135
      %1137 = vrot.lane.b32.xlu0 %v1050, 12
      %v1138 = vpop.permute.xlu0 %1137
      %1139 = vrot.lane.b32.xlu0 %v1051, 12
      %v1140 = vpop.permute.xlu0 %1139
      %1141 = vrot.lane.b32.xlu0 %v1052, 12
      %v1142 = vpop.permute.xlu0 %1141
      %1143 = vrot.lane.b32.xlu0 %v1053, 12
      %v1144 = vpop.permute.xlu0 %1143
      %1145 = vrot.lane.b32.xlu0 %v1054, 12
      %v1146 = vpop.permute.xlu0 %1145
      %1147 = vrot.lane.b32.xlu0 %v1055, 12
      %v1148 = vpop.permute.xlu0 %1147
      %1149 = vrot.lane.b32.xlu0 %v1056, 12
      %v1150 = vpop.permute.xlu0 %1149
      %1151 = vrot.lane.b32.xlu0 %v1057, 12
      %v1152 = vpop.permute.xlu0 %1151
      %1153 = vrot.lane.b32.xlu0 %v1058, 12
      %v1154 = vpop.permute.xlu0 %1153
      %vm1187 = vcmask 130144
      %1188 = vst.msk [vmem:[#allocation4] sm:$0xff] %vm1187, %v1092
      %1189 = vst.msk [vmem:[#allocation4 + $0x8] sm:$0xff] %vm1187, %v1094
      %1190 = vst.msk [vmem:[#allocation4 + $0x10] sm:$0xff] %vm1187, %v1096
      %1191 = vst.msk [vmem:[#allocation4 + $0x18] sm:$0xff] %vm1187, %v1098
      %1192 = vst.msk [vmem:[#allocation4 + $0x20] sm:$0xff] %vm1187, %v1100
      %1193 = vst.msk [vmem:[#allocation4 + $0x28] sm:$0xff] %vm1187, %v1102
      %1194 = vst.msk [vmem:[#allocation4 + $0x30] sm:$0xff] %vm1187, %v1104
      %1195 = vst.msk [vmem:[#allocation4 + $0x38] sm:$0xff] %vm1187, %v1106
      %1196 = vst.msk [vmem:[#allocation4 + $0x40] sm:$0xff] %vm1187, %v1108
      %1197 = vst.msk [vmem:[#allocation4 + $0x48] sm:$0xff] %vm1187, %v1110
      %1198 = vst.msk [vmem:[#allocation4 + $0x50] sm:$0xff] %vm1187, %v1112
      %1199 = vst.msk [vmem:[#allocation4 + $0x58] sm:$0xff] %vm1187, %v1114
      %1200 = vst.msk [vmem:[#allocation4 + $0x60] sm:$0xff] %vm1187, %v1116
      %1201 = vst.msk [vmem:[#allocation4 + $0x68] sm:$0xff] %vm1187, %v1118
      %1202 = vst.msk [vmem:[#allocation4 + $0x70] sm:$0xff] %vm1187, %v1120
      %1203 = vst.msk [vmem:[#allocation4 + $0x78] sm:$0xff] %vm1187, %v1122
      %1204 = vst.msk [vmem:[#allocation4 + $0x80] sm:$0xff] %vm1187, %v1124
      %1205 = vst.msk [vmem:[#allocation4 + $0x88] sm:$0xff] %vm1187, %v1126
      %1206 = vst.msk [vmem:[#allocation4 + $0x90] sm:$0xff] %vm1187, %v1128
      %1207 = vst.msk [vmem:[#allocation4 + $0x98] sm:$0xff] %vm1187, %v1130
      %1208 = vst.msk [vmem:[#allocation4 + $0xa0] sm:$0xff] %vm1187, %v1132
      %1209 = vst.msk [vmem:[#allocation4 + $0xa8] sm:$0xff] %vm1187, %v1134
      %1210 = vst.msk [vmem:[#allocation4 + $0xb0] sm:$0xff] %vm1187, %v1136
      %1211 = vst.msk [vmem:[#allocation4 + $0xb8] sm:$0xff] %vm1187, %v1138
      %1212 = vst.msk [vmem:[#allocation4 + $0xc0] sm:$0xff] %vm1187, %v1140
      %1213 = vst.msk [vmem:[#allocation4 + $0xc8] sm:$0xff] %vm1187, %v1142
      %1214 = vst.msk [vmem:[#allocation4 + $0xd0] sm:$0xff] %vm1187, %v1144
      %1215 = vst.msk [vmem:[#allocation4 + $0xd8] sm:$0xff] %vm1187, %v1146
      %1216 = vst.msk [vmem:[#allocation4 + $0xe0] sm:$0xff] %vm1187, %v1148
      %1217 = vst.msk [vmem:[#allocation4 + $0xe8] sm:$0xff] %vm1187, %v1150
      %1218 = vst.msk [vmem:[#allocation4 + $0xf0] sm:$0xff] %vm1187, %v1152
      %1219 = vst.msk [vmem:[#allocation4 + $0xf8] sm:$0xff] %vm1187, %v1154
      %v1220 = vld [vmem:[%s544 + $0x1] sm:$0xff]
      %v1221 = vld [vmem:[%s544 + $0x9] sm:$0xff]
      %v1222 = vld [vmem:[%s544 + $0x19] sm:$0xff]
      %v1223 = vld [vmem:[%s544 + $0x21] sm:$0xff]
      %v1224 = vld [vmem:[%s544 + $0x31] sm:$0xff]
      %v1225 = vld [vmem:[%s544 + $0x39] sm:$0xff]
      %v1226 = vld [vmem:[%s544 + $0x49] sm:$0xff]
      %v1227 = vld [vmem:[%s544 + $0x51] sm:$0xff]
      %v1228 = vld [vmem:[%s544 + $0x61] sm:$0xff]
      %v1229 = vld [vmem:[%s544 + $0x69] sm:$0xff]
      %v1230 = vld [vmem:[%s544 + $0x79] sm:$0xff]
      %v1231 = vld [vmem:[%s544 + $0x81] sm:$0xff]
      %v1232 = vld [vmem:[%s544 + $0x91] sm:$0xff]
      %v1233 = vld [vmem:[%s544 + $0x99] sm:$0xff]
      %v1234 = vld [vmem:[%s544 + $0xa9] sm:$0xff]
      %v1235 = vld [vmem:[%s544 + $0xb1] sm:$0xff]
      %v1236 = vld [vmem:[%s544 + $0xc1] sm:$0xff]
      %v1237 = vld [vmem:[%s544 + $0xc9] sm:$0xff]
      %v1238 = vld [vmem:[%s544 + $0xd9] sm:$0xff]
      %v1239 = vld [vmem:[%s544 + $0xe1] sm:$0xff]
      %v1240 = vld [vmem:[%s544 + $0xf1] sm:$0xff]
      %v1241 = vld [vmem:[%s544 + $0xf9] sm:$0xff]
      %v1242 = vld [vmem:[%s544 + $0x109] sm:$0xff]
      %v1243 = vld [vmem:[%s544 + $0x111] sm:$0xff]
      %v1244 = vld [vmem:[%s544 + $0x121] sm:$0xff]
      %v1245 = vld [vmem:[%s544 + $0x129] sm:$0xff]
      %v1246 = vld [vmem:[%s544 + $0x139] sm:$0xff]
      %v1247 = vld [vmem:[%s544 + $0x141] sm:$0xff]
      %v1248 = vld [vmem:[%s544 + $0x151] sm:$0xff]
      %v1249 = vld [vmem:[%s544 + $0x159] sm:$0xff]
      %v1250 = vld [vmem:[%s544 + $0x169] sm:$0xff]
      %v1251 = vld [vmem:[%s544 + $0x171] sm:$0xff]
      %1284 = vrot.lane.b32.xlu0 %v1220, 16
      %v1285 = vpop.permute.xlu0 %1284
      %1286 = vrot.lane.b32.xlu0 %v1221, 16
      %v1287 = vpop.permute.xlu0 %1286
      %1288 = vrot.lane.b32.xlu0 %v1222, 16
      %v1289 = vpop.permute.xlu0 %1288
      %1290 = vrot.lane.b32.xlu0 %v1223, 16
      %v1291 = vpop.permute.xlu0 %1290
      %1292 = vrot.lane.b32.xlu0 %v1224, 16
      %v1293 = vpop.permute.xlu0 %1292
      %1294 = vrot.lane.b32.xlu0 %v1225, 16
      %v1295 = vpop.permute.xlu0 %1294
      %1296 = vrot.lane.b32.xlu0 %v1226, 16
      %v1297 = vpop.permute.xlu0 %1296
      %1298 = vrot.lane.b32.xlu0 %v1227, 16
      %v1299 = vpop.permute.xlu0 %1298
      %1300 = vrot.lane.b32.xlu0 %v1228, 16
      %v1301 = vpop.permute.xlu0 %1300
      %1302 = vrot.lane.b32.xlu0 %v1229, 16
      %v1303 = vpop.permute.xlu0 %1302
      %1304 = vrot.lane.b32.xlu0 %v1230, 16
      %v1305 = vpop.permute.xlu0 %1304
      %1306 = vrot.lane.b32.xlu0 %v1231, 16
      %v1307 = vpop.permute.xlu0 %1306
      %1308 = vrot.lane.b32.xlu0 %v1232, 16
      %v1309 = vpop.permute.xlu0 %1308
      %1310 = vrot.lane.b32.xlu0 %v1233, 16
      %v1311 = vpop.permute.xlu0 %1310
      %1312 = vrot.lane.b32.xlu0 %v1234, 16
      %v1313 = vpop.permute.xlu0 %1312
      %1314 = vrot.lane.b32.xlu0 %v1235, 16
      %v1315 = vpop.permute.xlu0 %1314
      %1316 = vrot.lane.b32.xlu0 %v1236, 16
      %v1317 = vpop.permute.xlu0 %1316
      %1318 = vrot.lane.b32.xlu0 %v1237, 16
      %v1319 = vpop.permute.xlu0 %1318
      %1320 = vrot.lane.b32.xlu0 %v1238, 16
      %v1321 = vpop.permute.xlu0 %1320
      %1322 = vrot.lane.b32.xlu0 %v1239, 16
      %v1323 = vpop.permute.xlu0 %1322
      %1324 = vrot.lane.b32.xlu0 %v1240, 16
      %v1325 = vpop.permute.xlu0 %1324
      %1326 = vrot.lane.b32.xlu0 %v1241, 16
      %v1327 = vpop.permute.xlu0 %1326
      %1328 = vrot.lane.b32.xlu0 %v1242, 16
      %v1329 = vpop.permute.xlu0 %1328
      %1330 = vrot.lane.b32.xlu0 %v1243, 16
      %v1331 = vpop.permute.xlu0 %1330
      %1332 = vrot.lane.b32.xlu0 %v1244, 16
      %v1333 = vpop.permute.xlu0 %1332
      %1334 = vrot.lane.b32.xlu0 %v1245, 16
      %v1335 = vpop.permute.xlu0 %1334
      %1336 = vrot.lane.b32.xlu0 %v1246, 16
      %v1337 = vpop.permute.xlu0 %1336
      %1338 = vrot.lane.b32.xlu0 %v1247, 16
      %v1339 = vpop.permute.xlu0 %1338
      %1340 = vrot.lane.b32.xlu0 %v1248, 16
      %v1341 = vpop.permute.xlu0 %1340
      %1342 = vrot.lane.b32.xlu0 %v1249, 16
      %v1343 = vpop.permute.xlu0 %1342
      %1344 = vrot.lane.b32.xlu0 %v1250, 16
      %v1345 = vpop.permute.xlu0 %1344
      %1346 = vrot.lane.b32.xlu0 %v1251, 16
      %v1347 = vpop.permute.xlu0 %1346
      %vm1380 = vcmask 162944
      %1381 = vst.msk [vmem:[#allocation4] sm:$0xff] %vm1380, %v1285
      %1382 = vst.msk [vmem:[#allocation4 + $0x8] sm:$0xff] %vm1380, %v1287
      %1383 = vst.msk [vmem:[#allocation4 + $0x10] sm:$0xff] %vm1380, %v1289
      %1384 = vst.msk [vmem:[#allocation4 + $0x18] sm:$0xff] %vm1380, %v1291
      %1385 = vst.msk [vmem:[#allocation4 + $0x20] sm:$0xff] %vm1380, %v1293
      %1386 = vst.msk [vmem:[#allocation4 + $0x28] sm:$0xff] %vm1380, %v1295
      %1387 = vst.msk [vmem:[#allocation4 + $0x30] sm:$0xff] %vm1380, %v1297
      %1388 = vst.msk [vmem:[#allocation4 + $0x38] sm:$0xff] %vm1380, %v1299
      %1389 = vst.msk [vmem:[#allocation4 + $0x40] sm:$0xff] %vm1380, %v1301
      %1390 = vst.msk [vmem:[#allocation4 + $0x48] sm:$0xff] %vm1380, %v1303
      %1391 = vst.msk [vmem:[#allocation4 + $0x50] sm:$0xff] %vm1380, %v1305
      %1392 = vst.msk [vmem:[#allocation4 + $0x58] sm:$0xff] %vm1380, %v1307
      %1393 = vst.msk [vmem:[#allocation4 + $0x60] sm:$0xff] %vm1380, %v1309
      %1394 = vst.msk [vmem:[#allocation4 + $0x68] sm:$0xff] %vm1380, %v1311
      %1395 = vst.msk [vmem:[#allocation4 + $0x70] sm:$0xff] %vm1380, %v1313
      %1396 = vst.msk [vmem:[#allocation4 + $0x78] sm:$0xff] %vm1380, %v1315
      %1397 = vst.msk [vmem:[#allocation4 + $0x80] sm:$0xff] %vm1380, %v1317
      %1398 = vst.msk [vmem:[#allocation4 + $0x88] sm:$0xff] %vm1380, %v1319
      %1399 = vst.msk [vmem:[#allocation4 + $0x90] sm:$0xff] %vm1380, %v1321
      %1400 = vst.msk [vmem:[#allocation4 + $0x98] sm:$0xff] %vm1380, %v1323
      %1401 = vst.msk [vmem:[#allocation4 + $0xa0] sm:$0xff] %vm1380, %v1325
      %1402 = vst.msk [vmem:[#allocation4 + $0xa8] sm:$0xff] %vm1380, %v1327
      %1403 = vst.msk [vmem:[#allocation4 + $0xb0] sm:$0xff] %vm1380, %v1329
      %1404 = vst.msk [vmem:[#allocation4 + $0xb8] sm:$0xff] %vm1380, %v1331
      %1405 = vst.msk [vmem:[#allocation4 + $0xc0] sm:$0xff] %vm1380, %v1333
      %1406 = vst.msk [vmem:[#allocation4 + $0xc8] sm:$0xff] %vm1380, %v1335
      %1407 = vst.msk [vmem:[#allocation4 + $0xd0] sm:$0xff] %vm1380, %v1337
      %1408 = vst.msk [vmem:[#allocation4 + $0xd8] sm:$0xff] %vm1380, %v1339
      %1409 = vst.msk [vmem:[#allocation4 + $0xe0] sm:$0xff] %vm1380, %v1341
      %1410 = vst.msk [vmem:[#allocation4 + $0xe8] sm:$0xff] %vm1380, %v1343
      %1411 = vst.msk [vmem:[#allocation4 + $0xf0] sm:$0xff] %vm1380, %v1345
      %1412 = vst.msk [vmem:[#allocation4 + $0xf8] sm:$0xff] %vm1380, %v1347
      %v1413 = vld [vmem:[%s544 + $0x2] sm:$0xff]
      %v1414 = vld [vmem:[%s544 + $0xa] sm:$0xff]
      %v1415 = vld [vmem:[%s544 + $0x1a] sm:$0xff]
      %v1416 = vld [vmem:[%s544 + $0x22] sm:$0xff]
      %v1417 = vld [vmem:[%s544 + $0x32] sm:$0xff]
      %v1418 = vld [vmem:[%s544 + $0x3a] sm:$0xff]
      %v1419 = vld [vmem:[%s544 + $0x4a] sm:$0xff]
      %v1420 = vld [vmem:[%s544 + $0x52] sm:$0xff]
      %v1421 = vld [vmem:[%s544 + $0x62] sm:$0xff]
      %v1422 = vld [vmem:[%s544 + $0x6a] sm:$0xff]
      %v1423 = vld [vmem:[%s544 + $0x7a] sm:$0xff]
      %v1424 = vld [vmem:[%s544 + $0x82] sm:$0xff]
      %v1425 = vld [vmem:[%s544 + $0x92] sm:$0xff]
      %v1426 = vld [vmem:[%s544 + $0x9a] sm:$0xff]
      %v1427 = vld [vmem:[%s544 + $0xaa] sm:$0xff]
      %v1428 = vld [vmem:[%s544 + $0xb2] sm:$0xff]
      %v1429 = vld [vmem:[%s544 + $0xc2] sm:$0xff]
      %v1430 = vld [vmem:[%s544 + $0xca] sm:$0xff]
      %v1431 = vld [vmem:[%s544 + $0xda] sm:$0xff]
      %v1432 = vld [vmem:[%s544 + $0xe2] sm:$0xff]
      %v1433 = vld [vmem:[%s544 + $0xf2] sm:$0xff]
      %v1434 = vld [vmem:[%s544 + $0xfa] sm:$0xff]
      %v1435 = vld [vmem:[%s544 + $0x10a] sm:$0xff]
      %v1436 = vld [vmem:[%s544 + $0x112] sm:$0xff]
      %v1437 = vld [vmem:[%s544 + $0x122] sm:$0xff]
      %v1438 = vld [vmem:[%s544 + $0x12a] sm:$0xff]
      %v1439 = vld [vmem:[%s544 + $0x13a] sm:$0xff]
      %v1440 = vld [vmem:[%s544 + $0x142] sm:$0xff]
      %v1441 = vld [vmem:[%s544 + $0x152] sm:$0xff]
      %v1442 = vld [vmem:[%s544 + $0x15a] sm:$0xff]
      %v1443 = vld [vmem:[%s544 + $0x16a] sm:$0xff]
      %v1444 = vld [vmem:[%s544 + $0x172] sm:$0xff]
      %1477 = vrot.lane.b32.xlu0 %v1413, 20
      %v1478 = vpop.permute.xlu0 %1477
      %1479 = vrot.lane.b32.xlu0 %v1414, 20
      %v1480 = vpop.permute.xlu0 %1479
      %1481 = vrot.lane.b32.xlu0 %v1415, 20
      %v1482 = vpop.permute.xlu0 %1481
      %1483 = vrot.lane.b32.xlu0 %v1416, 20
      %v1484 = vpop.permute.xlu0 %1483
      %1485 = vrot.lane.b32.xlu0 %v1417, 20
      %v1486 = vpop.permute.xlu0 %1485
      %1487 = vrot.lane.b32.xlu0 %v1418, 20
      %v1488 = vpop.permute.xlu0 %1487
      %1489 = vrot.lane.b32.xlu0 %v1419, 20
      %v1490 = vpop.permute.xlu0 %1489
      %1491 = vrot.lane.b32.xlu0 %v1420, 20
      %v1492 = vpop.permute.xlu0 %1491
      %1493 = vrot.lane.b32.xlu0 %v1421, 20
      %v1494 = vpop.permute.xlu0 %1493
      %1495 = vrot.lane.b32.xlu0 %v1422, 20
      %v1496 = vpop.permute.xlu0 %1495
      %1497 = vrot.lane.b32.xlu0 %v1423, 20
      %v1498 = vpop.permute.xlu0 %1497
      %1499 = vrot.lane.b32.xlu0 %v1424, 20
      %v1500 = vpop.permute.xlu0 %1499
      %1501 = vrot.lane.b32.xlu0 %v1425, 20
      %v1502 = vpop.permute.xlu0 %1501
      %1503 = vrot.lane.b32.xlu0 %v1426, 20
      %v1504 = vpop.permute.xlu0 %1503
      %1505 = vrot.lane.b32.xlu0 %v1427, 20
      %v1506 = vpop.permute.xlu0 %1505
      %1507 = vrot.lane.b32.xlu0 %v1428, 20
      %v1508 = vpop.permute.xlu0 %1507
      %1509 = vrot.lane.b32.xlu0 %v1429, 20
      %v1510 = vpop.permute.xlu0 %1509
      %1511 = vrot.lane.b32.xlu0 %v1430, 20
      %v1512 = vpop.permute.xlu0 %1511
      %1513 = vrot.lane.b32.xlu0 %v1431, 20
      %v1514 = vpop.permute.xlu0 %1513
      %1515 = vrot.lane.b32.xlu0 %v1432, 20
      %v1516 = vpop.permute.xlu0 %1515
      %1517 = vrot.lane.b32.xlu0 %v1433, 20
      %v1518 = vpop.permute.xlu0 %1517
      %1519 = vrot.lane.b32.xlu0 %v1434, 20
      %v1520 = vpop.permute.xlu0 %1519
      %1521 = vrot.lane.b32.xlu0 %v1435, 20
      %v1522 = vpop.permute.xlu0 %1521
      %1523 = vrot.lane.b32.xlu0 %v1436, 20
      %v1524 = vpop.permute.xlu0 %1523
      %1525 = vrot.lane.b32.xlu0 %v1437, 20
      %v1526 = vpop.permute.xlu0 %1525
      %1527 = vrot.lane.b32.xlu0 %v1438, 20
      %v1528 = vpop.permute.xlu0 %1527
      %1529 = vrot.lane.b32.xlu0 %v1439, 20
      %v1530 = vpop.permute.xlu0 %1529
      %1531 = vrot.lane.b32.xlu0 %v1440, 20
      %v1532 = vpop.permute.xlu0 %1531
      %1533 = vrot.lane.b32.xlu0 %v1441, 20
      %v1534 = vpop.permute.xlu0 %1533
      %1535 = vrot.lane.b32.xlu0 %v1442, 20
      %v1536 = vpop.permute.xlu0 %1535
      %1537 = vrot.lane.b32.xlu0 %v1443, 20
      %v1538 = vpop.permute.xlu0 %1537
      %1539 = vrot.lane.b32.xlu0 %v1444, 20
      %v1540 = vpop.permute.xlu0 %1539
      %vm1573 = vcmask 195744
      %1574 = vst.msk [vmem:[#allocation4] sm:$0xff] %vm1573, %v1478
      %1575 = vst.msk [vmem:[#allocation4 + $0x8] sm:$0xff] %vm1573, %v1480
      %1576 = vst.msk [vmem:[#allocation4 + $0x10] sm:$0xff] %vm1573, %v1482
      %1577 = vst.msk [vmem:[#allocation4 + $0x18] sm:$0xff] %vm1573, %v1484
      %1578 = vst.msk [vmem:[#allocation4 + $0x20] sm:$0xff] %vm1573, %v1486
      %1579 = vst.msk [vmem:[#allocation4 + $0x28] sm:$0xff] %vm1573, %v1488
      %1580 = vst.msk [vmem:[#allocation4 + $0x30] sm:$0xff] %vm1573, %v1490
      %1581 = vst.msk [vmem:[#allocation4 + $0x38] sm:$0xff] %vm1573, %v1492
      %1582 = vst.msk [vmem:[#allocation4 + $0x40] sm:$0xff] %vm1573, %v1494
      %1583 = vst.msk [vmem:[#allocation4 + $0x48] sm:$0xff] %vm1573, %v1496
      %1584 = vst.msk [vmem:[#allocation4 + $0x50] sm:$0xff] %vm1573, %v1498
      %1585 = vst.msk [vmem:[#allocation4 + $0x58] sm:$0xff] %vm1573, %v1500
      %1586 = vst.msk [vmem:[#allocation4 + $0x60] sm:$0xff] %vm1573, %v1502
      %1587 = vst.msk [vmem:[#allocation4 + $0x68] sm:$0xff] %vm1573, %v1504
      %1588 = vst.msk [vmem:[#allocation4 + $0x70] sm:$0xff] %vm1573, %v1506
      %1589 = vst.msk [vmem:[#allocation4 + $0x78] sm:$0xff] %vm1573, %v1508
      %1590 = vst.msk [vmem:[#allocation4 + $0x80] sm:$0xff] %vm1573, %v1510
      %1591 = vst.msk [vmem:[#allocation4 + $0x88] sm:$0xff] %vm1573, %v1512
      %1592 = vst.msk [vmem:[#allocation4 + $0x90] sm:$0xff] %vm1573, %v1514
      %1593 = vst.msk [vmem:[#allocation4 + $0x98] sm:$0xff] %vm1573, %v1516
      %1594 = vst.msk [vmem:[#allocation4 + $0xa0] sm:$0xff] %vm1573, %v1518
      %1595 = vst.msk [vmem:[#allocation4 + $0xa8] sm:$0xff] %vm1573, %v1520
      %1596 = vst.msk [vmem:[#allocation4 + $0xb0] sm:$0xff] %vm1573, %v1522
      %1597 = vst.msk [vmem:[#allocation4 + $0xb8] sm:$0xff] %vm1573, %v1524
      %1598 = vst.msk [vmem:[#allocation4 + $0xc0] sm:$0xff] %vm1573, %v1526
      %1599 = vst.msk [vmem:[#allocation4 + $0xc8] sm:$0xff] %vm1573, %v1528
      %1600 = vst.msk [vmem:[#allocation4 + $0xd0] sm:$0xff] %vm1573, %v1530
      %1601 = vst.msk [vmem:[#allocation4 + $0xd8] sm:$0xff] %vm1573, %v1532
      %1602 = vst.msk [vmem:[#allocation4 + $0xe0] sm:$0xff] %vm1573, %v1534
      %1603 = vst.msk [vmem:[#allocation4 + $0xe8] sm:$0xff] %vm1573, %v1536
      %1604 = vst.msk [vmem:[#allocation4 + $0xf0] sm:$0xff] %vm1573, %v1538
      %1605 = vst.msk [vmem:[#allocation4 + $0xf8] sm:$0xff] %vm1573, %v1540
      %s1606 = scalar_lea.vmem [#allocation2], 48
      %v1607 = vld [vmem:[%s1606] sm:$0xff]
      %v1608 = vld [vmem:[%s1606 + $0x8] sm:$0xff]
      %v1609 = vld [vmem:[%s1606 + $0x18] sm:$0xff]
      %v1610 = vld [vmem:[%s1606 + $0x20] sm:$0xff]
      %v1611 = vld [vmem:[%s1606 + $0x30] sm:$0xff]
      %v1612 = vld [vmem:[%s1606 + $0x38] sm:$0xff]
      %v1613 = vld [vmem:[%s1606 + $0x48] sm:$0xff]
      %v1614 = vld [vmem:[%s1606 + $0x50] sm:$0xff]
      %v1615 = vld [vmem:[%s1606 + $0x60] sm:$0xff]
      %v1616 = vld [vmem:[%s1606 + $0x68] sm:$0xff]
      %v1617 = vld [vmem:[%s1606 + $0x78] sm:$0xff]
      %v1618 = vld [vmem:[%s1606 + $0x80] sm:$0xff]
      %v1619 = vld [vmem:[%s1606 + $0x90] sm:$0xff]
      %v1620 = vld [vmem:[%s1606 + $0x98] sm:$0xff]
      %v1621 = vld [vmem:[%s1606 + $0xa8] sm:$0xff]
      %v1622 = vld [vmem:[%s1606 + $0xb0] sm:$0xff]
      %v1623 = vld [vmem:[%s1606 + $0xc0] sm:$0xff]
      %v1624 = vld [vmem:[%s1606 + $0xc8] sm:$0xff]
      %v1625 = vld [vmem:[%s1606 + $0xd8] sm:$0xff]
      %v1626 = vld [vmem:[%s1606 + $0xe0] sm:$0xff]
      %v1627 = vld [vmem:[%s1606 + $0xf0] sm:$0xff]
      %v1628 = vld [vmem:[%s1606 + $0xf8] sm:$0xff]
      %v1629 = vld [vmem:[%s1606 + $0x108] sm:$0xff]
      %v1630 = vld [vmem:[%s1606 + $0x110] sm:$0xff]
      %v1631 = vld [vmem:[%s1606 + $0x120] sm:$0xff]
      %v1632 = vld [vmem:[%s1606 + $0x128] sm:$0xff]
      %v1633 = vld [vmem:[%s1606 + $0x138] sm:$0xff]
      %v1634 = vld [vmem:[%s1606 + $0x140] sm:$0xff]
      %v1635 = vld [vmem:[%s1606 + $0x150] sm:$0xff]
      %v1636 = vld [vmem:[%s1606 + $0x158] sm:$0xff]
      %v1637 = vld [vmem:[%s1606 + $0x168] sm:$0xff]
      %v1638 = vld [vmem:[%s1606 + $0x170] sm:$0xff]
      %1671 = vrot.lane.b32.xlu0 %v1607, 24
      %v1672 = vpop.permute.xlu0 %1671
      %1673 = vrot.lane.b32.xlu0 %v1608, 24
      %v1674 = vpop.permute.xlu0 %1673
      %1675 = vrot.lane.b32.xlu0 %v1609, 24
      %v1676 = vpop.permute.xlu0 %1675
      %1677 = vrot.lane.b32.xlu0 %v1610, 24
      %v1678 = vpop.permute.xlu0 %1677
      %1679 = vrot.lane.b32.xlu0 %v1611, 24
      %v1680 = vpop.permute.xlu0 %1679
      %1681 = vrot.lane.b32.xlu0 %v1612, 24
      %v1682 = vpop.permute.xlu0 %1681
      %1683 = vrot.lane.b32.xlu0 %v1613, 24
      %v1684 = vpop.permute.xlu0 %1683
      %1685 = vrot.lane.b32.xlu0 %v1614, 24
      %v1686 = vpop.permute.xlu0 %1685
      %1687 = vrot.lane.b32.xlu0 %v1615, 24
      %v1688 = vpop.permute.xlu0 %1687
      %1689 = vrot.lane.b32.xlu0 %v1616, 24
      %v1690 = vpop.permute.xlu0 %1689
      %1691 = vrot.lane.b32.xlu0 %v1617, 24
      %v1692 = vpop.permute.xlu0 %1691
      %1693 = vrot.lane.b32.xlu0 %v1618, 24
      %v1694 = vpop.permute.xlu0 %1693
      %1695 = vrot.lane.b32.xlu0 %v1619, 24
      %v1696 = vpop.permute.xlu0 %1695
      %1697 = vrot.lane.b32.xlu0 %v1620, 24
      %v1698 = vpop.permute.xlu0 %1697
      %1699 = vrot.lane.b32.xlu0 %v1621, 24
      %v1700 = vpop.permute.xlu0 %1699
      %1701 = vrot.lane.b32.xlu0 %v1622, 24
      %v1702 = vpop.permute.xlu0 %1701
      %1703 = vrot.lane.b32.xlu0 %v1623, 24
      %v1704 = vpop.permute.xlu0 %1703
      %1705 = vrot.lane.b32.xlu0 %v1624, 24
      %v1706 = vpop.permute.xlu0 %1705
      %1707 = vrot.lane.b32.xlu0 %v1625, 24
      %v1708 = vpop.permute.xlu0 %1707
      %1709 = vrot.lane.b32.xlu0 %v1626, 24
      %v1710 = vpop.permute.xlu0 %1709
      %1711 = vrot.lane.b32.xlu0 %v1627, 24
      %v1712 = vpop.permute.xlu0 %1711
      %1713 = vrot.lane.b32.xlu0 %v1628, 24
      %v1714 = vpop.permute.xlu0 %1713
      %1715 = vrot.lane.b32.xlu0 %v1629, 24
      %v1716 = vpop.permute.xlu0 %1715
      %1717 = vrot.lane.b32.xlu0 %v1630, 24
      %v1718 = vpop.permute.xlu0 %1717
      %1719 = vrot.lane.b32.xlu0 %v1631, 24
      %v1720 = vpop.permute.xlu0 %1719
      %1721 = vrot.lane.b32.xlu0 %v1632, 24
      %v1722 = vpop.permute.xlu0 %1721
      %1723 = vrot.lane.b32.xlu0 %v1633, 24
      %v1724 = vpop.permute.xlu0 %1723
      %1725 = vrot.lane.b32.xlu0 %v1634, 24
      %v1726 = vpop.permute.xlu0 %1725
      %1727 = vrot.lane.b32.xlu0 %v1635, 24
      %v1728 = vpop.permute.xlu0 %1727
      %1729 = vrot.lane.b32.xlu0 %v1636, 24
      %v1730 = vpop.permute.xlu0 %1729
      %1731 = vrot.lane.b32.xlu0 %v1637, 24
      %v1732 = vpop.permute.xlu0 %1731
      %1733 = vrot.lane.b32.xlu0 %v1638, 24
      %v1734 = vpop.permute.xlu0 %1733
      %vm1767 = vcmask 228544
      %1768 = vst.msk [vmem:[#allocation4] sm:$0xff] %vm1767, %v1672
      %1769 = vst.msk [vmem:[#allocation4 + $0x8] sm:$0xff] %vm1767, %v1674
      %1770 = vst.msk [vmem:[#allocation4 + $0x10] sm:$0xff] %vm1767, %v1676
      %1771 = vst.msk [vmem:[#allocation4 + $0x18] sm:$0xff] %vm1767, %v1678
      %1772 = vst.msk [vmem:[#allocation4 + $0x20] sm:$0xff] %vm1767, %v1680
      %1773 = vst.msk [vmem:[#allocation4 + $0x28] sm:$0xff] %vm1767, %v1682
      %1774 = vst.msk [vmem:[#allocation4 + $0x30] sm:$0xff] %vm1767, %v1684
      %1775 = vst.msk [vmem:[#allocation4 + $0x38] sm:$0xff] %vm1767, %v1686
      %1776 = vst.msk [vmem:[#allocation4 + $0x40] sm:$0xff] %vm1767, %v1688
      %1777 = vst.msk [vmem:[#allocation4 + $0x48] sm:$0xff] %vm1767, %v1690
      %1778 = vst.msk [vmem:[#allocation4 + $0x50] sm:$0xff] %vm1767, %v1692
      %1779 = vst.msk [vmem:[#allocation4 + $0x58] sm:$0xff] %vm1767, %v1694
      %1780 = vst.msk [vmem:[#allocation4 + $0x60] sm:$0xff] %vm1767, %v1696
      %1781 = vst.msk [vmem:[#allocation4 + $0x68] sm:$0xff] %vm1767, %v1698
      %1782 = vst.msk [vmem:[#allocation4 + $0x70] sm:$0xff] %vm1767, %v1700
      %1783 = vst.msk [vmem:[#allocation4 + $0x78] sm:$0xff] %vm1767, %v1702
      %1784 = vst.msk [vmem:[#allocation4 + $0x80] sm:$0xff] %vm1767, %v1704
      %1785 = vst.msk [vmem:[#allocation4 + $0x88] sm:$0xff] %vm1767, %v1706
      %1786 = vst.msk [vmem:[#allocation4 + $0x90] sm:$0xff] %vm1767, %v1708
      %1787 = vst.msk [vmem:[#allocation4 + $0x98] sm:$0xff] %vm1767, %v1710
      %1788 = vst.msk [vmem:[#allocation4 + $0xa0] sm:$0xff] %vm1767, %v1712
      %1789 = vst.msk [vmem:[#allocation4 + $0xa8] sm:$0xff] %vm1767, %v1714
      %1790 = vst.msk [vmem:[#allocation4 + $0xb0] sm:$0xff] %vm1767, %v1716
      %1791 = vst.msk [vmem:[#allocation4 + $0xb8] sm:$0xff] %vm1767, %v1718
      %1792 = vst.msk [vmem:[#allocation4 + $0xc0] sm:$0xff] %vm1767, %v1720
      %1793 = vst.msk [vmem:[#allocation4 + $0xc8] sm:$0xff] %vm1767, %v1722
      %1794 = vst.msk [vmem:[#allocation4 + $0xd0] sm:$0xff] %vm1767, %v1724
      %1795 = vst.msk [vmem:[#allocation4 + $0xd8] sm:$0xff] %vm1767, %v1726
      %1796 = vst.msk [vmem:[#allocation4 + $0xe0] sm:$0xff] %vm1767, %v1728
      %1797 = vst.msk [vmem:[#allocation4 + $0xe8] sm:$0xff] %vm1767, %v1730
      %1798 = vst.msk [vmem:[#allocation4 + $0xf0] sm:$0xff] %vm1767, %v1732
      %1799 = vst.msk [vmem:[#allocation4 + $0xf8] sm:$0xff] %vm1767, %v1734
      %v1800 = vld [vmem:[%s1606 + $0x1] sm:$0xff]
      %v1801 = vld [vmem:[%s1606 + $0x9] sm:$0xff]
      %v1802 = vld [vmem:[%s1606 + $0x19] sm:$0xff]
      %v1803 = vld [vmem:[%s1606 + $0x21] sm:$0xff]
      %v1804 = vld [vmem:[%s1606 + $0x31] sm:$0xff]
      %v1805 = vld [vmem:[%s1606 + $0x39] sm:$0xff]
      %v1806 = vld [vmem:[%s1606 + $0x49] sm:$0xff]
      %v1807 = vld [vmem:[%s1606 + $0x51] sm:$0xff]
      %v1808 = vld [vmem:[%s1606 + $0x61] sm:$0xff]
      %v1809 = vld [vmem:[%s1606 + $0x69] sm:$0xff]
      %v1810 = vld [vmem:[%s1606 + $0x79] sm:$0xff]
      %v1811 = vld [vmem:[%s1606 + $0x81] sm:$0xff]
      %v1812 = vld [vmem:[%s1606 + $0x91] sm:$0xff]
      %v1813 = vld [vmem:[%s1606 + $0x99] sm:$0xff]
      %v1814 = vld [vmem:[%s1606 + $0xa9] sm:$0xff]
      %v1815 = vld [vmem:[%s1606 + $0xb1] sm:$0xff]
      %v1816 = vld [vmem:[%s1606 + $0xc1] sm:$0xff]
      %v1817 = vld [vmem:[%s1606 + $0xc9] sm:$0xff]
      %v1818 = vld [vmem:[%s1606 + $0xd9] sm:$0xff]
      %v1819 = vld [vmem:[%s1606 + $0xe1] sm:$0xff]
      %v1820 = vld [vmem:[%s1606 + $0xf1] sm:$0xff]
      %v1821 = vld [vmem:[%s1606 + $0xf9] sm:$0xff]
      %v1822 = vld [vmem:[%s1606 + $0x109] sm:$0xff]
      %v1823 = vld [vmem:[%s1606 + $0x111] sm:$0xff]
      %v1824 = vld [vmem:[%s1606 + $0x121] sm:$0xff]
      %v1825 = vld [vmem:[%s1606 + $0x129] sm:$0xff]
      %v1826 = vld [vmem:[%s1606 + $0x139] sm:$0xff]
      %v1827 = vld [vmem:[%s1606 + $0x141] sm:$0xff]
      %v1828 = vld [vmem:[%s1606 + $0x151] sm:$0xff]
      %v1829 = vld [vmem:[%s1606 + $0x159] sm:$0xff]
      %v1830 = vld [vmem:[%s1606 + $0x169] sm:$0xff]
      %v1831 = vld [vmem:[%s1606 + $0x171] sm:$0xff]
      %1864 = vrot.lane.b32.xlu0 %v1800, 28
      %v1865 = vpop.permute.xlu0 %1864
      %1866 = vrot.lane.b32.xlu0 %v1801, 28
      %v1867 = vpop.permute.xlu0 %1866
      %1868 = vrot.lane.b32.xlu0 %v1802, 28
      %v1869 = vpop.permute.xlu0 %1868
      %1870 = vrot.lane.b32.xlu0 %v1803, 28
      %v1871 = vpop.permute.xlu0 %1870
      %1872 = vrot.lane.b32.xlu0 %v1804, 28
      %v1873 = vpop.permute.xlu0 %1872
      %1874 = vrot.lane.b32.xlu0 %v1805, 28
      %v1875 = vpop.permute.xlu0 %1874
      %1876 = vrot.lane.b32.xlu0 %v1806, 28
      %v1877 = vpop.permute.xlu0 %1876
      %1878 = vrot.lane.b32.xlu0 %v1807, 28
      %v1879 = vpop.permute.xlu0 %1878
      %1880 = vrot.lane.b32.xlu0 %v1808, 28
      %v1881 = vpop.permute.xlu0 %1880
      %1882 = vrot.lane.b32.xlu0 %v1809, 28
      %v1883 = vpop.permute.xlu0 %1882
      %1884 = vrot.lane.b32.xlu0 %v1810, 28
      %v1885 = vpop.permute.xlu0 %1884
      %1886 = vrot.lane.b32.xlu0 %v1811, 28
      %v1887 = vpop.permute.xlu0 %1886
      %1888 = vrot.lane.b32.xlu0 %v1812, 28
      %v1889 = vpop.permute.xlu0 %1888
      %1890 = vrot.lane.b32.xlu0 %v1813, 28
      %v1891 = vpop.permute.xlu0 %1890
      %1892 = vrot.lane.b32.xlu0 %v1814, 28
      %v1893 = vpop.permute.xlu0 %1892
      %1894 = vrot.lane.b32.xlu0 %v1815, 28
      %v1895 = vpop.permute.xlu0 %1894
      %1896 = vrot.lane.b32.xlu0 %v1816, 28
      %v1897 = vpop.permute.xlu0 %1896
      %1898 = vrot.lane.b32.xlu0 %v1817, 28
      %v1899 = vpop.permute.xlu0 %1898
      %1900 = vrot.lane.b32.xlu0 %v1818, 28
      %v1901 = vpop.permute.xlu0 %1900
      %1902 = vrot.lane.b32.xlu0 %v1819, 28
      %v1903 = vpop.permute.xlu0 %1902
      %1904 = vrot.lane.b32.xlu0 %v1820, 28
      %v1905 = vpop.permute.xlu0 %1904
      %1906 = vrot.lane.b32.xlu0 %v1821, 28
      %v1907 = vpop.permute.xlu0 %1906
      %1908 = vrot.lane.b32.xlu0 %v1822, 28
      %v1909 = vpop.permute.xlu0 %1908
      %1910 = vrot.lane.b32.xlu0 %v1823, 28
      %v1911 = vpop.permute.xlu0 %1910
      %1912 = vrot.lane.b32.xlu0 %v1824, 28
      %v1913 = vpop.permute.xlu0 %1912
      %1914 = vrot.lane.b32.xlu0 %v1825, 28
      %v1915 = vpop.permute.xlu0 %1914
      %1916 = vrot.lane.b32.xlu0 %v1826, 28
      %v1917 = vpop.permute.xlu0 %1916
      %1918 = vrot.lane.b32.xlu0 %v1827, 28
      %v1919 = vpop.permute.xlu0 %1918
      %1920 = vrot.lane.b32.xlu0 %v1828, 28
      %v1921 = vpop.permute.xlu0 %1920
      %1922 = vrot.lane.b32.xlu0 %v1829, 28
      %v1923 = vpop.permute.xlu0 %1922
      %1924 = vrot.lane.b32.xlu0 %v1830, 28
      %v1925 = vpop.permute.xlu0 %1924
      %1926 = vrot.lane.b32.xlu0 %v1831, 28
      %v1927 = vpop.permute.xlu0 %1926
      %vm1960 = vcmask 261344
      %1961 = vst.msk [vmem:[#allocation4] sm:$0xff] %vm1960, %v1865
      %1962 = vst.msk [vmem:[#allocation4 + $0x8] sm:$0xff] %vm1960, %v1867
      %1963 = vst.msk [vmem:[#allocation4 + $0x10] sm:$0xff] %vm1960, %v1869
      %1964 = vst.msk [vmem:[#allocation4 + $0x18] sm:$0xff] %vm1960, %v1871
      %1965 = vst.msk [vmem:[#allocation4 + $0x20] sm:$0xff] %vm1960, %v1873
      %1966 = vst.msk [vmem:[#allocation4 + $0x28] sm:$0xff] %vm1960, %v1875
      %1967 = vst.msk [vmem:[#allocation4 + $0x30] sm:$0xff] %vm1960, %v1877
      %1968 = vst.msk [vmem:[#allocation4 + $0x38] sm:$0xff] %vm1960, %v1879
      %1969 = vst.msk [vmem:[#allocation4 + $0x40] sm:$0xff] %vm1960, %v1881
      %1970 = vst.msk [vmem:[#allocation4 + $0x48] sm:$0xff] %vm1960, %v1883
      %1971 = vst.msk [vmem:[#allocation4 + $0x50] sm:$0xff] %vm1960, %v1885
      %1972 = vst.msk [vmem:[#allocation4 + $0x58] sm:$0xff] %vm1960, %v1887
      %1973 = vst.msk [vmem:[#allocation4 + $0x60] sm:$0xff] %vm1960, %v1889
      %1974 = vst.msk [vmem:[#allocation4 + $0x68] sm:$0xff] %vm1960, %v1891
      %1975 = vst.msk [vmem:[#allocation4 + $0x70] sm:$0xff] %vm1960, %v1893
      %1976 = vst.msk [vmem:[#allocation4 + $0x78] sm:$0xff] %vm1960, %v1895
      %1977 = vst.msk [vmem:[#allocation4 + $0x80] sm:$0xff] %vm1960, %v1897
      %1978 = vst.msk [vmem:[#allocation4 + $0x88] sm:$0xff] %vm1960, %v1899
      %1979 = vst.msk [vmem:[#allocation4 + $0x90] sm:$0xff] %vm1960, %v1901
      %1980 = vst.msk [vmem:[#allocation4 + $0x98] sm:$0xff] %vm1960, %v1903
      %1981 = vst.msk [vmem:[#allocation4 + $0xa0] sm:$0xff] %vm1960, %v1905
      %1982 = vst.msk [vmem:[#allocation4 + $0xa8] sm:$0xff] %vm1960, %v1907
      %1983 = vst.msk [vmem:[#allocation4 + $0xb0] sm:$0xff] %vm1960, %v1909
      %1984 = vst.msk [vmem:[#allocation4 + $0xb8] sm:$0xff] %vm1960, %v1911
      %1985 = vst.msk [vmem:[#allocation4 + $0xc0] sm:$0xff] %vm1960, %v1913
      %1986 = vst.msk [vmem:[#allocation4 + $0xc8] sm:$0xff] %vm1960, %v1915
      %1987 = vst.msk [vmem:[#allocation4 + $0xd0] sm:$0xff] %vm1960, %v1917
      %1988 = vst.msk [vmem:[#allocation4 + $0xd8] sm:$0xff] %vm1960, %v1919
      %1989 = vst.msk [vmem:[#allocation4 + $0xe0] sm:$0xff] %vm1960, %v1921
      %1990 = vst.msk [vmem:[#allocation4 + $0xe8] sm:$0xff] %vm1960, %v1923
      %1991 = vst.msk [vmem:[#allocation4 + $0xf0] sm:$0xff] %vm1960, %v1925
      %1992 = vst.msk [vmem:[#allocation4 + $0xf8] sm:$0xff] %vm1960, %v1927
      %v1993 = vld [vmem:[%s1606 + $0x2] sm:$0xff]
      %v1994 = vld [vmem:[%s1606 + $0xa] sm:$0xff]
      %v1995 = vld [vmem:[%s1606 + $0x1a] sm:$0xff]
      %v1996 = vld [vmem:[%s1606 + $0x22] sm:$0xff]
      %v1997 = vld [vmem:[%s1606 + $0x32] sm:$0xff]
      %v1998 = vld [vmem:[%s1606 + $0x3a] sm:$0xff]
      %v1999 = vld [vmem:[%s1606 + $0x4a] sm:$0xff]
      %v2000 = vld [vmem:[%s1606 + $0x52] sm:$0xff]
      %v2001 = vld [vmem:[%s1606 + $0x62] sm:$0xff]
      %v2002 = vld [vmem:[%s1606 + $0x6a] sm:$0xff]
      %v2003 = vld [vmem:[%s1606 + $0x7a] sm:$0xff]
      %v2004 = vld [vmem:[%s1606 + $0x82] sm:$0xff]
      %v2005 = vld [vmem:[%s1606 + $0x92] sm:$0xff]
      %v2006 = vld [vmem:[%s1606 + $0x9a] sm:$0xff]
      %v2007 = vld [vmem:[%s1606 + $0xaa] sm:$0xff]
      %v2008 = vld [vmem:[%s1606 + $0xb2] sm:$0xff]
      %v2009 = vld [vmem:[%s1606 + $0xc2] sm:$0xff]
      %v2010 = vld [vmem:[%s1606 + $0xca] sm:$0xff]
      %v2011 = vld [vmem:[%s1606 + $0xda] sm:$0xff]
      %v2012 = vld [vmem:[%s1606 + $0xe2] sm:$0xff]
      %v2013 = vld [vmem:[%s1606 + $0xf2] sm:$0xff]
      %v2014 = vld [vmem:[%s1606 + $0xfa] sm:$0xff]
      %v2015 = vld [vmem:[%s1606 + $0x10a] sm:$0xff]
      %v2016 = vld [vmem:[%s1606 + $0x112] sm:$0xff]
      %v2017 = vld [vmem:[%s1606 + $0x122] sm:$0xff]
      %v2018 = vld [vmem:[%s1606 + $0x12a] sm:$0xff]
      %v2019 = vld [vmem:[%s1606 + $0x13a] sm:$0xff]
      %v2020 = vld [vmem:[%s1606 + $0x142] sm:$0xff]
      %v2021 = vld [vmem:[%s1606 + $0x152] sm:$0xff]
      %v2022 = vld [vmem:[%s1606 + $0x15a] sm:$0xff]
      %v2023 = vld [vmem:[%s1606 + $0x16a] sm:$0xff]
      %v2024 = vld [vmem:[%s1606 + $0x172] sm:$0xff]
      %2057 = vrot.lane.b32.xlu0 %v1993, 32
      %v2058 = vpop.permute.xlu0 %2057
      %2059 = vrot.lane.b32.xlu0 %v1994, 32
      %v2060 = vpop.permute.xlu0 %2059
      %2061 = vrot.lane.b32.xlu0 %v1995, 32
      %v2062 = vpop.permute.xlu0 %2061
      %2063 = vrot.lane.b32.xlu0 %v1996, 32
      %v2064 = vpop.permute.xlu0 %2063
      %2065 = vrot.lane.b32.xlu0 %v1997, 32
      %v2066 = vpop.permute.xlu0 %2065
      %2067 = vrot.lane.b32.xlu0 %v1998, 32
      %v2068 = vpop.permute.xlu0 %2067
      %2069 = vrot.lane.b32.xlu0 %v1999, 32
      %v2070 = vpop.permute.xlu0 %2069
      %2071 = vrot.lane.b32.xlu0 %v2000, 32
      %v2072 = vpop.permute.xlu0 %2071
      %2073 = vrot.lane.b32.xlu0 %v2001, 32
      %v2074 = vpop.permute.xlu0 %2073
      %2075 = vrot.lane.b32.xlu0 %v2002, 32
      %v2076 = vpop.permute.xlu0 %2075
      %2077 = vrot.lane.b32.xlu0 %v2003, 32
      %v2078 = vpop.permute.xlu0 %2077
      %2079 = vrot.lane.b32.xlu0 %v2004, 32
      %v2080 = vpop.permute.xlu0 %2079
      %2081 = vrot.lane.b32.xlu0 %v2005, 32
      %v2082 = vpop.permute.xlu0 %2081
      %2083 = vrot.lane.b32.xlu0 %v2006, 32
      %v2084 = vpop.permute.xlu0 %2083
      %2085 = vrot.lane.b32.xlu0 %v2007, 32
      %v2086 = vpop.permute.xlu0 %2085
      %2087 = vrot.lane.b32.xlu0 %v2008, 32
      %v2088 = vpop.permute.xlu0 %2087
      %2089 = vrot.lane.b32.xlu0 %v2009, 32
      %v2090 = vpop.permute.xlu0 %2089
      %2091 = vrot.lane.b32.xlu0 %v2010, 32
      %v2092 = vpop.permute.xlu0 %2091
      %2093 = vrot.lane.b32.xlu0 %v2011, 32
      %v2094 = vpop.permute.xlu0 %2093
      %2095 = vrot.lane.b32.xlu0 %v2012, 32
      %v2096 = vpop.permute.xlu0 %2095
      %2097 = vrot.lane.b32.xlu0 %v2013, 32
      %v2098 = vpop.permute.xlu0 %2097
      %2099 = vrot.lane.b32.xlu0 %v2014, 32
      %v2100 = vpop.permute.xlu0 %2099
      %2101 = vrot.lane.b32.xlu0 %v2015, 32
      %v2102 = vpop.permute.xlu0 %2101
      %2103 = vrot.lane.b32.xlu0 %v2016, 32
      %v2104 = vpop.permute.xlu0 %2103
      %2105 = vrot.lane.b32.xlu0 %v2017, 32
      %v2106 = vpop.permute.xlu0 %2105
      %2107 = vrot.lane.b32.xlu0 %v2018, 32
      %v2108 = vpop.permute.xlu0 %2107
      %2109 = vrot.lane.b32.xlu0 %v2019, 32
      %v2110 = vpop.permute.xlu0 %2109
      %2111 = vrot.lane.b32.xlu0 %v2020, 32
      %v2112 = vpop.permute.xlu0 %2111
      %2113 = vrot.lane.b32.xlu0 %v2021, 32
      %v2114 = vpop.permute.xlu0 %2113
      %2115 = vrot.lane.b32.xlu0 %v2022, 32
      %v2116 = vpop.permute.xlu0 %2115
      %2117 = vrot.lane.b32.xlu0 %v2023, 32
      %v2118 = vpop.permute.xlu0 %2117
      %2119 = vrot.lane.b32.xlu0 %v2024, 32
      %v2120 = vpop.permute.xlu0 %2119
      %vm2153 = vcmask 294144
      %2154 = vst.msk [vmem:[#allocation4] sm:$0xff] %vm2153, %v2058
      %2155 = vst.msk [vmem:[#allocation4 + $0x8] sm:$0xff] %vm2153, %v2060
      %2156 = vst.msk [vmem:[#allocation4 + $0x10] sm:$0xff] %vm2153, %v2062
      %2157 = vst.msk [vmem:[#allocation4 + $0x18] sm:$0xff] %vm2153, %v2064
      %2158 = vst.msk [vmem:[#allocation4 + $0x20] sm:$0xff] %vm2153, %v2066
      %2159 = vst.msk [vmem:[#allocation4 + $0x28] sm:$0xff] %vm2153, %v2068
      %2160 = vst.msk [vmem:[#allocation4 + $0x30] sm:$0xff] %vm2153, %v2070
      %2161 = vst.msk [vmem:[#allocation4 + $0x38] sm:$0xff] %vm2153, %v2072
      %2162 = vst.msk [vmem:[#allocation4 + $0x40] sm:$0xff] %vm2153, %v2074
      %2163 = vst.msk [vmem:[#allocation4 + $0x48] sm:$0xff] %vm2153, %v2076
      %2164 = vst.msk [vmem:[#allocation4 + $0x50] sm:$0xff] %vm2153, %v2078
      %2165 = vst.msk [vmem:[#allocation4 + $0x58] sm:$0xff] %vm2153, %v2080
      %2166 = vst.msk [vmem:[#allocation4 + $0x60] sm:$0xff] %vm2153, %v2082
      %2167 = vst.msk [vmem:[#allocation4 + $0x68] sm:$0xff] %vm2153, %v2084
      %2168 = vst.msk [vmem:[#allocation4 + $0x70] sm:$0xff] %vm2153, %v2086
      %2169 = vst.msk [vmem:[#allocation4 + $0x78] sm:$0xff] %vm2153, %v2088
      %2170 = vst.msk [vmem:[#allocation4 + $0x80] sm:$0xff] %vm2153, %v2090
      %2171 = vst.msk [vmem:[#allocation4 + $0x88] sm:$0xff] %vm2153, %v2092
      %2172 = vst.msk [vmem:[#allocation4 + $0x90] sm:$0xff] %vm2153, %v2094
      %2173 = vst.msk [vmem:[#allocation4 + $0x98] sm:$0xff] %vm2153, %v2096
      %2174 = vst.msk [vmem:[#allocation4 + $0xa0] sm:$0xff] %vm2153, %v2098
      %2175 = vst.msk [vmem:[#allocation4 + $0xa8] sm:$0xff] %vm2153, %v2100
      %2176 = vst.msk [vmem:[#allocation4 + $0xb0] sm:$0xff] %vm2153, %v2102
      %2177 = vst.msk [vmem:[#allocation4 + $0xb8] sm:$0xff] %vm2153, %v2104
      %2178 = vst.msk [vmem:[#allocation4 + $0xc0] sm:$0xff] %vm2153, %v2106
      %2179 = vst.msk [vmem:[#allocation4 + $0xc8] sm:$0xff] %vm2153, %v2108
      %2180 = vst.msk [vmem:[#allocation4 + $0xd0] sm:$0xff] %vm2153, %v2110
      %2181 = vst.msk [vmem:[#allocation4 + $0xd8] sm:$0xff] %vm2153, %v2112
      %2182 = vst.msk [vmem:[#allocation4 + $0xe0] sm:$0xff] %vm2153, %v2114
      %2183 = vst.msk [vmem:[#allocation4 + $0xe8] sm:$0xff] %vm2153, %v2116
      %2184 = vst.msk [vmem:[#allocation4 + $0xf0] sm:$0xff] %vm2153, %v2118
      %2185 = vst.msk [vmem:[#allocation4 + $0xf8] sm:$0xff] %vm2153, %v2120
      %v2186 = vld [vmem:[#allocation4] sm:$0xff]
      %v2187 = vld [vmem:[#allocation4 + $0x8] sm:$0xff]
      %v2188 = vld [vmem:[#allocation4 + $0x10] sm:$0xff]
      %v2189 = vld [vmem:[#allocation4 + $0x18] sm:$0xff]
      %v2190 = vld [vmem:[#allocation4 + $0x20] sm:$0xff]
      %v2191 = vld [vmem:[#allocation4 + $0x28] sm:$0xff]
      %v2192 = vld [vmem:[#allocation4 + $0x30] sm:$0xff]
      %v2193 = vld [vmem:[#allocation4 + $0x38] sm:$0xff]
      %v2194 = vld [vmem:[#allocation4 + $0x40] sm:$0xff]
      %v2195 = vld [vmem:[#allocation4 + $0x48] sm:$0xff]
      %v2196 = vld [vmem:[#allocation4 + $0x50] sm:$0xff]
      %v2197 = vld [vmem:[#allocation4 + $0x58] sm:$0xff]
      %v2198 = vld [vmem:[#allocation4 + $0x60] sm:$0xff]
      %v2199 = vld [vmem:[#allocation4 + $0x68] sm:$0xff]
      %v2200 = vld [vmem:[#allocation4 + $0x70] sm:$0xff]
      %v2201 = vld [vmem:[#allocation4 + $0x78] sm:$0xff]
      %v2202 = vld [vmem:[#allocation4 + $0x80] sm:$0xff]
      %v2203 = vld [vmem:[#allocation4 + $0x88] sm:$0xff]
      %v2204 = vld [vmem:[#allocation4 + $0x90] sm:$0xff]
      %v2205 = vld [vmem:[#allocation4 + $0x98] sm:$0xff]
      %v2206 = vld [vmem:[#allocation4 + $0xa0] sm:$0xff]
      %v2207 = vld [vmem:[#allocation4 + $0xa8] sm:$0xff]
      %v2208 = vld [vmem:[#allocation4 + $0xb0] sm:$0xff]
      %v2209 = vld [vmem:[#allocation4 + $0xb8] sm:$0xff]
      %v2210 = vld [vmem:[#allocation4 + $0xc0] sm:$0xff]
      %v2211 = vld [vmem:[#allocation4 + $0xc8] sm:$0xff]
      %v2212 = vld [vmem:[#allocation4 + $0xd0] sm:$0xff]
      %v2213 = vld [vmem:[#allocation4 + $0xd8] sm:$0xff]
      %v2214 = vld [vmem:[#allocation4 + $0xe0] sm:$0xff]
      %v2215 = vld [vmem:[#allocation4 + $0xe8] sm:$0xff]
      %v2216 = vld [vmem:[#allocation4 + $0xf0] sm:$0xff]
      %v2217 = vld [vmem:[#allocation4 + $0xf8] sm:$0xff]
      %v2218 = vpack.c.bf16 %v2187, %v2186
      %v2219 = vpack.c.bf16 %v2189, %v2188
      %v2220 = vpack.c.bf16 %v2191, %v2190
      %v2221 = vpack.c.bf16 %v2193, %v2192
      %v2222 = vpack.c.bf16 %v2195, %v2194
      %v2223 = vpack.c.bf16 %v2197, %v2196
      %v2224 = vpack.c.bf16 %v2199, %v2198
      %v2225 = vpack.c.bf16 %v2201, %v2200
      %v2226 = vpack.c.bf16 %v2203, %v2202
      %v2227 = vpack.c.bf16 %v2205, %v2204
      %v2228 = vpack.c.bf16 %v2207, %v2206
      %v2229 = vpack.c.bf16 %v2209, %v2208
      %v2230 = vpack.c.bf16 %v2211, %v2210
      %v2231 = vpack.c.bf16 %v2213, %v2212
      %v2232 = vpack.c.bf16 %v2215, %v2214
      %v2233 = vpack.c.bf16 %v2217, %v2216
      %v2234 = vld [vmem:[%s1] sm:$0xf]
      %v2235 = vld [vmem:[%s1 + $0x4] sm:$0xf]
      %v2236 = vld [vmem:[%s1 + $0x8] sm:$0xf]
      %v2237 = vld [vmem:[%s1 + $0xc] sm:$0xf]
      %v2238 = vld [vmem:[%s1 + $0x10] sm:$0x3]
      %v2244 = vunpack.c.l.b16 %v2234
      %v2245 = vunpack.c.l.b16 %v2235
      %v2246 = vunpack.c.l.b16 %v2236
      %v2247 = vunpack.c.l.b16 %v2237
      %v2248 = vunpack.c.l.b16 %v2238
      %v2249 = vpack.c.b16 %v2245, %v2244
      %v2250 = vpack.c.b16 %v2247, %v2246
      %v2251 = vpack.c.b16 %v2248, %v2248
      %vm2254 = vcmask 293888
      %v2256 = vsel %vm2254, %v2218, 0
      %v2259 = vsel %vm2254, %v2219, 0
      %v2262 = vsel %vm2254, %v2220, 0
      %v2265 = vsel %vm2254, %v2221, 0
      %v2268 = vsel %vm2254, %v2222, 0
      %v2271 = vsel %vm2254, %v2223, 0
      %v2274 = vsel %vm2254, %v2224, 0
      %v2277 = vsel %vm2254, %v2225, 0
      %v2280 = vsel %vm2254, %v2226, 0
      %v2283 = vsel %vm2254, %v2227, 0
      %v2286 = vsel %vm2254, %v2228, 0
      %v2289 = vsel %vm2254, %v2229, 0
      %v2292 = vsel %vm2254, %v2230, 0
      %v2295 = vsel %vm2254, %v2231, 0
      %v2298 = vsel %vm2254, %v2232, 0
      %v2301 = vsel %vm2254, %v2233, 0
      %vm2303 = vcmask 1041408
      %v2305 = vsel %vm2303, %v2251, 0
      %2307 = vmatprep.subr.bf16.mxu0 0
      %2308 = vmatpush1.bf16.msra.mxu0 0
      %2309 = vmatprep.subr.bf16.mxu0 0
      %2310 = vmatpush1.bf16.msra.mxu0 0
      %2311 = vmatprep.subr.bf16.mxu0 0
      %2312 = vmatpush1.bf16.msra.mxu0 0
      %2313 = vmatprep.subr.bf16.mxu0 0
      %2314 = vmatpush1.bf16.msra.mxu0 0
      %2315 = vmatprep.subr.bf16.mxu0 0
      %2316 = vmatpush1.bf16.msra.mxu0 0
      %2317 = vmatprep.subr.bf16.mxu0 0
      %2318 = vmatpush1.bf16.msra.mxu0 %v2305
      %2319 = vmatprep.subr.bf16.mxu0 0
      %2320 = vmatpush1.bf16.msra.mxu0 %v2250
      %2321 = vmatprep.subr.bf16.mxu0 0
      %2322 = vmatpush1.bf16.msra.mxu0 %v2249
      %2323 = vmatprep.subr.bf16.mxu0 0
      %2324 = vmatpush2.bf16.msra.mxu0 0
      %2325 = vmatprep.subr.bf16.mxu0 0
      %2326 = vmatpush2.bf16.msra.mxu0 0
      %2327 = vmatprep.subr.bf16.mxu0 0
      %2328 = vmatpush2.bf16.msra.mxu0 0
      %2329 = vmatprep.subr.bf16.mxu0 0
      %2330 = vmatpush2.bf16.msra.mxu0 0
      %2331 = vmatprep.subr.bf16.mxu0 0
      %2332 = vmatpush2.bf16.msra.mxu0 0
      %2333 = vmatprep.subr.bf16.mxu0 0
      %2334 = vmatpush2.bf16.msra.mxu0 0
      %2335 = vmatprep.subr.bf16.mxu0 0
      %2336 = vmatpush2.bf16.msra.mxu0 0
      %2337 = vmatprep.subr.bf16.mxu0 0
      %2338 = vmatpush2.bf16.msra.mxu0 0
      %2339 = vmatprep.mubr.bf16.mxu0 0
      %2340 = vmatmul.mubr.bf16.gmra.mxu0 %v2256
      %v2341 = vpop.f32.mrf.mxu0
      %v2342 = vadd.f32 0.0, %v2341
      %v2343 = vpop.f32.mrf.mxu0
      %v2344 = vpop.f32.mrf.mxu0
      %v2345 = vadd.f32 0.0, %v2344
      %v2346 = vpop.f32.mrf.mxu0
      %2347 = vmatprep.mubr.bf16.mxu0 0
      %2348 = vmatmul.mubr.bf16.gmra.mxu0 %v2259
      %v2349 = vpop.f32.mrf.mxu0
      %v2350 = vadd.f32 0.0, %v2349
      %v2351 = vpop.f32.mrf.mxu0
      %v2352 = vpop.f32.mrf.mxu0
      %v2353 = vadd.f32 0.0, %v2352
      %v2354 = vpop.f32.mrf.mxu0
      %2355 = vmatprep.mubr.bf16.mxu0 0
      %2356 = vmatmul.mubr.bf16.gmra.mxu0 %v2262
      %v2357 = vpop.f32.mrf.mxu0
      %v2358 = vadd.f32 0.0, %v2357
      %v2359 = vpop.f32.mrf.mxu0
      %v2360 = vpop.f32.mrf.mxu0
      %v2361 = vadd.f32 0.0, %v2360
      %v2362 = vpop.f32.mrf.mxu0
      %2363 = vmatprep.mubr.bf16.mxu0 0
      %2364 = vmatmul.mubr.bf16.gmra.mxu0 %v2265
      %v2365 = vpop.f32.mrf.mxu0
      %v2366 = vadd.f32 0.0, %v2365
      %v2367 = vpop.f32.mrf.mxu0
      %v2368 = vpop.f32.mrf.mxu0
      %v2369 = vadd.f32 0.0, %v2368
      %v2370 = vpop.f32.mrf.mxu0
      %2371 = vmatprep.mubr.bf16.mxu0 0
      %2372 = vmatmul.mubr.bf16.gmra.mxu0 %v2268
      %v2373 = vpop.f32.mrf.mxu0
      %v2374 = vadd.f32 0.0, %v2373
      %v2375 = vpop.f32.mrf.mxu0
      %v2376 = vpop.f32.mrf.mxu0
      %v2377 = vadd.f32 0.0, %v2376
      %v2378 = vpop.f32.mrf.mxu0
      %2379 = vmatprep.mubr.bf16.mxu0 0
      %2380 = vmatmul.mubr.bf16.gmra.mxu0 %v2271
      %v2381 = vpop.f32.mrf.mxu0
      %v2382 = vadd.f32 0.0, %v2381
      %v2383 = vpop.f32.mrf.mxu0
      %v2384 = vpop.f32.mrf.mxu0
      %v2385 = vadd.f32 0.0, %v2384
      %v2386 = vpop.f32.mrf.mxu0
      %2387 = vmatprep.mubr.bf16.mxu0 0
      %2388 = vmatmul.mubr.bf16.gmra.mxu0 %v2274
      %v2389 = vpop.f32.mrf.mxu0
      %v2390 = vadd.f32 0.0, %v2389
      %v2391 = vpop.f32.mrf.mxu0
      %v2392 = vpop.f32.mrf.mxu0
      %v2393 = vadd.f32 0.0, %v2392
      %v2394 = vpop.f32.mrf.mxu0
      %2395 = vmatprep.mubr.bf16.mxu0 0
      %2396 = vmatmul.mubr.bf16.gmra.mxu0 %v2277
      %v2397 = vpop.f32.mrf.mxu0
      %v2398 = vadd.f32 0.0, %v2397
      %v2399 = vpop.f32.mrf.mxu0
      %v2400 = vpop.f32.mrf.mxu0
      %v2401 = vadd.f32 0.0, %v2400
      %v2402 = vpop.f32.mrf.mxu0
      %2403 = vmatprep.mubr.bf16.mxu0 0
      %2404 = vmatmul.mubr.bf16.gmra.mxu0 %v2280
      %v2405 = vpop.f32.mrf.mxu0
      %v2406 = vadd.f32 0.0, %v2405
      %v2407 = vpop.f32.mrf.mxu0
      %v2408 = vpop.f32.mrf.mxu0
      %v2409 = vadd.f32 0.0, %v2408
      %v2410 = vpop.f32.mrf.mxu0
      %2411 = vmatprep.mubr.bf16.mxu0 0
      %2412 = vmatmul.mubr.bf16.gmra.mxu0 %v2283
      %v2413 = vpop.f32.mrf.mxu0
      %v2414 = vadd.f32 0.0, %v2413
      %v2415 = vpop.f32.mrf.mxu0
      %v2416 = vpop.f32.mrf.mxu0
      %v2417 = vadd.f32 0.0, %v2416
      %v2418 = vpop.f32.mrf.mxu0
      %2419 = vmatprep.mubr.bf16.mxu0 0
      %2420 = vmatmul.mubr.bf16.gmra.mxu0 %v2286
      %v2421 = vpop.f32.mrf.mxu0
      %v2422 = vadd.f32 0.0, %v2421
      %v2423 = vpop.f32.mrf.mxu0
      %v2424 = vpop.f32.mrf.mxu0
      %v2425 = vadd.f32 0.0, %v2424
      %v2426 = vpop.f32.mrf.mxu0
      %2427 = vmatprep.mubr.bf16.mxu0 0
      %2428 = vmatmul.mubr.bf16.gmra.mxu0 %v2289
      %v2429 = vpop.f32.mrf.mxu0
      %v2430 = vadd.f32 0.0, %v2429
      %v2431 = vpop.f32.mrf.mxu0
      %v2432 = vpop.f32.mrf.mxu0
      %v2433 = vadd.f32 0.0, %v2432
      %v2434 = vpop.f32.mrf.mxu0
      %2435 = vmatprep.mubr.bf16.mxu0 0
      %2436 = vmatmul.mubr.bf16.gmra.mxu0 %v2292
      %v2437 = vpop.f32.mrf.mxu0
      %v2438 = vadd.f32 0.0, %v2437
      %v2439 = vpop.f32.mrf.mxu0
      %v2440 = vpop.f32.mrf.mxu0
      %v2441 = vadd.f32 0.0, %v2440
      %v2442 = vpop.f32.mrf.mxu0
      %2443 = vmatprep.mubr.bf16.mxu0 0
      %2444 = vmatmul.mubr.bf16.gmra.mxu0 %v2295
      %v2445 = vpop.f32.mrf.mxu0
      %v2446 = vadd.f32 0.0, %v2445
      %v2447 = vpop.f32.mrf.mxu0
      %v2448 = vpop.f32.mrf.mxu0
      %v2449 = vadd.f32 0.0, %v2448
      %v2450 = vpop.f32.mrf.mxu0
      %2451 = vmatprep.mubr.bf16.mxu0 0
      %2452 = vmatmul.mubr.bf16.gmra.mxu0 %v2298
      %v2453 = vpop.f32.mrf.mxu0
      %v2454 = vadd.f32 0.0, %v2453
      %v2455 = vpop.f32.mrf.mxu0
      %v2456 = vpop.f32.mrf.mxu0
      %v2457 = vadd.f32 0.0, %v2456
      %v2458 = vpop.f32.mrf.mxu0
      %2459 = vmatprep.mubr.bf16.mxu0 0
      %2460 = vmatmul.mubr.bf16.gmra.mxu0 %v2301
      %v2461 = vpop.f32.mrf.mxu0
      %v2462 = vadd.f32 0.0, %v2461
      %v2463 = vpop.f32.mrf.mxu0
      %v2464 = vpop.f32.mrf.mxu0
      %v2465 = vadd.f32 0.0, %v2464
      %v2466 = vpop.f32.mrf.mxu0
      %2467 = vdwg.mxu0
      %vm2468 = vcmp.gt.f32.partialorder %v2342, 0.0
      %vm2469 = vcmp.gt.f32.partialorder %v2345, 0.0
      %vm2470 = vcmp.gt.f32.partialorder %v2350, 0.0
      %vm2471 = vcmp.gt.f32.partialorder %v2353, 0.0
      %vm2472 = vcmp.gt.f32.partialorder %v2358, 0.0
      %vm2473 = vcmp.gt.f32.partialorder %v2361, 0.0
      %vm2474 = vcmp.gt.f32.partialorder %v2366, 0.0
      %vm2475 = vcmp.gt.f32.partialorder %v2369, 0.0
      %vm2476 = vcmp.gt.f32.partialorder %v2374, 0.0
      %vm2477 = vcmp.gt.f32.partialorder %v2377, 0.0
      %vm2478 = vcmp.gt.f32.partialorder %v2382, 0.0
      %vm2479 = vcmp.gt.f32.partialorder %v2385, 0.0
      %vm2480 = vcmp.gt.f32.partialorder %v2390, 0.0
      %vm2481 = vcmp.gt.f32.partialorder %v2393, 0.0
      %vm2482 = vcmp.gt.f32.partialorder %v2398, 0.0
      %vm2483 = vcmp.gt.f32.partialorder %v2401, 0.0
      %vm2484 = vcmp.gt.f32.partialorder %v2406, 0.0
      %vm2485 = vcmp.gt.f32.partialorder %v2409, 0.0
      %vm2486 = vcmp.gt.f32.partialorder %v2414, 0.0
      %vm2487 = vcmp.gt.f32.partialorder %v2417, 0.0
      %vm2488 = vcmp.gt.f32.partialorder %v2422, 0.0
      %vm2489 = vcmp.gt.f32.partialorder %v2425, 0.0
      %vm2490 = vcmp.gt.f32.partialorder %v2430, 0.0
      %vm2491 = vcmp.gt.f32.partialorder %v2433, 0.0
      %vm2492 = vcmp.gt.f32.partialorder %v2438, 0.0
      %vm2493 = vcmp.gt.f32.partialorder %v2441, 0.0
      %vm2494 = vcmp.gt.f32.partialorder %v2446, 0.0
      %vm2495 = vcmp.gt.f32.partialorder %v2449, 0.0
      %vm2496 = vcmp.gt.f32.partialorder %v2454, 0.0
      %vm2497 = vcmp.gt.f32.partialorder %v2457, 0.0
      %vm2498 = vcmp.gt.f32.partialorder %v2462, 0.0
      %vm2499 = vcmp.gt.f32.partialorder %v2465, 0.0
      %v2500 = vld [vmem:[%s5] sm:$0x1]
      %v2502 = vlaneseq
      %v2503 = vshrl.u32 %v2502, 7
      %v2504 = vsub.s32 0, %v2503
      %v2505 = vrot.slane %v2500, %v2504
      %v2507 = vmul.f32 %v2342, %v2505
      %v2508 = vmul.f32 %v2345, %v2505
      %v2509 = vmul.f32 %v2350, %v2505
      %v2510 = vmul.f32 %v2353, %v2505
      %v2511 = vmul.f32 %v2358, %v2505
      %v2512 = vmul.f32 %v2361, %v2505
      %v2513 = vmul.f32 %v2366, %v2505
      %v2514 = vmul.f32 %v2369, %v2505
      %v2515 = vmul.f32 %v2374, %v2505
      %v2516 = vmul.f32 %v2377, %v2505
      %v2517 = vmul.f32 %v2382, %v2505
      %v2518 = vmul.f32 %v2385, %v2505
      %v2519 = vmul.f32 %v2390, %v2505
      %v2520 = vmul.f32 %v2393, %v2505
      %v2521 = vmul.f32 %v2398, %v2505
      %v2522 = vmul.f32 %v2401, %v2505
      %v2523 = vmul.f32 %v2406, %v2505
      %v2524 = vmul.f32 %v2409, %v2505
      %v2525 = vmul.f32 %v2414, %v2505
      %v2526 = vmul.f32 %v2417, %v2505
      %v2527 = vmul.f32 %v2422, %v2505
      %v2528 = vmul.f32 %v2425, %v2505
      %v2529 = vmul.f32 %v2430, %v2505
      %v2530 = vmul.f32 %v2433, %v2505
      %v2531 = vmul.f32 %v2438, %v2505
      %v2532 = vmul.f32 %v2441, %v2505
      %v2533 = vmul.f32 %v2446, %v2505
      %v2534 = vmul.f32 %v2449, %v2505
      %v2535 = vmul.f32 %v2454, %v2505
      %v2536 = vmul.f32 %v2457, %v2505
      %v2537 = vmul.f32 %v2462, %v2505
      %v2538 = vmul.f32 %v2465, %v2505
      %v2539 = vsel %vm2468, %v2342, %v2507
      %v2540 = vsel %vm2469, %v2345, %v2508
      %v2541 = vsel %vm2470, %v2350, %v2509
      %v2542 = vsel %vm2471, %v2353, %v2510
      %v2543 = vsel %vm2472, %v2358, %v2511
      %v2544 = vsel %vm2473, %v2361, %v2512
      %v2545 = vsel %vm2474, %v2366, %v2513
      %v2546 = vsel %vm2475, %v2369, %v2514
      %v2547 = vsel %vm2476, %v2374, %v2515
      %v2548 = vsel %vm2477, %v2377, %v2516
      %v2549 = vsel %vm2478, %v2382, %v2517
      %v2550 = vsel %vm2479, %v2385, %v2518
      %v2551 = vsel %vm2480, %v2390, %v2519
      %v2552 = vsel %vm2481, %v2393, %v2520
      %v2553 = vsel %vm2482, %v2398, %v2521
      %v2554 = vsel %vm2483, %v2401, %v2522
      %v2555 = vsel %vm2484, %v2406, %v2523
      %v2556 = vsel %vm2485, %v2409, %v2524
      %v2557 = vsel %vm2486, %v2414, %v2525
      %v2558 = vsel %vm2487, %v2417, %v2526
      %v2559 = vsel %vm2488, %v2422, %v2527
      %v2560 = vsel %vm2489, %v2425, %v2528
      %v2561 = vsel %vm2490, %v2430, %v2529
      %v2562 = vsel %vm2491, %v2433, %v2530
      %v2563 = vsel %vm2492, %v2438, %v2531
      %v2564 = vsel %vm2493, %v2441, %v2532
      %v2565 = vsel %vm2494, %v2446, %v2533
      %v2566 = vsel %vm2495, %v2449, %v2534
      %v2567 = vsel %vm2496, %v2454, %v2535
      %v2568 = vsel %vm2497, %v2457, %v2536
      %v2569 = vsel %vm2498, %v2462, %v2537
      %v2570 = vsel %vm2499, %v2465, %v2538
      %vm2571 = vcmask 64512
      %2572 = vst.msk [vmem:[#allocation3] sm:$0xff] %vm2571, 0.0
      %2573 = vst.msk [vmem:[#allocation3 + $0x8] sm:$0xff] %vm2571, 0.0
      %vm2574 = vcmask 58368
      %2575 = vst.msk [vmem:[#allocation3 + $0x10] sm:$0x3] %vm2574, 0.0
      %s2576 = scalar_lea.vmem [#allocation3], 408
      %2577 = vst.msk [vmem:[%s2576] sm:$0xff] %vm2571, 0.0
      %2578 = vst.msk [vmem:[%s2576 + $0x8] sm:$0xff] %vm2571, 0.0
      %2579 = vst.msk [vmem:[%s2576 + $0x10] sm:$0x3] %vm2574, 0.0
      %vm2580 = vcmask 57344
      %2581 = vst.msk [vmem:[#allocation3] sm:$0x1] %vm2580, 0.0
      %2582 = vst.msk [vmem:[#allocation3 + $0x18] sm:$0x1] %vm2580, 0.0
      %2583 = vst.msk [vmem:[#allocation3 + $0x30] sm:$0x1] %vm2580, 0.0
      %2584 = vst.msk [vmem:[#allocation3 + $0x48] sm:$0x1] %vm2580, 0.0
      %2585 = vst.msk [vmem:[#allocation3 + $0x60] sm:$0x1] %vm2580, 0.0
      %2586 = vst.msk [vmem:[#allocation3 + $0x78] sm:$0x1] %vm2580, 0.0
      %2587 = vst.msk [vmem:[#allocation3 + $0x90] sm:$0x1] %vm2580, 0.0
      %2588 = vst.msk [vmem:[#allocation3 + $0xa8] sm:$0x1] %vm2580, 0.0
      %2589 = vst.msk [vmem:[#allocation3 + $0xc0] sm:$0x1] %vm2580, 0.0
      %2590 = vst.msk [vmem:[#allocation3 + $0xd8] sm:$0x1] %vm2580, 0.0
      %2591 = vst.msk [vmem:[#allocation3 + $0xf0] sm:$0x1] %vm2580, 0.0
      %2592 = vst.msk [vmem:[#allocation3 + $0x108] sm:$0x1] %vm2580, 0.0
      %2593 = vst.msk [vmem:[#allocation3 + $0x120] sm:$0x1] %vm2580, 0.0
      %2594 = vst.msk [vmem:[#allocation3 + $0x138] sm:$0x1] %vm2580, 0.0
      %2595 = vst.msk [vmem:[#allocation3 + $0x150] sm:$0x1] %vm2580, 0.0
      %2596 = vst.msk [vmem:[#allocation3 + $0x168] sm:$0x1] %vm2580, 0.0
      %2597 = vst.msk [vmem:[#allocation3 + $0x180] sm:$0x1] %vm2580, 0.0
      %2598 = vst.msk [vmem:[#allocation3 + $0x198] sm:$0x1] %vm2580, 0.0
      %2599 = vst.msk [vmem:[#allocation3 + $0x11] sm:$0x1] %vm2580, 0.0
      %2600 = vst.msk [vmem:[#allocation3 + $0x29] sm:$0x1] %vm2580, 0.0
      %2601 = vst.msk [vmem:[#allocation3 + $0x41] sm:$0x1] %vm2580, 0.0
      %2602 = vst.msk [vmem:[#allocation3 + $0x59] sm:$0x1] %vm2580, 0.0
      %2603 = vst.msk [vmem:[#allocation3 + $0x71] sm:$0x1] %vm2580, 0.0
      %2604 = vst.msk [vmem:[#allocation3 + $0x89] sm:$0x1] %vm2580, 0.0
      %2605 = vst.msk [vmem:[#allocation3 + $0xa1] sm:$0x1] %vm2580, 0.0
      %2606 = vst.msk [vmem:[#allocation3 + $0xb9] sm:$0x1] %vm2580, 0.0
      %2607 = vst.msk [vmem:[#allocation3 + $0xd1] sm:$0x1] %vm2580, 0.0
      %2608 = vst.msk [vmem:[#allocation3 + $0xe9] sm:$0x1] %vm2580, 0.0
      %2609 = vst.msk [vmem:[#allocation3 + $0x101] sm:$0x1] %vm2580, 0.0
      %2610 = vst.msk [vmem:[#allocation3 + $0x119] sm:$0x1] %vm2580, 0.0
      %2611 = vst.msk [vmem:[#allocation3 + $0x131] sm:$0x1] %vm2580, 0.0
      %2612 = vst.msk [vmem:[#allocation3 + $0x149] sm:$0x1] %vm2580, 0.0
      %2613 = vst.msk [vmem:[#allocation3 + $0x161] sm:$0x1] %vm2580, 0.0
      %2614 = vst.msk [vmem:[#allocation3 + $0x179] sm:$0x1] %vm2580, 0.0
      %2615 = vst.msk [vmem:[#allocation3 + $0x191] sm:$0x1] %vm2580, 0.0
      %2616 = vst.msk [vmem:[#allocation3 + $0x1a9] sm:$0x1] %vm2580, 0.0
      %s2617 = scalar_lea.vmem [#allocation3], 24
      %2618 = vst.msk [vmem:[%s2617 + $0x1] sm:$0xff] %vm2571, %v2539
      %2619 = vst.msk [vmem:[%s2617 + $0x9] sm:$0xff] %vm2571, %v2540
      %2620 = vst.msk [vmem:[%s2617 + $0x19] sm:$0xff] %vm2571, %v2541
      %2621 = vst.msk [vmem:[%s2617 + $0x21] sm:$0xff] %vm2571, %v2542
      %2622 = vst.msk [vmem:[%s2617 + $0x31] sm:$0xff] %vm2571, %v2543
      %2623 = vst.msk [vmem:[%s2617 + $0x39] sm:$0xff] %vm2571, %v2544
      %2624 = vst.msk [vmem:[%s2617 + $0x49] sm:$0xff] %vm2571, %v2545
      %2625 = vst.msk [vmem:[%s2617 + $0x51] sm:$0xff] %vm2571, %v2546
      %2626 = vst.msk [vmem:[%s2617 + $0x61] sm:$0xff] %vm2571, %v2547
      %2627 = vst.msk [vmem:[%s2617 + $0x69] sm:$0xff] %vm2571, %v2548
      %2628 = vst.msk [vmem:[%s2617 + $0x79] sm:$0xff] %vm2571, %v2549
      %2629 = vst.msk [vmem:[%s2617 + $0x81] sm:$0xff] %vm2571, %v2550
      %2630 = vst.msk [vmem:[%s2617 + $0x91] sm:$0xff] %vm2571, %v2551
      %2631 = vst.msk [vmem:[%s2617 + $0x99] sm:$0xff] %vm2571, %v2552
      %2632 = vst.msk [vmem:[%s2617 + $0xa9] sm:$0xff] %vm2571, %v2553
      %2633 = vst.msk [vmem:[%s2617 + $0xb1] sm:$0xff] %vm2571, %v2554
      %2634 = vst.msk [vmem:[%s2617 + $0xc1] sm:$0xff] %vm2571, %v2555
      %2635 = vst.msk [vmem:[%s2617 + $0xc9] sm:$0xff] %vm2571, %v2556
      %2636 = vst.msk [vmem:[%s2617 + $0xd9] sm:$0xff] %vm2571, %v2557
      %2637 = vst.msk [vmem:[%s2617 + $0xe1] sm:$0xff] %vm2571, %v2558
      %2638 = vst.msk [vmem:[%s2617 + $0xf1] sm:$0xff] %vm2571, %v2559
      %2639 = vst.msk [vmem:[%s2617 + $0xf9] sm:$0xff] %vm2571, %v2560
      %2640 = vst.msk [vmem:[%s2617 + $0x109] sm:$0xff] %vm2571, %v2561
      %2641 = vst.msk [vmem:[%s2617 + $0x111] sm:$0xff] %vm2571, %v2562
      %2642 = vst.msk [vmem:[%s2617 + $0x121] sm:$0xff] %vm2571, %v2563
      %2643 = vst.msk [vmem:[%s2617 + $0x129] sm:$0xff] %vm2571, %v2564
      %2644 = vst.msk [vmem:[%s2617 + $0x139] sm:$0xff] %vm2571, %v2565
      %2645 = vst.msk [vmem:[%s2617 + $0x141] sm:$0xff] %vm2571, %v2566
      %2646 = vst.msk [vmem:[%s2617 + $0x151] sm:$0xff] %vm2571, %v2567
      %2647 = vst.msk [vmem:[%s2617 + $0x159] sm:$0xff] %vm2571, %v2568
      %2648 = vst.msk [vmem:[%s2617 + $0x169] sm:$0xff] %vm2571, %v2569
      %2649 = vst.msk [vmem:[%s2617 + $0x171] sm:$0xff] %vm2571, %v2570
      %v2650 = vld [vmem:[#allocation3] sm:$0xff]
      %v2651 = vld [vmem:[#allocation3 + $0x8] sm:$0xff]
      %v2652 = vld [vmem:[#allocation3 + $0x30] sm:$0xff]
      %v2653 = vld [vmem:[#allocation3 + $0x38] sm:$0xff]
      %v2654 = vld [vmem:[#allocation3 + $0x60] sm:$0xff]
      %v2655 = vld [vmem:[#allocation3 + $0x68] sm:$0xff]
      %v2656 = vld [vmem:[#allocation3 + $0x90] sm:$0xff]
      %v2657 = vld [vmem:[#allocation3 + $0x98] sm:$0xff]
      %v2658 = vld [vmem:[#allocation3 + $0xc0] sm:$0xff]
      %v2659 = vld [vmem:[#allocation3 + $0xc8] sm:$0xff]
      %v2660 = vld [vmem:[#allocation3 + $0xf0] sm:$0xff]
      %v2661 = vld [vmem:[#allocation3 + $0xf8] sm:$0xff]
      %v2662 = vld [vmem:[#allocation3 + $0x120] sm:$0xff]
      %v2663 = vld [vmem:[#allocation3 + $0x128] sm:$0xff]
      %v2664 = vld [vmem:[#allocation3 + $0x150] sm:$0xff]
      %v2665 = vld [vmem:[#allocation3 + $0x158] sm:$0xff]
      %2666 = vst.msk [vmem:[#allocation5] sm:$0xff] %vm2571, %v2650
      %2667 = vst.msk [vmem:[#allocation5 + $0x8] sm:$0xff] %vm2571, %v2651
      %2668 = vst.msk [vmem:[#allocation5 + $0x10] sm:$0xff] %vm2571, %v2652
      %2669 = vst.msk [vmem:[#allocation5 + $0x18] sm:$0xff] %vm2571, %v2653
      %2670 = vst.msk [vmem:[#allocation5 + $0x20] sm:$0xff] %vm2571, %v2654
      %2671 = vst.msk [vmem:[#allocation5 + $0x28] sm:$0xff] %vm2571, %v2655
      %2672 = vst.msk [vmem:[#allocation5 + $0x30] sm:$0xff] %vm2571, %v2656
      %2673 = vst.msk [vmem:[#allocation5 + $0x38] sm:$0xff] %vm2571, %v2657
      %2674 = vst.msk [vmem:[#allocation5 + $0x40] sm:$0xff] %vm2571, %v2658
      %2675 = vst.msk [vmem:[#allocation5 + $0x48] sm:$0xff] %vm2571, %v2659
      %2676 = vst.msk [vmem:[#allocation5 + $0x50] sm:$0xff] %vm2571, %v2660
      %2677 = vst.msk [vmem:[#allocation5 + $0x58] sm:$0xff] %vm2571, %v2661
      %2678 = vst.msk [vmem:[#allocation5 + $0x60] sm:$0xff] %vm2571, %v2662
      %2679 = vst.msk [vmem:[#allocation5 + $0x68] sm:$0xff] %vm2571, %v2663
      %2680 = vst.msk [vmem:[#allocation5 + $0x70] sm:$0xff] %vm2571, %v2664
      %2681 = vst.msk [vmem:[#allocation5 + $0x78] sm:$0xff] %vm2571, %v2665
      %v2682 = vld [vmem:[#allocation3 + $0x1] sm:$0xff]
      %v2683 = vld [vmem:[#allocation3 + $0x9] sm:$0xff]
      %v2684 = vld [vmem:[#allocation3 + $0x31] sm:$0xff]
      %v2685 = vld [vmem:[#allocation3 + $0x39] sm:$0xff]
      %v2686 = vld [vmem:[#allocation3 + $0x61] sm:$0xff]
      %v2687 = vld [vmem:[#allocation3 + $0x69] sm:$0xff]
      %v2688 = vld [vmem:[#allocation3 + $0x91] sm:$0xff]
      %v2689 = vld [vmem:[#allocation3 + $0x99] sm:$0xff]
      %v2690 = vld [vmem:[#allocation3 + $0xc1] sm:$0xff]
      %v2691 = vld [vmem:[#allocation3 + $0xc9] sm:$0xff]
      %v2692 = vld [vmem:[#allocation3 + $0xf1] sm:$0xff]
      %v2693 = vld [vmem:[#allocation3 + $0xf9] sm:$0xff]
      %v2694 = vld [vmem:[#allocation3 + $0x121] sm:$0xff]
      %v2695 = vld [vmem:[#allocation3 + $0x129] sm:$0xff]
      %v2696 = vld [vmem:[#allocation3 + $0x151] sm:$0xff]
      %v2697 = vld [vmem:[#allocation3 + $0x159] sm:$0xff]
      %2714 = vrot.lane.b32.xlu0 %v2682, 8
      %v2715 = vpop.permute.xlu0 %2714
      %2716 = vrot.lane.b32.xlu0 %v2683, 8
      %v2717 = vpop.permute.xlu0 %2716
      %2718 = vrot.lane.b32.xlu0 %v2684, 8
      %v2719 = vpop.permute.xlu0 %2718
      %2720 = vrot.lane.b32.xlu0 %v2685, 8
      %v2721 = vpop.permute.xlu0 %2720
      %2722 = vrot.lane.b32.xlu0 %v2686, 8
      %v2723 = vpop.permute.xlu0 %2722
      %2724 = vrot.lane.b32.xlu0 %v2687, 8
      %v2725 = vpop.permute.xlu0 %2724
      %2726 = vrot.lane.b32.xlu0 %v2688, 8
      %v2727 = vpop.permute.xlu0 %2726
      %2728 = vrot.lane.b32.xlu0 %v2689, 8
      %v2729 = vpop.permute.xlu0 %2728
      %2730 = vrot.lane.b32.xlu0 %v2690, 8
      %v2731 = vpop.permute.xlu0 %2730
      %2732 = vrot.lane.b32.xlu0 %v2691, 8
      %v2733 = vpop.permute.xlu0 %2732
      %2734 = vrot.lane.b32.xlu0 %v2692, 8
      %v2735 = vpop.permute.xlu0 %2734
      %2736 = vrot.lane.b32.xlu0 %v2693, 8
      %v2737 = vpop.permute.xlu0 %2736
      %2738 = vrot.lane.b32.xlu0 %v2694, 8
      %v2739 = vpop.permute.xlu0 %2738
      %2740 = vrot.lane.b32.xlu0 %v2695, 8
      %v2741 = vpop.permute.xlu0 %2740
      %2742 = vrot.lane.b32.xlu0 %v2696, 8
      %v2743 = vpop.permute.xlu0 %2742
      %2744 = vrot.lane.b32.xlu0 %v2697, 8
      %v2745 = vpop.permute.xlu0 %2744
      %vm2762 = vcmask 130112
      %2763 = vst.msk [vmem:[#allocation5] sm:$0xff] %vm2762, %v2715
      %2764 = vst.msk [vmem:[#allocation5 + $0x8] sm:$0xff] %vm2762, %v2717
      %2765 = vst.msk [vmem:[#allocation5 + $0x10] sm:$0xff] %vm2762, %v2719
      %2766 = vst.msk [vmem:[#allocation5 + $0x18] sm:$0xff] %vm2762, %v2721
      %2767 = vst.msk [vmem:[#allocation5 + $0x20] sm:$0xff] %vm2762, %v2723
      %2768 = vst.msk [vmem:[#allocation5 + $0x28] sm:$0xff] %vm2762, %v2725
      %2769 = vst.msk [vmem:[#allocation5 + $0x30] sm:$0xff] %vm2762, %v2727
      %2770 = vst.msk [vmem:[#allocation5 + $0x38] sm:$0xff] %vm2762, %v2729
      %2771 = vst.msk [vmem:[#allocation5 + $0x40] sm:$0xff] %vm2762, %v2731
      %2772 = vst.msk [vmem:[#allocation5 + $0x48] sm:$0xff] %vm2762, %v2733
      %2773 = vst.msk [vmem:[#allocation5 + $0x50] sm:$0xff] %vm2762, %v2735
      %2774 = vst.msk [vmem:[#allocation5 + $0x58] sm:$0xff] %vm2762, %v2737
      %2775 = vst.msk [vmem:[#allocation5 + $0x60] sm:$0xff] %vm2762, %v2739
      %2776 = vst.msk [vmem:[#allocation5 + $0x68] sm:$0xff] %vm2762, %v2741
      %2777 = vst.msk [vmem:[#allocation5 + $0x70] sm:$0xff] %vm2762, %v2743
      %2778 = vst.msk [vmem:[#allocation5 + $0x78] sm:$0xff] %vm2762, %v2745
      %v2779 = vld [vmem:[#allocation3 + $0x2] sm:$0xff]
      %v2780 = vld [vmem:[#allocation3 + $0xa] sm:$0xff]
      %v2781 = vld [vmem:[#allocation3 + $0x32] sm:$0xff]
      %v2782 = vld [vmem:[#allocation3 + $0x3a] sm:$0xff]
      %v2783 = vld [vmem:[#allocation3 + $0x62] sm:$0xff]
      %v2784 = vld [vmem:[#allocation3 + $0x6a] sm:$0xff]
      %v2785 = vld [vmem:[#allocation3 + $0x92] sm:$0xff]
      %v2786 = vld [vmem:[#allocation3 + $0x9a] sm:$0xff]
      %v2787 = vld [vmem:[#allocation3 + $0xc2] sm:$0xff]
      %v2788 = vld [vmem:[#allocation3 + $0xca] sm:$0xff]
      %v2789 = vld [vmem:[#allocation3 + $0xf2] sm:$0xff]
      %v2790 = vld [vmem:[#allocation3 + $0xfa] sm:$0xff]
      %v2791 = vld [vmem:[#allocation3 + $0x122] sm:$0xff]
      %v2792 = vld [vmem:[#allocation3 + $0x12a] sm:$0xff]
      %v2793 = vld [vmem:[#allocation3 + $0x152] sm:$0xff]
      %v2794 = vld [vmem:[#allocation3 + $0x15a] sm:$0xff]
      %2811 = vrot.lane.b32.xlu0 %v2779, 16
      %v2812 = vpop.permute.xlu0 %2811
      %2813 = vrot.lane.b32.xlu0 %v2780, 16
      %v2814 = vpop.permute.xlu0 %2813
      %2815 = vrot.lane.b32.xlu0 %v2781, 16
      %v2816 = vpop.permute.xlu0 %2815
      %2817 = vrot.lane.b32.xlu0 %v2782, 16
      %v2818 = vpop.permute.xlu0 %2817
      %2819 = vrot.lane.b32.xlu0 %v2783, 16
      %v2820 = vpop.permute.xlu0 %2819
      %2821 = vrot.lane.b32.xlu0 %v2784, 16
      %v2822 = vpop.permute.xlu0 %2821
      %2823 = vrot.lane.b32.xlu0 %v2785, 16
      %v2824 = vpop.permute.xlu0 %2823
      %2825 = vrot.lane.b32.xlu0 %v2786, 16
      %v2826 = vpop.permute.xlu0 %2825
      %2827 = vrot.lane.b32.xlu0 %v2787, 16
      %v2828 = vpop.permute.xlu0 %2827
      %2829 = vrot.lane.b32.xlu0 %v2788, 16
      %v2830 = vpop.permute.xlu0 %2829
      %2831 = vrot.lane.b32.xlu0 %v2789, 16
      %v2832 = vpop.permute.xlu0 %2831
      %2833 = vrot.lane.b32.xlu0 %v2790, 16
      %v2834 = vpop.permute.xlu0 %2833
      %2835 = vrot.lane.b32.xlu0 %v2791, 16
      %v2836 = vpop.permute.xlu0 %2835
      %2837 = vrot.lane.b32.xlu0 %v2792, 16
      %v2838 = vpop.permute.xlu0 %2837
      %2839 = vrot.lane.b32.xlu0 %v2793, 16
      %v2840 = vpop.permute.xlu0 %2839
      %2841 = vrot.lane.b32.xlu0 %v2794, 16
      %v2842 = vpop.permute.xlu0 %2841
      %vm2859 = vcmask 195712
      %2860 = vst.msk [vmem:[#allocation5] sm:$0xff] %vm2859, %v2812
      %2861 = vst.msk [vmem:[#allocation5 + $0x8] sm:$0xff] %vm2859, %v2814
      %2862 = vst.msk [vmem:[#allocation5 + $0x10] sm:$0xff] %vm2859, %v2816
      %2863 = vst.msk [vmem:[#allocation5 + $0x18] sm:$0xff] %vm2859, %v2818
      %2864 = vst.msk [vmem:[#allocation5 + $0x20] sm:$0xff] %vm2859, %v2820
      %2865 = vst.msk [vmem:[#allocation5 + $0x28] sm:$0xff] %vm2859, %v2822
      %2866 = vst.msk [vmem:[#allocation5 + $0x30] sm:$0xff] %vm2859, %v2824
      %2867 = vst.msk [vmem:[#allocation5 + $0x38] sm:$0xff] %vm2859, %v2826
      %2868 = vst.msk [vmem:[#allocation5 + $0x40] sm:$0xff] %vm2859, %v2828
      %2869 = vst.msk [vmem:[#allocation5 + $0x48] sm:$0xff] %vm2859, %v2830
      %2870 = vst.msk [vmem:[#allocation5 + $0x50] sm:$0xff] %vm2859, %v2832
      %2871 = vst.msk [vmem:[#allocation5 + $0x58] sm:$0xff] %vm2859, %v2834
      %2872 = vst.msk [vmem:[#allocation5 + $0x60] sm:$0xff] %vm2859, %v2836
      %2873 = vst.msk [vmem:[#allocation5 + $0x68] sm:$0xff] %vm2859, %v2838
      %2874 = vst.msk [vmem:[#allocation5 + $0x70] sm:$0xff] %vm2859, %v2840
      %2875 = vst.msk [vmem:[#allocation5 + $0x78] sm:$0xff] %vm2859, %v2842
      %v2876 = vld [vmem:[%s2617] sm:$0xff]
      %v2877 = vld [vmem:[%s2617 + $0x8] sm:$0xff]
      %v2878 = vld [vmem:[%s2617 + $0x30] sm:$0xff]
      %v2879 = vld [vmem:[%s2617 + $0x38] sm:$0xff]
      %v2880 = vld [vmem:[%s2617 + $0x60] sm:$0xff]
      %v2881 = vld [vmem:[%s2617 + $0x68] sm:$0xff]
      %v2882 = vld [vmem:[%s2617 + $0x90] sm:$0xff]
      %v2883 = vld [vmem:[%s2617 + $0x98] sm:$0xff]
      %v2884 = vld [vmem:[%s2617 + $0xc0] sm:$0xff]
      %v2885 = vld [vmem:[%s2617 + $0xc8] sm:$0xff]
      %v2886 = vld [vmem:[%s2617 + $0xf0] sm:$0xff]
      %v2887 = vld [vmem:[%s2617 + $0xf8] sm:$0xff]
      %v2888 = vld [vmem:[%s2617 + $0x120] sm:$0xff]
      %v2889 = vld [vmem:[%s2617 + $0x128] sm:$0xff]
      %v2890 = vld [vmem:[%s2617 + $0x150] sm:$0xff]
      %v2891 = vld [vmem:[%s2617 + $0x158] sm:$0xff]
      %2908 = vrot.lane.b32.xlu0 %v2876, 24
      %v2909 = vpop.permute.xlu0 %2908
      %2910 = vrot.lane.b32.xlu0 %v2877, 24
      %v2911 = vpop.permute.xlu0 %2910
      %2912 = vrot.lane.b32.xlu0 %v2878, 24
      %v2913 = vpop.permute.xlu0 %2912
      %2914 = vrot.lane.b32.xlu0 %v2879, 24
      %v2915 = vpop.permute.xlu0 %2914
      %2916 = vrot.lane.b32.xlu0 %v2880, 24
      %v2917 = vpop.permute.xlu0 %2916
      %2918 = vrot.lane.b32.xlu0 %v2881, 24
      %v2919 = vpop.permute.xlu0 %2918
      %2920 = vrot.lane.b32.xlu0 %v2882, 24
      %v2921 = vpop.permute.xlu0 %2920
      %2922 = vrot.lane.b32.xlu0 %v2883, 24
      %v2923 = vpop.permute.xlu0 %2922
      %2924 = vrot.lane.b32.xlu0 %v2884, 24
      %v2925 = vpop.permute.xlu0 %2924
      %2926 = vrot.lane.b32.xlu0 %v2885, 24
      %v2927 = vpop.permute.xlu0 %2926
      %2928 = vrot.lane.b32.xlu0 %v2886, 24
      %v2929 = vpop.permute.xlu0 %2928
      %2930 = vrot.lane.b32.xlu0 %v2887, 24
      %v2931 = vpop.permute.xlu0 %2930
      %2932 = vrot.lane.b32.xlu0 %v2888, 24
      %v2933 = vpop.permute.xlu0 %2932
      %2934 = vrot.lane.b32.xlu0 %v2889, 24
      %v2935 = vpop.permute.xlu0 %2934
      %2936 = vrot.lane.b32.xlu0 %v2890, 24
      %v2937 = vpop.permute.xlu0 %2936
      %2938 = vrot.lane.b32.xlu0 %v2891, 24
      %v2939 = vpop.permute.xlu0 %2938
      %vm2956 = vcmask 261312
      %2957 = vst.msk [vmem:[#allocation5] sm:$0xff] %vm2956, %v2909
      %2958 = vst.msk [vmem:[#allocation5 + $0x8] sm:$0xff] %vm2956, %v2911
      %2959 = vst.msk [vmem:[#allocation5 + $0x10] sm:$0xff] %vm2956, %v2913
      %2960 = vst.msk [vmem:[#allocation5 + $0x18] sm:$0xff] %vm2956, %v2915
      %2961 = vst.msk [vmem:[#allocation5 + $0x20] sm:$0xff] %vm2956, %v2917
      %2962 = vst.msk [vmem:[#allocation5 + $0x28] sm:$0xff] %vm2956, %v2919
      %2963 = vst.msk [vmem:[#allocation5 + $0x30] sm:$0xff] %vm2956, %v2921
      %2964 = vst.msk [vmem:[#allocation5 + $0x38] sm:$0xff] %vm2956, %v2923
      %2965 = vst.msk [vmem:[#allocation5 + $0x40] sm:$0xff] %vm2956, %v2925
      %2966 = vst.msk [vmem:[#allocation5 + $0x48] sm:$0xff] %vm2956, %v2927
      %2967 = vst.msk [vmem:[#allocation5 + $0x50] sm:$0xff] %vm2956, %v2929
      %2968 = vst.msk [vmem:[#allocation5 + $0x58] sm:$0xff] %vm2956, %v2931
      %2969 = vst.msk [vmem:[#allocation5 + $0x60] sm:$0xff] %vm2956, %v2933
      %2970 = vst.msk [vmem:[#allocation5 + $0x68] sm:$0xff] %vm2956, %v2935
      %2971 = vst.msk [vmem:[#allocation5 + $0x70] sm:$0xff] %vm2956, %v2937
      %2972 = vst.msk [vmem:[#allocation5 + $0x78] sm:$0xff] %vm2956, %v2939
      %v2973 = vld [vmem:[%s2617 + $0x1] sm:$0xff]
      %v2974 = vld [vmem:[%s2617 + $0x9] sm:$0xff]
      %v2975 = vld [vmem:[%s2617 + $0x31] sm:$0xff]
      %v2976 = vld [vmem:[%s2617 + $0x39] sm:$0xff]
      %v2977 = vld [vmem:[%s2617 + $0x61] sm:$0xff]
      %v2978 = vld [vmem:[%s2617 + $0x69] sm:$0xff]
      %v2979 = vld [vmem:[%s2617 + $0x91] sm:$0xff]
      %v2980 = vld [vmem:[%s2617 + $0x99] sm:$0xff]
      %v2981 = vld [vmem:[%s2617 + $0xc1] sm:$0xff]
      %v2982 = vld [vmem:[%s2617 + $0xc9] sm:$0xff]
      %v2983 = vld [vmem:[%s2617 + $0xf1] sm:$0xff]
      %v2984 = vld [vmem:[%s2617 + $0xf9] sm:$0xff]
      %v2985 = vld [vmem:[%s2617 + $0x121] sm:$0xff]
      %v2986 = vld [vmem:[%s2617 + $0x129] sm:$0xff]
      %v2987 = vld [vmem:[%s2617 + $0x151] sm:$0xff]
      %v2988 = vld [vmem:[%s2617 + $0x159] sm:$0xff]
      %3005 = vrot.lane.b32.xlu0 %v2973, 32
      %v3006 = vpop.permute.xlu0 %3005
      %3007 = vrot.lane.b32.xlu0 %v2974, 32
      %v3008 = vpop.permute.xlu0 %3007
      %3009 = vrot.lane.b32.xlu0 %v2975, 32
      %v3010 = vpop.permute.xlu0 %3009
      %3011 = vrot.lane.b32.xlu0 %v2976, 32
      %v3012 = vpop.permute.xlu0 %3011
      %3013 = vrot.lane.b32.xlu0 %v2977, 32
      %v3014 = vpop.permute.xlu0 %3013
      %3015 = vrot.lane.b32.xlu0 %v2978, 32
      %v3016 = vpop.permute.xlu0 %3015
      %3017 = vrot.lane.b32.xlu0 %v2979, 32
      %v3018 = vpop.permute.xlu0 %3017
      %3019 = vrot.lane.b32.xlu0 %v2980, 32
      %v3020 = vpop.permute.xlu0 %3019
      %3021 = vrot.lane.b32.xlu0 %v2981, 32
      %v3022 = vpop.permute.xlu0 %3021
      %3023 = vrot.lane.b32.xlu0 %v2982, 32
      %v3024 = vpop.permute.xlu0 %3023
      %3025 = vrot.lane.b32.xlu0 %v2983, 32
      %v3026 = vpop.permute.xlu0 %3025
      %3027 = vrot.lane.b32.xlu0 %v2984, 32
      %v3028 = vpop.permute.xlu0 %3027
      %3029 = vrot.lane.b32.xlu0 %v2985, 32
      %v3030 = vpop.permute.xlu0 %3029
      %3031 = vrot.lane.b32.xlu0 %v2986, 32
      %v3032 = vpop.permute.xlu0 %3031
      %3033 = vrot.lane.b32.xlu0 %v2987, 32
      %v3034 = vpop.permute.xlu0 %3033
      %3035 = vrot.lane.b32.xlu0 %v2988, 32
      %v3036 = vpop.permute.xlu0 %3035
      %vm3053 = vcmask 326912
      %3054 = vst.msk [vmem:[#allocation5] sm:$0xff] %vm3053, %v3006
      %3055 = vst.msk [vmem:[#allocation5 + $0x8] sm:$0xff] %vm3053, %v3008
      %3056 = vst.msk [vmem:[#allocation5 + $0x10] sm:$0xff] %vm3053, %v3010
      %3057 = vst.msk [vmem:[#allocation5 + $0x18] sm:$0xff] %vm3053, %v3012
      %3058 = vst.msk [vmem:[#allocation5 + $0x20] sm:$0xff] %vm3053, %v3014
      %3059 = vst.msk [vmem:[#allocation5 + $0x28] sm:$0xff] %vm3053, %v3016
      %3060 = vst.msk [vmem:[#allocation5 + $0x30] sm:$0xff] %vm3053, %v3018
      %3061 = vst.msk [vmem:[#allocation5 + $0x38] sm:$0xff] %vm3053, %v3020
      %3062 = vst.msk [vmem:[#allocation5 + $0x40] sm:$0xff] %vm3053, %v3022
      %3063 = vst.msk [vmem:[#allocation5 + $0x48] sm:$0xff] %vm3053, %v3024
      %3064 = vst.msk [vmem:[#allocation5 + $0x50] sm:$0xff] %vm3053, %v3026
      %3065 = vst.msk [vmem:[#allocation5 + $0x58] sm:$0xff] %vm3053, %v3028
      %3066 = vst.msk [vmem:[#allocation5 + $0x60] sm:$0xff] %vm3053, %v3030
      %3067 = vst.msk [vmem:[#allocation5 + $0x68] sm:$0xff] %vm3053, %v3032
      %3068 = vst.msk [vmem:[#allocation5 + $0x70] sm:$0xff] %vm3053, %v3034
      %3069 = vst.msk [vmem:[#allocation5 + $0x78] sm:$0xff] %vm3053, %v3036
      %v3070 = vld [vmem:[%s2617 + $0x2] sm:$0xff]
      %v3071 = vld [vmem:[%s2617 + $0xa] sm:$0xff]
      %v3072 = vld [vmem:[%s2617 + $0x32] sm:$0xff]
      %v3073 = vld [vmem:[%s2617 + $0x3a] sm:$0xff]
      %v3074 = vld [vmem:[%s2617 + $0x62] sm:$0xff]
      %v3075 = vld [vmem:[%s2617 + $0x6a] sm:$0xff]
      %v3076 = vld [vmem:[%s2617 + $0x92] sm:$0xff]
      %v3077 = vld [vmem:[%s2617 + $0x9a] sm:$0xff]
      %v3078 = vld [vmem:[%s2617 + $0xc2] sm:$0xff]
      %v3079 = vld [vmem:[%s2617 + $0xca] sm:$0xff]
      %v3080 = vld [vmem:[%s2617 + $0xf2] sm:$0xff]
      %v3081 = vld [vmem:[%s2617 + $0xfa] sm:$0xff]
      %v3082 = vld [vmem:[%s2617 + $0x122] sm:$0xff]
      %v3083 = vld [vmem:[%s2617 + $0x12a] sm:$0xff]
      %v3084 = vld [vmem:[%s2617 + $0x152] sm:$0xff]
      %v3085 = vld [vmem:[%s2617 + $0x15a] sm:$0xff]
      %3102 = vrot.lane.b32.xlu0 %v3070, 40
      %v3103 = vpop.permute.xlu0 %3102
      %3104 = vrot.lane.b32.xlu0 %v3071, 40
      %v3105 = vpop.permute.xlu0 %3104
      %3106 = vrot.lane.b32.xlu0 %v3072, 40
      %v3107 = vpop.permute.xlu0 %3106
      %3108 = vrot.lane.b32.xlu0 %v3073, 40
      %v3109 = vpop.permute.xlu0 %3108
      %3110 = vrot.lane.b32.xlu0 %v3074, 40
      %v3111 = vpop.permute.xlu0 %3110
      %3112 = vrot.lane.b32.xlu0 %v3075, 40
      %v3113 = vpop.permute.xlu0 %3112
      %3114 = vrot.lane.b32.xlu0 %v3076, 40
      %v3115 = vpop.permute.xlu0 %3114
      %3116 = vrot.lane.b32.xlu0 %v3077, 40
      %v3117 = vpop.permute.xlu0 %3116
      %3118 = vrot.lane.b32.xlu0 %v3078, 40
      %v3119 = vpop.permute.xlu0 %3118
      %3120 = vrot.lane.b32.xlu0 %v3079, 40
      %v3121 = vpop.permute.xlu0 %3120
      %3122 = vrot.lane.b32.xlu0 %v3080, 40
      %v3123 = vpop.permute.xlu0 %3122
      %3124 = vrot.lane.b32.xlu0 %v3081, 40
      %v3125 = vpop.permute.xlu0 %3124
      %3126 = vrot.lane.b32.xlu0 %v3082, 40
      %v3127 = vpop.permute.xlu0 %3126
      %3128 = vrot.lane.b32.xlu0 %v3083, 40
      %v3129 = vpop.permute.xlu0 %3128
      %3130 = vrot.lane.b32.xlu0 %v3084, 40
      %v3131 = vpop.permute.xlu0 %3130
      %3132 = vrot.lane.b32.xlu0 %v3085, 40
      %v3133 = vpop.permute.xlu0 %3132
      %vm3150 = vcmask 392512
      %3151 = vst.msk [vmem:[#allocation5] sm:$0xff] %vm3150, %v3103
      %3152 = vst.msk [vmem:[#allocation5 + $0x8] sm:$0xff] %vm3150, %v3105
      %3153 = vst.msk [vmem:[#allocation5 + $0x10] sm:$0xff] %vm3150, %v3107
      %3154 = vst.msk [vmem:[#allocation5 + $0x18] sm:$0xff] %vm3150, %v3109
      %3155 = vst.msk [vmem:[#allocation5 + $0x20] sm:$0xff] %vm3150, %v3111
      %3156 = vst.msk [vmem:[#allocation5 + $0x28] sm:$0xff] %vm3150, %v3113
      %3157 = vst.msk [vmem:[#allocation5 + $0x30] sm:$0xff] %vm3150, %v3115
      %3158 = vst.msk [vmem:[#allocation5 + $0x38] sm:$0xff] %vm3150, %v3117
      %3159 = vst.msk [vmem:[#allocation5 + $0x40] sm:$0xff] %vm3150, %v3119
      %3160 = vst.msk [vmem:[#allocation5 + $0x48] sm:$0xff] %vm3150, %v3121
      %3161 = vst.msk [vmem:[#allocation5 + $0x50] sm:$0xff] %vm3150, %v3123
      %3162 = vst.msk [vmem:[#allocation5 + $0x58] sm:$0xff] %vm3150, %v3125
      %3163 = vst.msk [vmem:[#allocation5 + $0x60] sm:$0xff] %vm3150, %v3127
      %3164 = vst.msk [vmem:[#allocation5 + $0x68] sm:$0xff] %vm3150, %v3129
      %3165 = vst.msk [vmem:[#allocation5 + $0x70] sm:$0xff] %vm3150, %v3131
      %3166 = vst.msk [vmem:[#allocation5 + $0x78] sm:$0xff] %vm3150, %v3133
      %s3167 = scalar_lea.vmem [#allocation3], 48
      %v3168 = vld [vmem:[%s3167] sm:$0xff]
      %v3169 = vld [vmem:[%s3167 + $0x8] sm:$0xff]
      %v3170 = vld [vmem:[%s3167 + $0x30] sm:$0xff]
      %v3171 = vld [vmem:[%s3167 + $0x38] sm:$0xff]
      %v3172 = vld [vmem:[%s3167 + $0x60] sm:$0xff]
      %v3173 = vld [vmem:[%s3167 + $0x68] sm:$0xff]
      %v3174 = vld [vmem:[%s3167 + $0x90] sm:$0xff]
      %v3175 = vld [vmem:[%s3167 + $0x98] sm:$0xff]
      %v3176 = vld [vmem:[%s3167 + $0xc0] sm:$0xff]
      %v3177 = vld [vmem:[%s3167 + $0xc8] sm:$0xff]
      %v3178 = vld [vmem:[%s3167 + $0xf0] sm:$0xff]
      %v3179 = vld [vmem:[%s3167 + $0xf8] sm:$0xff]
      %v3180 = vld [vmem:[%s3167 + $0x120] sm:$0xff]
      %v3181 = vld [vmem:[%s3167 + $0x128] sm:$0xff]
      %v3182 = vld [vmem:[%s3167 + $0x150] sm:$0xff]
      %v3183 = vld [vmem:[%s3167 + $0x158] sm:$0xff]
      %3200 = vrot.lane.b32.xlu0 %v3168, 48
      %v3201 = vpop.permute.xlu0 %3200
      %3202 = vrot.lane.b32.xlu0 %v3169, 48
      %v3203 = vpop.permute.xlu0 %3202
      %3204 = vrot.lane.b32.xlu0 %v3170, 48
      %v3205 = vpop.permute.xlu0 %3204
      %3206 = vrot.lane.b32.xlu0 %v3171, 48
      %v3207 = vpop.permute.xlu0 %3206
      %3208 = vrot.lane.b32.xlu0 %v3172, 48
      %v3209 = vpop.permute.xlu0 %3208
      %3210 = vrot.lane.b32.xlu0 %v3173, 48
      %v3211 = vpop.permute.xlu0 %3210
      %3212 = vrot.lane.b32.xlu0 %v3174, 48
      %v3213 = vpop.permute.xlu0 %3212
      %3214 = vrot.lane.b32.xlu0 %v3175, 48
      %v3215 = vpop.permute.xlu0 %3214
      %3216 = vrot.lane.b32.xlu0 %v3176, 48
      %v3217 = vpop.permute.xlu0 %3216
      %3218 = vrot.lane.b32.xlu0 %v3177, 48
      %v3219 = vpop.permute.xlu0 %3218
      %3220 = vrot.lane.b32.xlu0 %v3178, 48
      %v3221 = vpop.permute.xlu0 %3220
      %3222 = vrot.lane.b32.xlu0 %v3179, 48
      %v3223 = vpop.permute.xlu0 %3222
      %3224 = vrot.lane.b32.xlu0 %v3180, 48
      %v3225 = vpop.permute.xlu0 %3224
      %3226 = vrot.lane.b32.xlu0 %v3181, 48
      %v3227 = vpop.permute.xlu0 %3226
      %3228 = vrot.lane.b32.xlu0 %v3182, 48
      %v3229 = vpop.permute.xlu0 %3228
      %3230 = vrot.lane.b32.xlu0 %v3183, 48
      %v3231 = vpop.permute.xlu0 %3230
      %vm3248 = vcmask 458112
      %3249 = vst.msk [vmem:[#allocation5] sm:$0xff] %vm3248, %v3201
      %3250 = vst.msk [vmem:[#allocation5 + $0x8] sm:$0xff] %vm3248, %v3203
      %3251 = vst.msk [vmem:[#allocation5 + $0x10] sm:$0xff] %vm3248, %v3205
      %3252 = vst.msk [vmem:[#allocation5 + $0x18] sm:$0xff] %vm3248, %v3207
      %3253 = vst.msk [vmem:[#allocation5 + $0x20] sm:$0xff] %vm3248, %v3209
      %3254 = vst.msk [vmem:[#allocation5 + $0x28] sm:$0xff] %vm3248, %v3211
      %3255 = vst.msk [vmem:[#allocation5 + $0x30] sm:$0xff] %vm3248, %v3213
      %3256 = vst.msk [vmem:[#allocation5 + $0x38] sm:$0xff] %vm3248, %v3215
      %3257 = vst.msk [vmem:[#allocation5 + $0x40] sm:$0xff] %vm3248, %v3217
      %3258 = vst.msk [vmem:[#allocation5 + $0x48] sm:$0xff] %vm3248, %v3219
      %3259 = vst.msk [vmem:[#allocation5 + $0x50] sm:$0xff] %vm3248, %v3221
      %3260 = vst.msk [vmem:[#allocation5 + $0x58] sm:$0xff] %vm3248, %v3223
      %3261 = vst.msk [vmem:[#allocation5 + $0x60] sm:$0xff] %vm3248, %v3225
      %3262 = vst.msk [vmem:[#allocation5 + $0x68] sm:$0xff] %vm3248, %v3227
      %3263 = vst.msk [vmem:[#allocation5 + $0x70] sm:$0xff] %vm3248, %v3229
      %3264 = vst.msk [vmem:[#allocation5 + $0x78] sm:$0xff] %vm3248, %v3231
      %v3265 = vld [vmem:[%s3167 + $0x1] sm:$0xff]
      %v3266 = vld [vmem:[%s3167 + $0x9] sm:$0xff]
      %v3267 = vld [vmem:[%s3167 + $0x31] sm:$0xff]
      %v3268 = vld [vmem:[%s3167 + $0x39] sm:$0xff]
      %v3269 = vld [vmem:[%s3167 + $0x61] sm:$0xff]
      %v3270 = vld [vmem:[%s3167 + $0x69] sm:$0xff]
      %v3271 = vld [vmem:[%s3167 + $0x91] sm:$0xff]
      %v3272 = vld [vmem:[%s3167 + $0x99] sm:$0xff]
      %v3273 = vld [vmem:[%s3167 + $0xc1] sm:$0xff]
      %v3274 = vld [vmem:[%s3167 + $0xc9] sm:$0xff]
      %v3275 = vld [vmem:[%s3167 + $0xf1] sm:$0xff]
      %v3276 = vld [vmem:[%s3167 + $0xf9] sm:$0xff]
      %v3277 = vld [vmem:[%s3167 + $0x121] sm:$0xff]
      %v3278 = vld [vmem:[%s3167 + $0x129] sm:$0xff]
      %v3279 = vld [vmem:[%s3167 + $0x151] sm:$0xff]
      %v3280 = vld [vmem:[%s3167 + $0x159] sm:$0xff]
      %3297 = vrot.lane.b32.xlu0 %v3265, 56
      %v3298 = vpop.permute.xlu0 %3297
      %3299 = vrot.lane.b32.xlu0 %v3266, 56
      %v3300 = vpop.permute.xlu0 %3299
      %3301 = vrot.lane.b32.xlu0 %v3267, 56
      %v3302 = vpop.permute.xlu0 %3301
      %3303 = vrot.lane.b32.xlu0 %v3268, 56
      %v3304 = vpop.permute.xlu0 %3303
      %3305 = vrot.lane.b32.xlu0 %v3269, 56
      %v3306 = vpop.permute.xlu0 %3305
      %3307 = vrot.lane.b32.xlu0 %v3270, 56
      %v3308 = vpop.permute.xlu0 %3307
      %3309 = vrot.lane.b32.xlu0 %v3271, 56
      %v3310 = vpop.permute.xlu0 %3309
      %3311 = vrot.lane.b32.xlu0 %v3272, 56
      %v3312 = vpop.permute.xlu0 %3311
      %3313 = vrot.lane.b32.xlu0 %v3273, 56
      %v3314 = vpop.permute.xlu0 %3313
      %3315 = vrot.lane.b32.xlu0 %v3274, 56
      %v3316 = vpop.permute.xlu0 %3315
      %3317 = vrot.lane.b32.xlu0 %v3275, 56
      %v3318 = vpop.permute.xlu0 %3317
      %3319 = vrot.lane.b32.xlu0 %v3276, 56
      %v3320 = vpop.permute.xlu0 %3319
      %3321 = vrot.lane.b32.xlu0 %v3277, 56
      %v3322 = vpop.permute.xlu0 %3321
      %3323 = vrot.lane.b32.xlu0 %v3278, 56
      %v3324 = vpop.permute.xlu0 %3323
      %3325 = vrot.lane.b32.xlu0 %v3279, 56
      %v3326 = vpop.permute.xlu0 %3325
      %3327 = vrot.lane.b32.xlu0 %v3280, 56
      %v3328 = vpop.permute.xlu0 %3327
      %vm3345 = vcmask 523712
      %3346 = vst.msk [vmem:[#allocation5] sm:$0xff] %vm3345, %v3298
      %3347 = vst.msk [vmem:[#allocation5 + $0x8] sm:$0xff] %vm3345, %v3300
      %3348 = vst.msk [vmem:[#allocation5 + $0x10] sm:$0xff] %vm3345, %v3302
      %3349 = vst.msk [vmem:[#allocation5 + $0x18] sm:$0xff] %vm3345, %v3304
      %3350 = vst.msk [vmem:[#allocation5 + $0x20] sm:$0xff] %vm3345, %v3306
      %3351 = vst.msk [vmem:[#allocation5 + $0x28] sm:$0xff] %vm3345, %v3308
      %3352 = vst.msk [vmem:[#allocation5 + $0x30] sm:$0xff] %vm3345, %v3310
      %3353 = vst.msk [vmem:[#allocation5 + $0x38] sm:$0xff] %vm3345, %v3312
      %3354 = vst.msk [vmem:[#allocation5 + $0x40] sm:$0xff] %vm3345, %v3314
      %3355 = vst.msk [vmem:[#allocation5 + $0x48] sm:$0xff] %vm3345, %v3316
      %3356 = vst.msk [vmem:[#allocation5 + $0x50] sm:$0xff] %vm3345, %v3318
      %3357 = vst.msk [vmem:[#allocation5 + $0x58] sm:$0xff] %vm3345, %v3320
      %3358 = vst.msk [vmem:[#allocation5 + $0x60] sm:$0xff] %vm3345, %v3322
      %3359 = vst.msk [vmem:[#allocation5 + $0x68] sm:$0xff] %vm3345, %v3324
      %3360 = vst.msk [vmem:[#allocation5 + $0x70] sm:$0xff] %vm3345, %v3326
      %3361 = vst.msk [vmem:[#allocation5 + $0x78] sm:$0xff] %vm3345, %v3328
      %v3362 = vld [vmem:[%s3167 + $0x2] sm:$0xff]
      %v3363 = vld [vmem:[%s3167 + $0xa] sm:$0xff]
      %v3364 = vld [vmem:[%s3167 + $0x32] sm:$0xff]
      %v3365 = vld [vmem:[%s3167 + $0x3a] sm:$0xff]
      %v3366 = vld [vmem:[%s3167 + $0x62] sm:$0xff]
      %v3367 = vld [vmem:[%s3167 + $0x6a] sm:$0xff]
      %v3368 = vld [vmem:[%s3167 + $0x92] sm:$0xff]
      %v3369 = vld [vmem:[%s3167 + $0x9a] sm:$0xff]
      %v3370 = vld [vmem:[%s3167 + $0xc2] sm:$0xff]
      %v3371 = vld [vmem:[%s3167 + $0xca] sm:$0xff]
      %v3372 = vld [vmem:[%s3167 + $0xf2] sm:$0xff]
      %v3373 = vld [vmem:[%s3167 + $0xfa] sm:$0xff]
      %v3374 = vld [vmem:[%s3167 + $0x122] sm:$0xff]
      %v3375 = vld [vmem:[%s3167 + $0x12a] sm:$0xff]
      %v3376 = vld [vmem:[%s3167 + $0x152] sm:$0xff]
      %v3377 = vld [vmem:[%s3167 + $0x15a] sm:$0xff]
      %3394 = vrot.lane.b32.xlu0 %v3362, 64
      %v3395 = vpop.permute.xlu0 %3394
      %3396 = vrot.lane.b32.xlu0 %v3363, 64
      %v3397 = vpop.permute.xlu0 %3396
      %3398 = vrot.lane.b32.xlu0 %v3364, 64
      %v3399 = vpop.permute.xlu0 %3398
      %3400 = vrot.lane.b32.xlu0 %v3365, 64
      %v3401 = vpop.permute.xlu0 %3400
      %3402 = vrot.lane.b32.xlu0 %v3366, 64
      %v3403 = vpop.permute.xlu0 %3402
      %3404 = vrot.lane.b32.xlu0 %v3367, 64
      %v3405 = vpop.permute.xlu0 %3404
      %3406 = vrot.lane.b32.xlu0 %v3368, 64
      %v3407 = vpop.permute.xlu0 %3406
      %3408 = vrot.lane.b32.xlu0 %v3369, 64
      %v3409 = vpop.permute.xlu0 %3408
      %3410 = vrot.lane.b32.xlu0 %v3370, 64
      %v3411 = vpop.permute.xlu0 %3410
      %3412 = vrot.lane.b32.xlu0 %v3371, 64
      %v3413 = vpop.permute.xlu0 %3412
      %3414 = vrot.lane.b32.xlu0 %v3372, 64
      %v3415 = vpop.permute.xlu0 %3414
      %3416 = vrot.lane.b32.xlu0 %v3373, 64
      %v3417 = vpop.permute.xlu0 %3416
      %3418 = vrot.lane.b32.xlu0 %v3374, 64
      %v3419 = vpop.permute.xlu0 %3418
      %3420 = vrot.lane.b32.xlu0 %v3375, 64
      %v3421 = vpop.permute.xlu0 %3420
      %3422 = vrot.lane.b32.xlu0 %v3376, 64
      %v3423 = vpop.permute.xlu0 %3422
      %3424 = vrot.lane.b32.xlu0 %v3377, 64
      %v3425 = vpop.permute.xlu0 %3424
      %vm3442 = vcmask 589312
      %3443 = vst.msk [vmem:[#allocation5] sm:$0xff] %vm3442, %v3395
      %3444 = vst.msk [vmem:[#allocation5 + $0x8] sm:$0xff] %vm3442, %v3397
      %3445 = vst.msk [vmem:[#allocation5 + $0x10] sm:$0xff] %vm3442, %v3399
      %3446 = vst.msk [vmem:[#allocation5 + $0x18] sm:$0xff] %vm3442, %v3401
      %3447 = vst.msk [vmem:[#allocation5 + $0x20] sm:$0xff] %vm3442, %v3403
      %3448 = vst.msk [vmem:[#allocation5 + $0x28] sm:$0xff] %vm3442, %v3405
      %3449 = vst.msk [vmem:[#allocation5 + $0x30] sm:$0xff] %vm3442, %v3407
      %3450 = vst.msk [vmem:[#allocation5 + $0x38] sm:$0xff] %vm3442, %v3409
      %3451 = vst.msk [vmem:[#allocation5 + $0x40] sm:$0xff] %vm3442, %v3411
      %3452 = vst.msk [vmem:[#allocation5 + $0x48] sm:$0xff] %vm3442, %v3413
      %3453 = vst.msk [vmem:[#allocation5 + $0x50] sm:$0xff] %vm3442, %v3415
      %3454 = vst.msk [vmem:[#allocation5 + $0x58] sm:$0xff] %vm3442, %v3417
      %3455 = vst.msk [vmem:[#allocation5 + $0x60] sm:$0xff] %vm3442, %v3419
      %3456 = vst.msk [vmem:[#allocation5 + $0x68] sm:$0xff] %vm3442, %v3421
      %3457 = vst.msk [vmem:[#allocation5 + $0x70] sm:$0xff] %vm3442, %v3423
      %3458 = vst.msk [vmem:[#allocation5 + $0x78] sm:$0xff] %vm3442, %v3425
      %v3459 = vld [vmem:[#allocation5] sm:$0xff]
      %v3460 = vld [vmem:[#allocation5 + $0x8] sm:$0xff]
      %v3461 = vld [vmem:[#allocation5 + $0x10] sm:$0xff]
      %v3462 = vld [vmem:[#allocation5 + $0x18] sm:$0xff]
      %v3463 = vld [vmem:[#allocation5 + $0x20] sm:$0xff]
      %v3464 = vld [vmem:[#allocation5 + $0x28] sm:$0xff]
      %v3465 = vld [vmem:[#allocation5 + $0x30] sm:$0xff]
      %v3466 = vld [vmem:[#allocation5 + $0x38] sm:$0xff]
      %v3467 = vld [vmem:[#allocation5 + $0x40] sm:$0xff]
      %v3468 = vld [vmem:[#allocation5 + $0x48] sm:$0xff]
      %v3469 = vld [vmem:[#allocation5 + $0x50] sm:$0xff]
      %v3470 = vld [vmem:[#allocation5 + $0x58] sm:$0xff]
      %v3471 = vld [vmem:[#allocation5 + $0x60] sm:$0xff]
      %v3472 = vld [vmem:[#allocation5 + $0x68] sm:$0xff]
      %v3473 = vld [vmem:[#allocation5 + $0x70] sm:$0xff]
      %v3474 = vld [vmem:[#allocation5 + $0x78] sm:$0xff]
      %v3475 = vpack.c.bf16 %v3460, %v3459
      %v3476 = vpack.c.bf16 %v3462, %v3461
      %v3477 = vpack.c.bf16 %v3464, %v3463
      %v3478 = vpack.c.bf16 %v3466, %v3465
      %v3479 = vpack.c.bf16 %v3468, %v3467
      %v3480 = vpack.c.bf16 %v3470, %v3469
      %v3481 = vpack.c.bf16 %v3472, %v3471
      %v3482 = vpack.c.bf16 %v3474, %v3473
      %v3483 = vld [vmem:[%s2] sm:$0xf]
      %v3484 = vld [vmem:[%s2 + $0x4] sm:$0xf]
      %v3485 = vld [vmem:[%s2 + $0x8] sm:$0xf]
      %v3486 = vld [vmem:[%s2 + $0xc] sm:$0xf]
      %v3487 = vld [vmem:[%s2 + $0x10] sm:$0xf]
      %v3488 = vld [vmem:[%s2 + $0x14] sm:$0xf]
      %v3489 = vld [vmem:[%s2 + $0x18] sm:$0xf]
      %v3490 = vld [vmem:[%s2 + $0x1c] sm:$0xf]
      %v3491 = vld [vmem:[%s2 + $0x20] sm:$0xf]
      %v3501 = vunpack.c.l.b16 %v3483
      %v3502 = vunpack.c.l.b16 %v3484
      %v3503 = vunpack.c.l.b16 %v3485
      %v3504 = vunpack.c.l.b16 %v3486
      %v3505 = vunpack.c.l.b16 %v3487
      %v3506 = vunpack.c.l.b16 %v3488
      %v3507 = vunpack.c.l.b16 %v3489
      %v3508 = vunpack.c.l.b16 %v3490
      %v3509 = vunpack.c.l.b16 %v3491
      %v3510 = vpack.c.b16 %v3502, %v3501
      %v3511 = vpack.c.b16 %v3504, %v3503
      %v3512 = vpack.c.b16 %v3506, %v3505
      %v3513 = vpack.c.b16 %v3508, %v3507
      %v3514 = vpack.c.b16 %v3509, %v3509
      %vm3519 = vcmask 588800
      %v3521 = vsel %vm3519, %v3475, 0
      %v3524 = vsel %vm3519, %v3476, 0
      %v3527 = vsel %vm3519, %v3477, 0
      %v3530 = vsel %vm3519, %v3478, 0
      %v3533 = vsel %vm3519, %v3479, 0
      %v3536 = vsel %vm3519, %v3480, 0
      %v3539 = vsel %vm3519, %v3481, 0
      %v3542 = vsel %vm3519, %v3482, 0
      %vm3544 = vcmask 1043456
      %v3546 = vsel %vm3544, %v3514, 0
      %3548 = vmatprep.subr.bf16.mxu0 0
      %3549 = vmatpush1.bf16.msra.mxu0 0
      %3550 = vmatprep.subr.bf16.mxu0 0
      %3551 = vmatpush1.bf16.msra.mxu0 0
      %3552 = vmatprep.subr.bf16.mxu0 0
      %3553 = vmatpush1.bf16.msra.mxu0 0
      %3554 = vmatprep.subr.bf16.mxu0 0
      %3555 = vmatpush1.bf16.msra.mxu0 %v3546
      %3556 = vmatprep.subr.bf16.mxu0 0
      %3557 = vmatpush1.bf16.msra.mxu0 %v3513
      %3558 = vmatprep.subr.bf16.mxu0 0
      %3559 = vmatpush1.bf16.msra.mxu0 %v3512
      %3560 = vmatprep.subr.bf16.mxu0 0
      %3561 = vmatpush1.bf16.msra.mxu0 %v3511
      %3562 = vmatprep.subr.bf16.mxu0 0
      %3563 = vmatpush1.bf16.msra.mxu0 %v3510
      %3564 = vmatprep.subr.bf16.mxu0 0
      %3565 = vmatpush2.bf16.msra.mxu0 0
      %3566 = vmatprep.subr.bf16.mxu0 0
      %3567 = vmatpush2.bf16.msra.mxu0 0
      %3568 = vmatprep.subr.bf16.mxu0 0
      %3569 = vmatpush2.bf16.msra.mxu0 0
      %3570 = vmatprep.subr.bf16.mxu0 0
      %3571 = vmatpush2.bf16.msra.mxu0 0
      %3572 = vmatprep.subr.bf16.mxu0 0
      %3573 = vmatpush2.bf16.msra.mxu0 0
      %3574 = vmatprep.subr.bf16.mxu0 0
      %3575 = vmatpush2.bf16.msra.mxu0 0
      %3576 = vmatprep.subr.bf16.mxu0 0
      %3577 = vmatpush2.bf16.msra.mxu0 0
      %3578 = vmatprep.subr.bf16.mxu0 0
      %3579 = vmatpush2.bf16.msra.mxu0 0
      %3580 = vmatprep.mubr.bf16.mxu0 0
      %3581 = vmatmul.mubr.bf16.gmra.mxu0 %v3521
      %v3582 = vpop.f32.mrf.mxu0
      %v3583 = vadd.f32 0.0, %v3582
      %v3584 = vpop.f32.mrf.mxu0
      %v3585 = vpop.f32.mrf.mxu0
      %v3586 = vadd.f32 0.0, %v3585
      %v3587 = vpop.f32.mrf.mxu0
      %3588 = vmatprep.mubr.bf16.mxu0 0
      %3589 = vmatmul.mubr.bf16.gmra.mxu0 %v3524
      %v3590 = vpop.f32.mrf.mxu0
      %v3591 = vadd.f32 0.0, %v3590
      %v3592 = vpop.f32.mrf.mxu0
      %v3593 = vpop.f32.mrf.mxu0
      %v3594 = vadd.f32 0.0, %v3593
      %v3595 = vpop.f32.mrf.mxu0
      %3596 = vmatprep.mubr.bf16.mxu0 0
      %3597 = vmatmul.mubr.bf16.gmra.mxu0 %v3527
      %v3598 = vpop.f32.mrf.mxu0
      %v3599 = vadd.f32 0.0, %v3598
      %v3600 = vpop.f32.mrf.mxu0
      %v3601 = vpop.f32.mrf.mxu0
      %v3602 = vadd.f32 0.0, %v3601
      %v3603 = vpop.f32.mrf.mxu0
      %3604 = vmatprep.mubr.bf16.mxu0 0
      %3605 = vmatmul.mubr.bf16.gmra.mxu0 %v3530
      %v3606 = vpop.f32.mrf.mxu0
      %v3607 = vadd.f32 0.0, %v3606
      %v3608 = vpop.f32.mrf.mxu0
      %v3609 = vpop.f32.mrf.mxu0
      %v3610 = vadd.f32 0.0, %v3609
      %v3611 = vpop.f32.mrf.mxu0
      %3612 = vmatprep.mubr.bf16.mxu0 0
      %3613 = vmatmul.mubr.bf16.gmra.mxu0 %v3533
      %v3614 = vpop.f32.mrf.mxu0
      %v3615 = vadd.f32 0.0, %v3614
      %v3616 = vpop.f32.mrf.mxu0
      %v3617 = vpop.f32.mrf.mxu0
      %v3618 = vadd.f32 0.0, %v3617
      %v3619 = vpop.f32.mrf.mxu0
      %3620 = vmatprep.mubr.bf16.mxu0 0
      %3621 = vmatmul.mubr.bf16.gmra.mxu0 %v3536
      %v3622 = vpop.f32.mrf.mxu0
      %v3623 = vadd.f32 0.0, %v3622
      %v3624 = vpop.f32.mrf.mxu0
      %v3625 = vpop.f32.mrf.mxu0
      %v3626 = vadd.f32 0.0, %v3625
      %v3627 = vpop.f32.mrf.mxu0
      %3628 = vmatprep.mubr.bf16.mxu0 0
      %3629 = vmatmul.mubr.bf16.gmra.mxu0 %v3539
      %v3630 = vpop.f32.mrf.mxu0
      %v3631 = vadd.f32 0.0, %v3630
      %v3632 = vpop.f32.mrf.mxu0
      %v3633 = vpop.f32.mrf.mxu0
      %v3634 = vadd.f32 0.0, %v3633
      %v3635 = vpop.f32.mrf.mxu0
      %3636 = vmatprep.mubr.bf16.mxu0 0
      %3637 = vmatmul.mubr.bf16.gmra.mxu0 %v3542
      %v3638 = vpop.f32.mrf.mxu0
      %v3639 = vadd.f32 0.0, %v3638
      %v3640 = vpop.f32.mrf.mxu0
      %v3641 = vpop.f32.mrf.mxu0
      %v3642 = vadd.f32 0.0, %v3641
      %v3643 = vpop.f32.mrf.mxu0
      %3644 = vdwg.mxu0
      %v3645 = vld [vmem:[%s6] sm:$0x1]
      %v3647 = vlaneseq
      %v3648 = vshrl.u32 %v3647, 7
      %v3649 = vsub.s32 0, %v3648
      %v3650 = vrot.slane %v3645, %v3649
      %v3652 = vmul.f32 %v3583, %v3650
      %v3653 = vmul.f32 %v3586, %v3650
      %v3654 = vmul.f32 %v3591, %v3650
      %v3655 = vmul.f32 %v3594, %v3650
      %v3656 = vmul.f32 %v3599, %v3650
      %v3657 = vmul.f32 %v3602, %v3650
      %v3658 = vmul.f32 %v3607, %v3650
      %v3659 = vmul.f32 %v3610, %v3650
      %v3660 = vmul.f32 %v3615, %v3650
      %v3661 = vmul.f32 %v3618, %v3650
      %v3662 = vmul.f32 %v3623, %v3650
      %v3663 = vmul.f32 %v3626, %v3650
      %v3664 = vmul.f32 %v3631, %v3650
      %v3665 = vmul.f32 %v3634, %v3650
      %v3666 = vmul.f32 %v3639, %v3650
      %v3667 = vmul.f32 %v3642, %v3650
      %v3668 = vld [vmem:[%s7] sm:$0x1]
      %v3670 = vlaneseq
      %v3671 = vshrl.u32 %v3670, 7
      %v3672 = vsub.s32 0, %v3671
      %v3673 = vrot.slane %v3668, %v3672
      %v3675 = vadd.f32 %v3652, %v3673
      %v3676 = vadd.f32 %v3653, %v3673
      %v3677 = vadd.f32 %v3654, %v3673
      %v3678 = vadd.f32 %v3655, %v3673
      %v3679 = vadd.f32 %v3656, %v3673
      %v3680 = vadd.f32 %v3657, %v3673
      %v3681 = vadd.f32 %v3658, %v3673
      %v3682 = vadd.f32 %v3659, %v3673
      %v3683 = vadd.f32 %v3660, %v3673
      %v3684 = vadd.f32 %v3661, %v3673
      %v3685 = vadd.f32 %v3662, %v3673
      %v3686 = vadd.f32 %v3663, %v3673
      %v3687 = vadd.f32 %v3664, %v3673
      %v3688 = vadd.f32 %v3665, %v3673
      %v3689 = vadd.f32 %v3666, %v3673
      %v3690 = vadd.f32 %v3667, %v3673
      %v3691 = vpack.c.bf16 %v389, %v388
      %v3692 = vpack.c.bf16 %v393, %v392
      %v3693 = vpack.c.bf16 %v397, %v396
      %v3694 = vpack.c.bf16 %v401, %v400
      %v3695 = vpack.c.bf16 %v405, %v404
      %v3696 = vpack.c.bf16 %v409, %v408
      %v3697 = vpack.c.bf16 %v413, %v412
      %v3698 = vpack.c.bf16 %v417, %v416
      %v3699 = vld [vmem:[%s8] sm:$0x3]
      %v3701 = vsel %vm498, %v3691, 0
      %v3704 = vsel %vm498, %v3692, 0
      %v3707 = vsel %vm498, %v3693, 0
      %v3710 = vsel %vm498, %v3694, 0
      %v3713 = vsel %vm498, %v3695, 0
      %v3716 = vsel %vm498, %v3696, 0
      %v3719 = vsel %vm498, %v3697, 0
      %v3722 = vsel %vm498, %v3698, 0
      %v3725 = vsel %vm2303, %v3699, 0
      %3727 = vmatprep.subr.bf16.mxu0 0
      %3728 = vmatpush1.bf16.msra.mxu0 0
      %3729 = vmatprep.subr.bf16.mxu0 0
      %3730 = vmatpush1.bf16.msra.mxu0 0
      %3731 = vmatprep.subr.bf16.mxu0 0
      %3732 = vmatpush1.bf16.msra.mxu0 0
      %3733 = vmatprep.subr.bf16.mxu0 0
      %3734 = vmatpush1.bf16.msra.mxu0 0
      %3735 = vmatprep.subr.bf16.mxu0 0
      %3736 = vmatpush1.bf16.msra.mxu0 0
      %3737 = vmatprep.subr.bf16.mxu0 0
      %3738 = vmatpush1.bf16.msra.mxu0 0
      %3739 = vmatprep.subr.bf16.mxu0 0
      %3740 = vmatpush1.bf16.msra.mxu0 0
      %3741 = vmatprep.subr.bf16.mxu0 0
      %3742 = vmatpush1.bf16.msra.mxu0 %v3725
      %3743 = vmatprep.subr.bf16.mxu0 0
      %3744 = vmatpush2.bf16.msra.mxu0 0
      %3745 = vmatprep.subr.bf16.mxu0 0
      %3746 = vmatpush2.bf16.msra.mxu0 0
      %3747 = vmatprep.subr.bf16.mxu0 0
      %3748 = vmatpush2.bf16.msra.mxu0 0
      %3749 = vmatprep.subr.bf16.mxu0 0
      %3750 = vmatpush2.bf16.msra.mxu0 0
      %3751 = vmatprep.subr.bf16.mxu0 0
      %3752 = vmatpush2.bf16.msra.mxu0 0
      %3753 = vmatprep.subr.bf16.mxu0 0
      %3754 = vmatpush2.bf16.msra.mxu0 0
      %3755 = vmatprep.subr.bf16.mxu0 0
      %3756 = vmatpush2.bf16.msra.mxu0 0
      %3757 = vmatprep.subr.bf16.mxu0 0
      %3758 = vmatpush2.bf16.msra.mxu0 0
      %3759 = vmatprep.mubr.bf16.mxu0 0
      %3760 = vmatmul.mubr.bf16.gmra.mxu0 %v3701
      %v3761 = vpop.f32.mrf.mxu0
      %v3762 = vadd.f32 0.0, %v3761
      %v3763 = vpop.f32.mrf.mxu0
      %v3764 = vpop.f32.mrf.mxu0
      %v3765 = vadd.f32 0.0, %v3764
      %v3766 = vpop.f32.mrf.mxu0
      %3767 = vmatprep.mubr.bf16.mxu0 0
      %3768 = vmatmul.mubr.bf16.gmra.mxu0 %v3704
      %v3769 = vpop.f32.mrf.mxu0
      %v3770 = vadd.f32 0.0, %v3769
      %v3771 = vpop.f32.mrf.mxu0
      %v3772 = vpop.f32.mrf.mxu0
      %v3773 = vadd.f32 0.0, %v3772
      %v3774 = vpop.f32.mrf.mxu0
      %3775 = vmatprep.mubr.bf16.mxu0 0
      %3776 = vmatmul.mubr.bf16.gmra.mxu0 %v3707
      %v3777 = vpop.f32.mrf.mxu0
      %v3778 = vadd.f32 0.0, %v3777
      %v3779 = vpop.f32.mrf.mxu0
      %v3780 = vpop.f32.mrf.mxu0
      %v3781 = vadd.f32 0.0, %v3780
      %v3782 = vpop.f32.mrf.mxu0
      %3783 = vmatprep.mubr.bf16.mxu0 0
      %3784 = vmatmul.mubr.bf16.gmra.mxu0 %v3710
      %v3785 = vpop.f32.mrf.mxu0
      %v3786 = vadd.f32 0.0, %v3785
      %v3787 = vpop.f32.mrf.mxu0
      %v3788 = vpop.f32.mrf.mxu0
      %v3789 = vadd.f32 0.0, %v3788
      %v3790 = vpop.f32.mrf.mxu0
      %3791 = vmatprep.mubr.bf16.mxu0 0
      %3792 = vmatmul.mubr.bf16.gmra.mxu0 %v3713
      %v3793 = vpop.f32.mrf.mxu0
      %v3794 = vadd.f32 0.0, %v3793
      %v3795 = vpop.f32.mrf.mxu0
      %v3796 = vpop.f32.mrf.mxu0
      %v3797 = vadd.f32 0.0, %v3796
      %v3798 = vpop.f32.mrf.mxu0
      %3799 = vmatprep.mubr.bf16.mxu0 0
      %3800 = vmatmul.mubr.bf16.gmra.mxu0 %v3716
      %v3801 = vpop.f32.mrf.mxu0
      %v3802 = vadd.f32 0.0, %v3801
      %v3803 = vpop.f32.mrf.mxu0
      %v3804 = vpop.f32.mrf.mxu0
      %v3805 = vadd.f32 0.0, %v3804
      %v3806 = vpop.f32.mrf.mxu0
      %3807 = vmatprep.mubr.bf16.mxu0 0
      %3808 = vmatmul.mubr.bf16.gmra.mxu0 %v3719
      %v3809 = vpop.f32.mrf.mxu0
      %v3810 = vadd.f32 0.0, %v3809
      %v3811 = vpop.f32.mrf.mxu0
      %v3812 = vpop.f32.mrf.mxu0
      %v3813 = vadd.f32 0.0, %v3812
      %v3814 = vpop.f32.mrf.mxu0
      %3815 = vmatprep.mubr.bf16.mxu0 0
      %3816 = vmatmul.mubr.bf16.gmra.mxu0 %v3722
      %v3817 = vpop.f32.mrf.mxu0
      %v3818 = vadd.f32 0.0, %v3817
      %v3819 = vpop.f32.mrf.mxu0
      %v3820 = vpop.f32.mrf.mxu0
      %v3821 = vadd.f32 0.0, %v3820
      %v3822 = vpop.f32.mrf.mxu0
      %3823 = vdwg.mxu0
      %v3824 = vld [vmem:[%s9] sm:$0x1]
      %v3826 = vlaneseq
      %v3827 = vshrl.u32 %v3826, 7
      %v3828 = vsub.s32 0, %v3827
      %v3829 = vrot.slane %v3824, %v3828
      %v3831 = vmul.f32 %v3762, %v3829
      %v3832 = vmul.f32 %v3765, %v3829
      %v3833 = vmul.f32 %v3770, %v3829
      %v3834 = vmul.f32 %v3773, %v3829
      %v3835 = vmul.f32 %v3778, %v3829
      %v3836 = vmul.f32 %v3781, %v3829
      %v3837 = vmul.f32 %v3786, %v3829
      %v3838 = vmul.f32 %v3789, %v3829
      %v3839 = vmul.f32 %v3794, %v3829
      %v3840 = vmul.f32 %v3797, %v3829
      %v3841 = vmul.f32 %v3802, %v3829
      %v3842 = vmul.f32 %v3805, %v3829
      %v3843 = vmul.f32 %v3810, %v3829
      %v3844 = vmul.f32 %v3813, %v3829
      %v3845 = vmul.f32 %v3818, %v3829
      %v3846 = vmul.f32 %v3821, %v3829
      %v3847 = vld [vmem:[%s10] sm:$0x1]
      %v3849 = vlaneseq
      %v3850 = vshrl.u32 %v3849, 7
      %v3851 = vsub.s32 0, %v3850
      %v3852 = vrot.slane %v3847, %v3851
      %v3854 = vadd.f32 %v3831, %v3852
      %v3855 = vadd.f32 %v3832, %v3852
      %v3856 = vadd.f32 %v3833, %v3852
      %v3857 = vadd.f32 %v3834, %v3852
      %v3858 = vadd.f32 %v3835, %v3852
      %v3859 = vadd.f32 %v3836, %v3852
      %v3860 = vadd.f32 %v3837, %v3852
      %v3861 = vadd.f32 %v3838, %v3852
      %v3862 = vadd.f32 %v3839, %v3852
      %v3863 = vadd.f32 %v3840, %v3852
      %v3864 = vadd.f32 %v3841, %v3852
      %v3865 = vadd.f32 %v3842, %v3852
      %v3866 = vadd.f32 %v3843, %v3852
      %v3867 = vadd.f32 %v3844, %v3852
      %v3868 = vadd.f32 %v3845, %v3852
      %v3869 = vadd.f32 %v3846, %v3852
      %v3870 = vadd.f32 %v3675, %v3854
      %v3871 = vadd.f32 %v3676, %v3855
      %v3872 = vadd.f32 %v3677, %v3856
      %v3873 = vadd.f32 %v3678, %v3857
      %v3874 = vadd.f32 %v3679, %v3858
      %v3875 = vadd.f32 %v3680, %v3859
      %v3876 = vadd.f32 %v3681, %v3860
      %v3877 = vadd.f32 %v3682, %v3861
      %v3878 = vadd.f32 %v3683, %v3862
      %v3879 = vadd.f32 %v3684, %v3863
      %v3880 = vadd.f32 %v3685, %v3864
      %v3881 = vadd.f32 %v3686, %v3865
      %v3882 = vadd.f32 %v3687, %v3866
      %v3883 = vadd.f32 %v3688, %v3867
      %v3884 = vadd.f32 %v3689, %v3868
      %v3885 = vadd.f32 %v3690, %v3869
      %3886 = vst.msk [vmem:[%s386] sm:$0xff] %vm2571, %v3870
      %3887 = vst.msk [vmem:[%s386 + $0x8] sm:$0xff] %vm2571, %v3871
      %3888 = vst.msk [vmem:[%s386 + $0x10] sm:$0xff] %vm2571, %v3872
      %3889 = vst.msk [vmem:[%s386 + $0x18] sm:$0xff] %vm2571, %v3873
      %3890 = vst.msk [vmem:[%s386 + $0x20] sm:$0xff] %vm2571, %v3874
      %3891 = vst.msk [vmem:[%s386 + $0x28] sm:$0xff] %vm2571, %v3875
      %3892 = vst.msk [vmem:[%s386 + $0x30] sm:$0xff] %vm2571, %v3876
      %3893 = vst.msk [vmem:[%s386 + $0x38] sm:$0xff] %vm2571, %v3877
      %3894 = vst.msk [vmem:[%s386 + $0x40] sm:$0xff] %vm2571, %v3878
      %3895 = vst.msk [vmem:[%s386 + $0x48] sm:$0xff] %vm2571, %v3879
      %3896 = vst.msk [vmem:[%s386 + $0x50] sm:$0xff] %vm2571, %v3880
      %3897 = vst.msk [vmem:[%s386 + $0x58] sm:$0xff] %vm2571, %v3881
      %3898 = vst.msk [vmem:[%s386 + $0x60] sm:$0xff] %vm2571, %v3882
      %3899 = vst.msk [vmem:[%s386 + $0x68] sm:$0xff] %vm2571, %v3883
      %3900 = vst.msk [vmem:[%s386 + $0x70] sm:$0xff] %vm2571, %v3884
      %3901 = vst.msk [vmem:[%s386 + $0x78] sm:$0xff] %vm2571, %v3885
      %p3902 = scmp.lt.s32.totalorder %s22, 1
      %s3903 = scalar_select %p3902, %s22, 1
      %s3904 = smul.addr %s3903, 16
      %s3905 = smul.addr %s3904, 8
      %s3906 = scalar_lea.vmem %s11, %s3905
      // Predicated region
      $region65: #{tpu_custom_call.1} parent=63 // pred_check
        %p3907 = pneg %p276
      $region66: #{tpu_custom_call.1} parent=63 // pred_check_branch
        %3909 = sbr.rel (%p3907) target = $region68
      $region67: #{tpu_custom_call.1} parent=63 // pred_region
        _
      $region68: #{tpu_custom_call.1} parent=63 // pred_fallthru
        _
    $region64: #{tpu_custom_call.1} parent=5 // pred_fallthru
      _
    %p3910 = scmp.le.s32.totalorder 2, %s17
    // Predicated region
    $region69: #{tpu_custom_call.1} parent=5 // pred_check
      %p3911 = pneg %p3910
    $region70: #{tpu_custom_call.1} parent=5 // pred_check_branch
      %3913 = sbr.rel (%p3911) target = $region72
    $region71: #{tpu_custom_call.1} parent=5 // pred_region
      %s3914 = ssub.s32 %s17, 2
      // Predicated region
      $region73: #{tpu_custom_call.1} parent=71 // pred_check
        %p3915 = pneg %p282
      $region74: #{tpu_custom_call.1} parent=71 // pred_check_branch
        %3917 = sbr.rel (%p3915) target = $region76
      $region75: #{tpu_custom_call.1} parent=71 // pred_region
        %p3918 = scmp.lt.s32.totalorder %s23, 1
        %s3919 = scalar_select %p3918, %s23, 1
        %s3920 = smul.addr %s3919, 16
        %s3921 = smul.addr %s3920, 8
        %s3922 = scalar_lea.vmem %s11, %s3921
      $region76: #{tpu_custom_call.1} parent=71 // pred_fallthru
        _
    $region72: #{tpu_custom_call.1} parent=5 // pred_fallthru
      _
  $region6: #{tpu_custom_call.1} parent=0 // loop_footer
    %s21 = sadd.s32 1, %s17
  $region7: #{tpu_custom_call.1} parent=0 // loop_footer_branch
    %16 = sbr.rel target = $region3
  $region8: #{tpu_custom_call.1} parent=0 // loop_exit
    _

</llo_original>
